<compile_context>
chip_gen: v6e
topology: v6e:2x2x1
jax: 0.10.0
libtpu: 0.0.40
codegen_flags: <defaults>
</compile_context>

<pallas_src>
import functools

import jax
import jax.numpy as jnp
from jax import lax
from jax.experimental import pallas as pl
from jax.experimental.pallas import tpu as pltpu


def _round_up(n, m):
    return ((n + m - 1) // m) * m


def _dropout_rnn_kernel(x_ref, wi_ref, bi_ref, wh_ref, h0_ref, o_ref,
                        h_ref, inp_ref, *, chunk, batch_pad, keep):
    # x_ref  : (chunk*batch_pad, F)   this chunk's inputs, timesteps stacked on rows
    # wi_ref : (F, H_pad)             i2h weight, pre-transposed, column-padded
    # bi_ref : (1, H_pad)             i2h bias, column-padded
    # wh_ref : (H_pad, H_pad)         h2h weight, pre-transposed, zero-padded
    # h0_ref : (batch_pad, H_pad)     initial hidden state, zero-padded
    # o_ref  : (batch_pad, H_pad)     final hidden state (written on last grid step)
    # h_ref  : VMEM scratch           hidden state carried across grid steps
    # inp_ref: VMEM scratch           per-chunk input-projection slab
    pid = pl.program_id(0)

    @pl.when(pid == 0)
    def _init():
        h_ref[...] = h0_ref[...]

    # Input projection for the whole chunk: one big MXU matmul + one bias add,
    # materialized into VMEM scratch so the recurrence reads aligned tiles.
    inp_ref[...] = (
        jnp.dot(x_ref[...], wi_ref[...], preferred_element_type=jnp.float32)
        + bi_ref[...])

    # Eval-mode dropout feeds only the h2h matmul -> fold the scale into the
    # recurrent weight once (removes a dependent VPU mul per step).
    wh_scaled = keep * wh_ref[...]

    h = h_ref[...]

    def step_math(input_res, h):
        # TODO(synk): wh_scaled is loop-invariant; could be pinned in the MXU
        # via pltpu.matmul_push_rhs/acc_lhs/pop.  We rely on Mosaic hoisting
        # the constant RHS push out of the (unrolled) loop instead.
        hidden_res = jnp.dot(h, wh_scaled, preferred_element_type=jnp.float32)
        return jnp.tanh(input_res + hidden_res)

    if chunk <= 16:
        # Tiny chunk: full unroll with static, sublane-aligned slices.
        for t in range(chunk):
            h = step_math(inp_ref[t * batch_pad:(t + 1) * batch_pad, :], h)
    else:
        # Larger chunk: moderately unrolled fori_loop caps code size / vreg
        # pressure while keeping LLO scheduling visibility.
        def body(t, h):
            off = pl.multiple_of(t * batch_pad, 8)
            return step_math(inp_ref[pl.ds(off, batch_pad), :], h)
        h = lax.fori_loop(0, chunk, body, h, unroll=min(8, chunk))

    h_ref[...] = h

    @pl.when(pid == pl.num_programs(0) - 1)
    def _store():
        o_ref[...] = h.astype(o_ref.dtype)


def _pick_chunk(seq_len, batch_pad, feat, hidden_pad, budget_bytes):
    """Largest divisor of seq_len whose chunk-dependent VMEM fits the budget."""
    best = 1
    for tt in range(1, seq_len + 1):
        if seq_len % tt:
            continue
        # 2x double-buffered x block + the f32 projection slab scratch.
        need = 4 * tt * batch_pad * (2 * feat + hidden_pad)
        if need <= budget_bytes:
            best = tt
    return best


def dropout_rnn_forward(x, w_i2h, b_i2h, w_h2h, dropout_p=0.5, h0=None):
    """Eval-mode DropoutRNN forward.

    x: (T, B, F); w_i2h: (H, F); b_i2h: (H,); w_h2h: (H, H); h0: (1, B, H) or None.
    Returns (None, hidden) with hidden of shape (1, B, H).
    """
    T, B, F = x.shape
    H = w_i2h.shape[0]
    if h0 is None:
        h0 = jnp.ones((1, B, H), jnp.float32)

    B_pad = _round_up(B, 8)      # sublane-aligned batch
    H_pad = _round_up(H, 128)    # lane-dense hidden

    # Layout plumbing in the wrapper (cheap XLA ops, not compute).
    # Zero padding is exact: padded wi/bi/wh columns & rows keep the padded
    # hidden columns identically 0 through tanh; padded batch rows are sliced
    # off and never influence real rows.
    # TODO(synk): on v6e/v7x cast x/wi (MXU operands only) to bfloat16 for
    # native-rate MXU + halved HBM bytes; kept f32 here for exact test parity.
    x_f = x.astype(jnp.float32)
    x2 = jnp.pad(x_f, ((0, 0), (0, B_pad - B), (0, 0))).reshape(T * B_pad, F)
    wi_t = jnp.pad(w_i2h.T.astype(jnp.float32), ((0, 0), (0, H_pad - H)))
    bi2 = jnp.pad(b_i2h.astype(jnp.float32).reshape(1, H), ((0, 0), (0, H_pad - H)))
    wh_t = jnp.pad(w_h2h.T.astype(jnp.float32), ((0, H_pad - H), (0, H_pad - H)))
    h0_2d = jnp.pad(h0.astype(jnp.float32).reshape(B, H),
                    ((0, B_pad - B), (0, H_pad - H)))

    # Chunk of timesteps per grid step, sized against an explicit VMEM budget
    # (conservative enough for v7x's smaller VMEM as well as v5e/v6e).
    chunk = _pick_chunk(T, B_pad, F, H_pad, budget_bytes=16 * 1024 * 1024)
    num_chunks = T // chunk

    grid_spec = pltpu.PrefetchScalarGridSpec(
        num_scalar_prefetch=0,
        grid=(num_chunks,),
        in_specs=[
            pl.BlockSpec((chunk * B_pad, F), lambda i: (i, 0)),   # x chunk (pipelined)
            pl.BlockSpec((F, H_pad), lambda i: (0, 0)),           # wi (resident)
            pl.BlockSpec((1, H_pad), lambda i: (0, 0)),           # bias (resident)
            pl.BlockSpec((H_pad, H_pad), lambda i: (0, 0)),       # wh (resident)
            pl.BlockSpec((B_pad, H_pad), lambda i: (0, 0)),       # h0 (resident)
        ],
        out_specs=pl.BlockSpec((B_pad, H_pad), lambda i: (0, 0)),
        scratch_shapes=[
            pltpu.VMEM((B_pad, H_pad), jnp.float32),               # carried hidden
            pltpu.VMEM((chunk * B_pad, H_pad), jnp.float32),       # projection slab
        ],
    )

    hidden_pad = pl.pallas_call(
        functools.partial(_dropout_rnn_kernel,
                          chunk=chunk, batch_pad=B_pad,
                          keep=1.0 - float(dropout_p)),
        out_shape=jax.ShapeDtypeStruct((B_pad, H_pad), jnp.float32),
        grid_spec=grid_spec,
        compiler_params=pltpu.CompilerParams(
            dimension_semantics=("arbitrary",),   # serial recurrence across chunks
            vmem_limit_bytes=32 * 1024 * 1024),
    )(x2, wi_t, bi2, wh_t, h0_2d)

    # TODO(synk): training-mode forward samples a Bernoulli(p) mask once and
    # reuses it every step; implement via pltpu.prng_seed/stateful_bernoulli if
    # training parity is ever needed.
    # TODO(synk): on v7x, the i2h projection could additionally be sharded over
    # the second TensorCore (parallel row chunks); no benefit on v5e/v6e.
    hidden = hidden_pad[:B, :H].reshape(1, B, H)
    return None, hidden


if __name__ == "__main__":
    # Keep the XLA reference matmuls in true f32 so they match the kernel's
    # f32 MXU accumulation.
    jax.config.update("jax_default_matmul_precision", "highest")

    seq_len, batch, input_size, hidden_size = 8, 4, 16, 32
    dropout_p = 0.5

    key = jax.random.PRNGKey(0)
    k_x, k_wi, k_bi, k_wh = jax.random.split(key, 4)

    x = jax.random.normal(k_x, (seq_len, batch, input_size), dtype=jnp.float32)
    # nn.Linear-style init: U(-1/sqrt(fan_in), 1/sqrt(fan_in))
    w_i2h = jax.random.uniform(k_wi, (hidden_size, input_size),
                               minval=-1.0, maxval=1.0) / jnp.sqrt(float(input_size))
    b_i2h = jax.random.uniform(k_bi, (hidden_size,),
                               minval=-1.0, maxval=1.0) / jnp.sqrt(float(input_size))
    w_h2h = jax.random.uniform(k_wh, (hidden_size, hidden_size),
                               minval=-1.0, maxval=1.0) / jnp.sqrt(float(hidden_size))

    _, hidden = dropout_rnn_forward(x, w_i2h, b_i2h, w_h2h, dropout_p)
    hidden = jax.block_until_ready(hidden)

    # Pure-JAX reference: direct transcription of the PyTorch eval-mode loop.
    h = jnp.ones((1, batch, hidden_size), jnp.float32)
    for i in range(seq_len):
        input_res = x[i] @ w_i2h.T + b_i2h            # (B, H)
        h = (1.0 - dropout_p) * h
        hidden_res = h @ w_h2h.T                      # (1, B, H)
        h = jnp.tanh(input_res + hidden_res)          # broadcast -> (1, B, H)

    assert hidden.shape == (1, batch, hidden_size)
    assert jnp.allclose(hidden, h, rtol=1e-4, atol=1e-4), (hidden, h)

    print("KERNEL_OK")
</pallas_src>

<mosaic_0001>
module attributes {stable_mosaic.version = 11 : i64} {
  func.func @_dropout_rnn_kernel(%arg0: i32, %arg1: memref<64x16xf32, #tpu.memory_space<vmem>>, %arg2: memref<16x128xf32, #tpu.memory_space<vmem>>, %arg3: memref<1x128xf32, #tpu.memory_space<vmem>>, %arg4: memref<128x128xf32, #tpu.memory_space<vmem>>, %arg5: memref<8x128xf32, #tpu.memory_space<vmem>>, %arg6: memref<8x128xf32, #tpu.memory_space<vmem>>, %arg7: memref<8x128xf32, #tpu.memory_space<vmem>>, %arg8: memref<64x128xf32, #tpu.memory_space<vmem>>) attributes {dimension_semantics = [#tpu.dimension_semantics<arbitrary>], iteration_bounds = array<i64: 1>, scalar_prefetch = 0 : i64, scratch_operands = 2 : i64, tpu.core_type = #tpu.core_type<tc>, window_params = [{transform_indices = @transform_0, window_bounds = array<i64: 64, 16>}, {pipeline_mode = #tpu.pipeline_mode<synchronous>, transform_indices = @transform_1, window_bounds = array<i64: 16, 128>}, {pipeline_mode = #tpu.pipeline_mode<synchronous>, transform_indices = @transform_2, window_bounds = array<i64: 1, 128>}, {pipeline_mode = #tpu.pipeline_mode<synchronous>, transform_indices = @transform_3, window_bounds = array<i64: 128, 128>}, {pipeline_mode = #tpu.pipeline_mode<synchronous>, transform_indices = @transform_4, window_bounds = array<i64: 8, 128>}, {pipeline_mode = #tpu.pipeline_mode<synchronous>, transform_indices = @transform_5, window_bounds = array<i64: 8, 128>}]} {
    %c0_i32 = arith.constant 0 : i32
    %0 = arith.cmpi eq, %arg0, %c0_i32 : i32
    %1 = arith.extui %0 : i1 to i32
    %c0_i32_0 = arith.constant 0 : i32
    %2 = arith.cmpi ne, %1, %c0_i32_0 : i32
    scf.if %2 {
      %c0_34 = arith.constant 0 : index
      %c0_35 = arith.constant 0 : index
      %50 = vector.load %arg5[%c0_34, %c0_35] : memref<8x128xf32, #tpu.memory_space<vmem>>, vector<8x128xf32>
      %c0_36 = arith.constant 0 : index
      %c0_37 = arith.constant 0 : index
      %51 = vector.load %arg7[%c0_36, %c0_37] : memref<8x128xf32, #tpu.memory_space<vmem>>, vector<8x128xf32>
      tpu.vector_store %arg7[%c0_36, %c0_37], %50 {strides = array<i32>} : memref<8x128xf32, #tpu.memory_space<vmem>>, vector<8x128xf32>,
    } else {
    }
    %c0 = arith.constant 0 : index
    %c0_1 = arith.constant 0 : index
    %3 = vector.load %arg1[%c0, %c0_1] : memref<64x16xf32, #tpu.memory_space<vmem>>, vector<64x16xf32>
    %c0_2 = arith.constant 0 : index
    %c0_3 = arith.constant 0 : index
    %4 = vector.load %arg2[%c0_2, %c0_3] : memref<16x128xf32, #tpu.memory_space<vmem>>, vector<16x128xf32>
    %cst = arith.constant dense<0.000000e+00> : vector<64x128xf32>
    %5 = tpu.matmul %3, %4, %cst {dimension_numbers = #tpu.dot_dimension_numbers<[1], [0], [0], [1], [0, 0, 1, 1], [], []>, precision = #tpu.contract_precision<fp32>} : vector<64x16xf32>, vector<16x128xf32>, vector<64x128xf32> -> vector<64x128xf32>
    %c0_4 = arith.constant 0 : index
    %c0_5 = arith.constant 0 : index
    %6 = vector.load %arg3[%c0_4, %c0_5] : memref<1x128xf32, #tpu.memory_space<vmem>>, vector<1x128xf32>
    %7 = vector.broadcast %6 : vector<1x128xf32> to vector<64x128xf32>
    %8 = arith.addf %5, %7 : vector<64x128xf32>
    %c0_6 = arith.constant 0 : index
    %c0_7 = arith.constant 0 : index
    %9 = vector.load %arg8[%c0_6, %c0_7] : memref<64x128xf32, #tpu.memory_space<vmem>>, vector<64x128xf32>
    tpu.vector_store %arg8[%c0_6, %c0_7], %8 {strides = array<i32>} : memref<64x128xf32, #tpu.memory_space<vmem>>, vector<64x128xf32>,
    %c0_8 = arith.constant 0 : index
    %c0_9 = arith.constant 0 : index
    %10 = vector.load %arg4[%c0_8, %c0_9] : memref<128x128xf32, #tpu.memory_space<vmem>>, vector<128x128xf32>
    %cst_10 = arith.constant 5.000000e-01 : f32
    %11 = vector.broadcast %cst_10 : f32 to vector<128x128xf32>
    %12 = arith.mulf %11, %10 : vector<128x128xf32>
    %c0_11 = arith.constant 0 : index
    %c0_12 = arith.constant 0 : index
    %13 = vector.load %arg7[%c0_11, %c0_12] : memref<8x128xf32, #tpu.memory_space<vmem>>, vector<8x128xf32>
    %c0_13 = arith.constant 0 : index
    %c0_14 = arith.constant 0 : index
    %14 = vector.load %arg8[%c0_13, %c0_14] : memref<64x128xf32, #tpu.memory_space<vmem>>, vector<8x128xf32>
    %cst_15 = arith.constant dense<0.000000e+00> : vector<8x128xf32>
    %15 = tpu.matmul %13, %12, %cst_15 {dimension_numbers = #tpu.dot_dimension_numbers<[1], [0], [0], [1], [0, 0, 1, 1], [], []>, precision = #tpu.contract_precision<fp32>} : vector<8x128xf32>, vector<128x128xf32>, vector<8x128xf32> -> vector<8x128xf32>
    %16 = arith.addf %14, %15 : vector<8x128xf32>
    %17 = math.tanh %16 : vector<8x128xf32>
    %c8 = arith.constant 8 : index
    %c0_16 = arith.constant 0 : index
    %18 = vector.load %arg8[%c8, %c0_16] : memref<64x128xf32, #tpu.memory_space<vmem>>, vector<8x128xf32>
    %cst_17 = arith.constant dense<0.000000e+00> : vector<8x128xf32>
    %19 = tpu.matmul %17, %12, %cst_17 {dimension_numbers = #tpu.dot_dimension_numbers<[1], [0], [0], [1], [0, 0, 1, 1], [], []>, precision = #tpu.contract_precision<fp32>} : vector<8x128xf32>, vector<128x128xf32>, vector<8x128xf32> -> vector<8x128xf32>
    %20 = arith.addf %18, %19 : vector<8x128xf32>
    %21 = math.tanh %20 : vector<8x128xf32>
    %c16 = arith.constant 16 : index
    %c0_18 = arith.constant 0 : index
    %22 = vector.load %arg8[%c16, %c0_18] : memref<64x128xf32, #tpu.memory_space<vmem>>, vector<8x128xf32>
    %cst_19 = arith.constant dense<0.000000e+00> : vector<8x128xf32>
    %23 = tpu.matmul %21, %12, %cst_19 {dimension_numbers = #tpu.dot_dimension_numbers<[1], [0], [0], [1], [0, 0, 1, 1], [], []>, precision = #tpu.contract_precision<fp32>} : vector<8x128xf32>, vector<128x128xf32>, vector<8x128xf32> -> vector<8x128xf32>
    %24 = arith.addf %22, %23 : vector<8x128xf32>
    %25 = math.tanh %24 : vector<8x128xf32>
    %c24 = arith.constant 24 : index
    %c0_20 = arith.constant 0 : index
    %26 = vector.load %arg8[%c24, %c0_20] : memref<64x128xf32, #tpu.memory_space<vmem>>, vector<8x128xf32>
    %cst_21 = arith.constant dense<0.000000e+00> : vector<8x128xf32>
    %27 = tpu.matmul %25, %12, %cst_21 {dimension_numbers = #tpu.dot_dimension_numbers<[1], [0], [0], [1], [0, 0, 1, 1], [], []>, precision = #tpu.contract_precision<fp32>} : vector<8x128xf32>, vector<128x128xf32>, vector<8x128xf32> -> vector<8x128xf32>
    %28 = arith.addf %26, %27 : vector<8x128xf32>
    %29 = math.tanh %28 : vector<8x128xf32>
    %c32 = arith.constant 32 : index
    %c0_22 = arith.constant 0 : index
    %30 = vector.load %arg8[%c32, %c0_22] : memref<64x128xf32, #tpu.memory_space<vmem>>, vector<8x128xf32>
    %cst_23 = arith.constant dense<0.000000e+00> : vector<8x128xf32>
    %31 = tpu.matmul %29, %12, %cst_23 {dimension_numbers = #tpu.dot_dimension_numbers<[1], [0], [0], [1], [0, 0, 1, 1], [], []>, precision = #tpu.contract_precision<fp32>} : vector<8x128xf32>, vector<128x128xf32>, vector<8x128xf32> -> vector<8x128xf32>
    %32 = arith.addf %30, %31 : vector<8x128xf32>
    %33 = math.tanh %32 : vector<8x128xf32>
    %c40 = arith.constant 40 : index
    %c0_24 = arith.constant 0 : index
    %34 = vector.load %arg8[%c40, %c0_24] : memref<64x128xf32, #tpu.memory_space<vmem>>, vector<8x128xf32>
    %cst_25 = arith.constant dense<0.000000e+00> : vector<8x128xf32>
    %35 = tpu.matmul %33, %12, %cst_25 {dimension_numbers = #tpu.dot_dimension_numbers<[1], [0], [0], [1], [0, 0, 1, 1], [], []>, precision = #tpu.contract_precision<fp32>} : vector<8x128xf32>, vector<128x128xf32>, vector<8x128xf32> -> vector<8x128xf32>
    %36 = arith.addf %34, %35 : vector<8x128xf32>
    %37 = math.tanh %36 : vector<8x128xf32>
    %c48 = arith.constant 48 : index
    %c0_26 = arith.constant 0 : index
    %38 = vector.load %arg8[%c48, %c0_26] : memref<64x128xf32, #tpu.memory_space<vmem>>, vector<8x128xf32>
    %cst_27 = arith.constant dense<0.000000e+00> : vector<8x128xf32>
    %39 = tpu.matmul %37, %12, %cst_27 {dimension_numbers = #tpu.dot_dimension_numbers<[1], [0], [0], [1], [0, 0, 1, 1], [], []>, precision = #tpu.contract_precision<fp32>} : vector<8x128xf32>, vector<128x128xf32>, vector<8x128xf32> -> vector<8x128xf32>
    %40 = arith.addf %38, %39 : vector<8x128xf32>
    %41 = math.tanh %40 : vector<8x128xf32>
    %c56 = arith.constant 56 : index
    %c0_28 = arith.constant 0 : index
    %42 = vector.load %arg8[%c56, %c0_28] : memref<64x128xf32, #tpu.memory_space<vmem>>, vector<8x128xf32>
    %cst_29 = arith.constant dense<0.000000e+00> : vector<8x128xf32>
    %43 = tpu.matmul %41, %12, %cst_29 {dimension_numbers = #tpu.dot_dimension_numbers<[1], [0], [0], [1], [0, 0, 1, 1], [], []>, precision = #tpu.contract_precision<fp32>} : vector<8x128xf32>, vector<128x128xf32>, vector<8x128xf32> -> vector<8x128xf32>
    %44 = arith.addf %42, %43 : vector<8x128xf32>
    %45 = math.tanh %44 : vector<8x128xf32>
    %c0_30 = arith.constant 0 : index
    %c0_31 = arith.constant 0 : index
    %46 = vector.load %arg7[%c0_30, %c0_31] : memref<8x128xf32, #tpu.memory_space<vmem>>, vector<8x128xf32>
    tpu.vector_store %arg7[%c0_30, %c0_31], %45 {strides = array<i32>} : memref<8x128xf32, #tpu.memory_space<vmem>>, vector<8x128xf32>,
    %c0_i32_32 = arith.constant 0 : i32
    %47 = arith.cmpi eq, %arg0, %c0_i32_32 : i32
    %48 = arith.extui %47 : i1 to i32
    %c0_i32_33 = arith.constant 0 : i32
    %49 = arith.cmpi ne, %48, %c0_i32_33 : i32
    scf.if %49 {
      %c0_34 = arith.constant 0 : index
      %c0_35 = arith.constant 0 : index
      %50 = vector.load %arg6[%c0_34, %c0_35] : memref<8x128xf32, #tpu.memory_space<vmem>>, vector<8x128xf32>
      tpu.vector_store %arg6[%c0_34, %c0_35], %45 {strides = array<i32>} : memref<8x128xf32, #tpu.memory_space<vmem>>, vector<8x128xf32>,
    } else {
    }
    return
  }
  func.func @transform_0(%arg0: i32) -> (i32, i32) {
    %c0_i32 = arith.constant 0 : i32
    %c0_i32_0 = arith.constant 0 : i32
    return %arg0, %c0_i32 : i32, i32
  }
  func.func @transform_1(%arg0: i32) -> (i32, i32) {
    %c0_i32 = arith.constant 0 : i32
    %c0_i32_0 = arith.constant 0 : i32
    %c0_i32_1 = arith.constant 0 : i32
    return %c0_i32, %c0_i32_0 : i32, i32
  }
  func.func @transform_2(%arg0: i32) -> (i32, i32) {
    %c0_i32 = arith.constant 0 : i32
    %c0_i32_0 = arith.constant 0 : i32
    %c0_i32_1 = arith.constant 0 : i32
    return %c0_i32, %c0_i32_0 : i32, i32
  }
  func.func @transform_3(%arg0: i32) -> (i32, i32) {
    %c0_i32 = arith.constant 0 : i32
    %c0_i32_0 = arith.constant 0 : i32
    %c0_i32_1 = arith.constant 0 : i32
    return %c0_i32, %c0_i32_0 : i32, i32
  }
  func.func @transform_4(%arg0: i32) -> (i32, i32) {
    %c0_i32 = arith.constant 0 : i32
    %c0_i32_0 = arith.constant 0 : i32
    %c0_i32_1 = arith.constant 0 : i32
    return %c0_i32, %c0_i32_0 : i32, i32
  }
  func.func @transform_5(%arg0: i32) -> (i32, i32) {
    %c0_i32 = arith.constant 0 : i32
    %c0_i32_0 = arith.constant 0 : i32
    %c0_i32_1 = arith.constant 0 : i32
    return %c0_i32, %c0_i32_0 : i32, i32
  }
}

</mosaic_0001>

<llo_original>
// kernel: tpu_custom_call.1
$region0: #{tpu_custom_call.1}
  #allocation0 [shape = 'u32[]', space=smem, size = 0x4, offset = 0x4, fixed_abs, tag = 'smem constant byte address 0x4 - core index']
  #allocation1 [shape = 'u32[144,128]{1,0:T(1,128)}', space=vmem, size = 0x12000, scoped, tag = 'internal scratch']
  #allocation2 [shape = 'f32[8,128]{1,0:T(8,128)}', space=vmem, size = 0x1000, scoped, tag = 'scratch operand']
  #allocation3 [shape = 'f32[64,128]{1,0:T(8,128)}', space=vmem, size = 0x8000, scoped, tag = 'scratch operand']
  %s0 = inlined_call_operand.vmem [shape: f32[64,16], index: 0, kind: input, shape index: {}]
  %s1 = inlined_call_operand.vmem [shape: f32[16,128], index: 1, kind: input, shape index: {}]
  %s2 = inlined_call_operand.vmem [shape: f32[1,128], index: 2, kind: input, shape index: {}]
  %s3 = inlined_call_operand.hbm [shape: f32[128,128], index: 3, kind: input, shape index: {}]
  %s4 = inlined_call_operand.vmem [shape: f32[8,128], index: 4, kind: input, shape index: {}]
  %s5 = inlined_call_operand.hbm [shape: f32[8,128], index: 5, kind: output, shape index: {}]
  %s6 = sld [smem:[#allocation0]]
  $region42: #{tpu_custom_call.1} parent=0
    _
  %s8 = ssub.s32 1, %s6
  %s9 = scalar_select 0, %s8, %s6
  $region1: #{tpu_custom_call.1} parent=0
    #allocation4 [shape = 'u8[65536]{0}', space=vmem, size = 0x10000, scoped, tag = 'input window, operand 3, single buffered']
    #allocation5 [shape = 's32[1]{0}', space=sflag, size = 0x4, scoped, tag = 'scoped memory for tpu_custom_call.1']
    #allocation6 [shape = 's32[1]{0}', space=sflag, size = 0x4, scoped, tag = 'scoped memory for tpu_custom_call.1']
    #allocation7 [shape = 'u8[4096]{0}', space=vmem, size = 0x1000, scoped, tag = 'output window, operand 0, single buffered']
    %10 = vsyncpa [#allocation5], 0
    %11 = vsyncpa [#allocation6], 0
    // Predicated region
    $region2: #{tpu_custom_call.1} parent=1 // pred_check
      _
    $region3: #{tpu_custom_call.1} parent=1 // pred_check_branch
      %13 = sbr.rel (0) target = $region5
    $region4: #{tpu_custom_call.1} parent=1 // pred_region
      _
    $region5: #{tpu_custom_call.1} parent=1 // pred_fallthru
      _
    // Predicated region
    $region6: #{tpu_custom_call.1} parent=1 // pred_check
      _
    $region7: #{tpu_custom_call.1} parent=1 // pred_check_branch
      %15 = sbr.rel (0) target = $region9
    $region8: #{tpu_custom_call.1} parent=1 // pred_region
      _
    $region9: #{tpu_custom_call.1} parent=1 // pred_fallthru
      _
    // Predicated region
    $region10: #{tpu_custom_call.1} parent=1 // pred_check
      _
    $region11: #{tpu_custom_call.1} parent=1 // pred_check_branch
      %17 = sbr.rel (0) target = $region13
    $region12: #{tpu_custom_call.1} parent=1 // pred_region
      _
    $region13: #{tpu_custom_call.1} parent=1 // pred_fallthru
      _
    // Predicated region
    $region14: #{tpu_custom_call.1} parent=1 // pred_check
      _
    $region15: #{tpu_custom_call.1} parent=1 // pred_check_branch
      %19 = sbr.rel (0) target = $region17
    $region16: #{tpu_custom_call.1} parent=1 // pred_region
      %s21 = ssub.s32 2048, 2048
      %22 = vsyncadd [#allocation5], %s21
      %s23 = sshll.u32 [#allocation4], 4
      %s24 = int_to_ptr.vmem [resolvable:$true] %s23
      %29 = dma.hbm_to_vmem [thread:$0]  %s3, 2048, %s24, [#allocation5], 128, 128, 8
    $region17: #{tpu_custom_call.1} parent=1 // pred_fallthru
      _
    // Predicated region
    $region18: #{tpu_custom_call.1} parent=1 // pred_check
      _
    $region19: #{tpu_custom_call.1} parent=1 // pred_check_branch
      %31 = sbr.rel (0) target = $region21
    $region20: #{tpu_custom_call.1} parent=1 // pred_region
      _
    $region21: #{tpu_custom_call.1} parent=1 // pred_fallthru
      _
    // Predicated region
    $region22: #{tpu_custom_call.1} parent=1 // pred_check
      _
    $region23: #{tpu_custom_call.1} parent=1 // pred_check_branch
      %33 = sbr.rel (0) target = $region25
    $region24: #{tpu_custom_call.1} parent=1 // pred_region
      %34 = dma.done [#allocation5], 2048
    $region25: #{tpu_custom_call.1} parent=1 // pred_fallthru
      _
    %p35 = scmp.eq.s32.totalorder 0, 0
    // Predicated region
    $region26: #{tpu_custom_call.1} parent=1 // pred_check
      %p36 = pneg %p35
    $region27: #{tpu_custom_call.1} parent=1 // pred_check_branch
      %38 = sbr.rel (%p36) target = $region29
    $region28: #{tpu_custom_call.1} parent=1 // pred_region
      %v39 = vld [vmem:[%s4] sm:$0xff]
      %40 = vst [vmem:[#allocation2] sm:$0xff] %v39
    $region29: #{tpu_custom_call.1} parent=1 // pred_fallthru
      _
    %v41 = vld [vmem:[%s0] sm:$0xff]
    %v42 = vld [vmem:[%s0 + $0x8] sm:$0xff]
    %v43 = vld [vmem:[%s0 + $0x10] sm:$0xff]
    %v44 = vld [vmem:[%s0 + $0x18] sm:$0xff]
    %v45 = vld [vmem:[%s0 + $0x20] sm:$0xff]
    %v46 = vld [vmem:[%s0 + $0x28] sm:$0xff]
    %v47 = vld [vmem:[%s0 + $0x30] sm:$0xff]
    %v48 = vld [vmem:[%s0 + $0x38] sm:$0xff]
    %v49 = vld [vmem:[%s1] sm:$0xff]
    %v50 = vld [vmem:[%s1 + $0x8] sm:$0xff]
    %v51 = vld [vmem:[%s2] sm:$0x1]
    %v53 = vlaneseq
    %v54 = vshrl.u32 %v53, 7
    %v55 = vsub.s32 0, %v54
    %v56 = vrot.slane %v51, %v55
    %vm58 = vcmask 130048
    %v60 = vsel %vm58, %v41, 0
    %v63 = vsel %vm58, %v42, 0
    %v66 = vsel %vm58, %v43, 0
    %v69 = vsel %vm58, %v44, 0
    %v72 = vsel %vm58, %v45, 0
    %v75 = vsel %vm58, %v46, 0
    %v78 = vsel %vm58, %v47, 0
    %v81 = vsel %vm58, %v48, 0
    %83 = vmatprep.subr.mxu0 0.0
    %84 = vmatpush1.msra.mxu0 0.0
    %85 = vmatprep.subr.mxu0 0.0
    %86 = vmatpush1.msra.mxu0 0.0
    %87 = vmatprep.subr.mxu0 0.0
    %88 = vmatpush1.msra.mxu0 0.0
    %89 = vmatprep.subr.mxu0 0.0
    %90 = vmatpush1.msra.mxu0 0.0
    %91 = vmatprep.subr.mxu0 0.0
    %92 = vmatpush1.msra.mxu0 0.0
    %93 = vmatprep.subr.mxu0 0.0
    %94 = vmatpush1.msra.mxu0 0.0
    %95 = vmatprep.subr.mxu0 0.0
    %96 = vmatpush1.msra.mxu0 0.0
    %97 = vmatprep.subr.mxu0 0.0
    %98 = vmatpush1.msra.mxu0 0.0
    %99 = vmatprep.subr.mxu0 0.0
    %100 = vmatpush1.msra.mxu0 0.0
    %101 = vmatprep.subr.mxu0 0.0
    %102 = vmatpush1.msra.mxu0 0.0
    %103 = vmatprep.subr.mxu0 0.0
    %104 = vmatpush1.msra.mxu0 0.0
    %105 = vmatprep.subr.mxu0 0.0
    %106 = vmatpush1.msra.mxu0 0.0
    %107 = vmatprep.subr.mxu0 0.0
    %108 = vmatpush1.msra.mxu0 0.0
    %109 = vmatprep.subr.mxu0 0.0
    %110 = vmatpush1.msra.mxu0 0.0
    %111 = vmatprep.subr.mxu0 0.0
    %v112 = vand.u32 %v50, 4294901760
    %113 = vmatpush1.msra.mxu0 %v112
    %114 = vmatprep.subr.mxu0 0.0
    %v115 = vand.u32 %v49, 4294901760
    %116 = vmatpush1.msra.mxu0 %v115
    %117 = vmatprep.subr.mxu0 0.0
    %118 = vmatpush2.msra.mxu0 0.0
    %119 = vmatprep.subr.mxu0 0.0
    %120 = vmatpush2.msra.mxu0 0.0
    %121 = vmatprep.subr.mxu0 0.0
    %122 = vmatpush2.msra.mxu0 0.0
    %123 = vmatprep.subr.mxu0 0.0
    %124 = vmatpush2.msra.mxu0 0.0
    %125 = vmatprep.subr.mxu0 0.0
    %126 = vmatpush2.msra.mxu0 0.0
    %127 = vmatprep.subr.mxu0 0.0
    %128 = vmatpush2.msra.mxu0 0.0
    %129 = vmatprep.subr.mxu0 0.0
    %130 = vmatpush2.msra.mxu0 0.0
    %131 = vmatprep.subr.mxu0 0.0
    %132 = vmatpush2.msra.mxu0 0.0
    %133 = vmatprep.subr.mxu0 0.0
    %134 = vmatpush2.msra.mxu0 0.0
    %135 = vmatprep.subr.mxu0 0.0
    %136 = vmatpush2.msra.mxu0 0.0
    %137 = vmatprep.subr.mxu0 0.0
    %138 = vmatpush2.msra.mxu0 0.0
    %139 = vmatprep.subr.mxu0 0.0
    %140 = vmatpush2.msra.mxu0 0.0
    %141 = vmatprep.subr.mxu0 0.0
    %142 = vmatpush2.msra.mxu0 0.0
    %143 = vmatprep.subr.mxu0 0.0
    %144 = vmatpush2.msra.mxu0 0.0
    %145 = vmatprep.subr.mxu0 0.0
    %146 = vmatpush2.msra.mxu0 0.0
    %147 = vmatprep.subr.mxu0 0.0
    %148 = vmatpush2.msra.mxu0 0.0
    %149 = vmatprep.mubr.f32.mxu0 0.0
    %v150 = vand.u32 %v60, 4294901760
    %v151 = vsub.f32 %v60, %v150
    %v152 = vand.u32 %v151, 4294901760
    %v153 = vsub.f32 %v151, %v152
    %v154 = vand.u32 %v153, 4294901760
    %155 = vmatmul.mubr.f32.gmra.mxu0 %v154
    %v156 = vpop.f32.mrf.mxu0
    %v157 = vadd.f32 %v56, %v156
    %v158 = vpop.f32.mrf.mxu0
    %159 = vmatprep.mubr.f32.mxu0 0.0
    %v160 = vand.u32 %v63, 4294901760
    %v161 = vsub.f32 %v63, %v160
    %v162 = vand.u32 %v161, 4294901760
    %v163 = vsub.f32 %v161, %v162
    %v164 = vand.u32 %v163, 4294901760
    %165 = vmatmul.mubr.f32.gmra.mxu0 %v164
    %v166 = vpop.f32.mrf.mxu0
    %v167 = vadd.f32 %v56, %v166
    %v168 = vpop.f32.mrf.mxu0
    %169 = vmatprep.mubr.f32.mxu0 0.0
    %v170 = vand.u32 %v66, 4294901760
    %v171 = vsub.f32 %v66, %v170
    %v172 = vand.u32 %v171, 4294901760
    %v173 = vsub.f32 %v171, %v172
    %v174 = vand.u32 %v173, 4294901760
    %175 = vmatmul.mubr.f32.gmra.mxu0 %v174
    %v176 = vpop.f32.mrf.mxu0
    %v177 = vadd.f32 %v56, %v176
    %v178 = vpop.f32.mrf.mxu0
    %179 = vmatprep.mubr.f32.mxu0 0.0
    %v180 = vand.u32 %v69, 4294901760
    %v181 = vsub.f32 %v69, %v180
    %v182 = vand.u32 %v181, 4294901760
    %v183 = vsub.f32 %v181, %v182
    %v184 = vand.u32 %v183, 4294901760
    %185 = vmatmul.mubr.f32.gmra.mxu0 %v184
    %v186 = vpop.f32.mrf.mxu0
    %v187 = vadd.f32 %v56, %v186
    %v188 = vpop.f32.mrf.mxu0
    %189 = vmatprep.mubr.f32.mxu0 0.0
    %v190 = vand.u32 %v72, 4294901760
    %v191 = vsub.f32 %v72, %v190
    %v192 = vand.u32 %v191, 4294901760
    %v193 = vsub.f32 %v191, %v192
    %v194 = vand.u32 %v193, 4294901760
    %195 = vmatmul.mubr.f32.gmra.mxu0 %v194
    %v196 = vpop.f32.mrf.mxu0
    %v197 = vadd.f32 %v56, %v196
    %v198 = vpop.f32.mrf.mxu0
    %199 = vmatprep.mubr.f32.mxu0 0.0
    %v200 = vand.u32 %v75, 4294901760
    %v201 = vsub.f32 %v75, %v200
    %v202 = vand.u32 %v201, 4294901760
    %v203 = vsub.f32 %v201, %v202
    %v204 = vand.u32 %v203, 4294901760
    %205 = vmatmul.mubr.f32.gmra.mxu0 %v204
    %v206 = vpop.f32.mrf.mxu0
    %v207 = vadd.f32 %v56, %v206
    %v208 = vpop.f32.mrf.mxu0
    %209 = vmatprep.mubr.f32.mxu0 0.0
    %v210 = vand.u32 %v78, 4294901760
    %v211 = vsub.f32 %v78, %v210
    %v212 = vand.u32 %v211, 4294901760
    %v213 = vsub.f32 %v211, %v212
    %v214 = vand.u32 %v213, 4294901760
    %215 = vmatmul.mubr.f32.gmra.mxu0 %v214
    %v216 = vpop.f32.mrf.mxu0
    %v217 = vadd.f32 %v56, %v216
    %v218 = vpop.f32.mrf.mxu0
    %219 = vmatprep.mubr.f32.mxu0 0.0
    %v220 = vand.u32 %v81, 4294901760
    %v221 = vsub.f32 %v81, %v220
    %v222 = vand.u32 %v221, 4294901760
    %v223 = vsub.f32 %v221, %v222
    %v224 = vand.u32 %v223, 4294901760
    %225 = vmatmul.mubr.f32.gmra.mxu0 %v224
    %v226 = vpop.f32.mrf.mxu0
    %v227 = vadd.f32 %v56, %v226
    %v228 = vpop.f32.mrf.mxu0
    %229 = vdwg.mxu0
    %230 = vmatprep.subr.mxu0 0.0
    %231 = vmatpush1.msra.mxu0 0.0
    %232 = vmatprep.subr.mxu0 0.0
    %233 = vmatpush1.msra.mxu0 0.0
    %234 = vmatprep.subr.mxu0 0.0
    %235 = vmatpush1.msra.mxu0 0.0
    %236 = vmatprep.subr.mxu0 0.0
    %237 = vmatpush1.msra.mxu0 0.0
    %238 = vmatprep.subr.mxu0 0.0
    %239 = vmatpush1.msra.mxu0 0.0
    %240 = vmatprep.subr.mxu0 0.0
    %241 = vmatpush1.msra.mxu0 0.0
    %242 = vmatprep.subr.mxu0 0.0
    %243 = vmatpush1.msra.mxu0 0.0
    %244 = vmatprep.subr.mxu0 0.0
    %245 = vmatpush1.msra.mxu0 0.0
    %246 = vmatprep.subr.mxu0 0.0
    %247 = vmatpush1.msra.mxu0 0.0
    %248 = vmatprep.subr.mxu0 0.0
    %249 = vmatpush1.msra.mxu0 0.0
    %250 = vmatprep.subr.mxu0 0.0
    %251 = vmatpush1.msra.mxu0 0.0
    %252 = vmatprep.subr.mxu0 0.0
    %253 = vmatpush1.msra.mxu0 0.0
    %254 = vmatprep.subr.mxu0 0.0
    %255 = vmatpush1.msra.mxu0 0.0
    %256 = vmatprep.subr.mxu0 0.0
    %257 = vmatpush1.msra.mxu0 0.0
    %258 = vmatprep.subr.mxu0 0.0
    %v259 = vand.u32 %v50, 4294901760
    %v260 = vsub.f32 %v50, %v259
    %v261 = vand.u32 %v260, 4294901760
    %v262 = vsub.f32 %v260, %v261
    %v263 = vand.u32 %v262, 4294901760
    %264 = vmatpush1.msra.mxu0 %v263
    %265 = vmatprep.subr.mxu0 0.0
    %v266 = vand.u32 %v49, 4294901760
    %v267 = vsub.f32 %v49, %v266
    %v268 = vand.u32 %v267, 4294901760
    %v269 = vsub.f32 %v267, %v268
    %v270 = vand.u32 %v269, 4294901760
    %271 = vmatpush1.msra.mxu0 %v270
    %272 = vmatprep.subr.mxu0 0.0
    %273 = vmatpush2.msra.mxu0 0.0
    %274 = vmatprep.subr.mxu0 0.0
    %275 = vmatpush2.msra.mxu0 0.0
    %276 = vmatprep.subr.mxu0 0.0
    %277 = vmatpush2.msra.mxu0 0.0
    %278 = vmatprep.subr.mxu0 0.0
    %279 = vmatpush2.msra.mxu0 0.0
    %280 = vmatprep.subr.mxu0 0.0
    %281 = vmatpush2.msra.mxu0 0.0
    %282 = vmatprep.subr.mxu0 0.0
    %283 = vmatpush2.msra.mxu0 0.0
    %284 = vmatprep.subr.mxu0 0.0
    %285 = vmatpush2.msra.mxu0 0.0
    %286 = vmatprep.subr.mxu0 0.0
    %287 = vmatpush2.msra.mxu0 0.0
    %288 = vmatprep.subr.mxu0 0.0
    %289 = vmatpush2.msra.mxu0 0.0
    %290 = vmatprep.subr.mxu0 0.0
    %291 = vmatpush2.msra.mxu0 0.0
    %292 = vmatprep.subr.mxu0 0.0
    %293 = vmatpush2.msra.mxu0 0.0
    %294 = vmatprep.subr.mxu0 0.0
    %295 = vmatpush2.msra.mxu0 0.0
    %296 = vmatprep.subr.mxu0 0.0
    %297 = vmatpush2.msra.mxu0 0.0
    %298 = vmatprep.subr.mxu0 0.0
    %299 = vmatpush2.msra.mxu0 0.0
    %300 = vmatprep.subr.mxu0 0.0
    %301 = vmatpush2.msra.mxu0 0.0
    %302 = vmatprep.subr.mxu0 0.0
    %303 = vmatpush2.msra.mxu0 0.0
    %304 = vmatprep.mubr.f32.mxu0 0.0
    %v305 = vand.u32 %v60, 4294901760
    %306 = vmatmul.mubr.f32.gmra.mxu0 %v305
    %v307 = vpop.f32.mrf.mxu0
    %v308 = vadd.f32 %v157, %v307
    %v309 = vpop.f32.mrf.mxu0
    %310 = vmatprep.mubr.f32.mxu0 0.0
    %v311 = vand.u32 %v63, 4294901760
    %312 = vmatmul.mubr.f32.gmra.mxu0 %v311
    %v313 = vpop.f32.mrf.mxu0
    %v314 = vadd.f32 %v167, %v313
    %v315 = vpop.f32.mrf.mxu0
    %316 = vmatprep.mubr.f32.mxu0 0.0
    %v317 = vand.u32 %v66, 4294901760
    %318 = vmatmul.mubr.f32.gmra.mxu0 %v317
    %v319 = vpop.f32.mrf.mxu0
    %v320 = vadd.f32 %v177, %v319
    %v321 = vpop.f32.mrf.mxu0
    %322 = vmatprep.mubr.f32.mxu0 0.0
    %v323 = vand.u32 %v69, 4294901760
    %324 = vmatmul.mubr.f32.gmra.mxu0 %v323
    %v325 = vpop.f32.mrf.mxu0
    %v326 = vadd.f32 %v187, %v325
    %v327 = vpop.f32.mrf.mxu0
    %328 = vmatprep.mubr.f32.mxu0 0.0
    %v329 = vand.u32 %v72, 4294901760
    %330 = vmatmul.mubr.f32.gmra.mxu0 %v329
    %v331 = vpop.f32.mrf.mxu0
    %v332 = vadd.f32 %v197, %v331
    %v333 = vpop.f32.mrf.mxu0
    %334 = vmatprep.mubr.f32.mxu0 0.0
    %v335 = vand.u32 %v75, 4294901760
    %336 = vmatmul.mubr.f32.gmra.mxu0 %v335
    %v337 = vpop.f32.mrf.mxu0
    %v338 = vadd.f32 %v207, %v337
    %v339 = vpop.f32.mrf.mxu0
    %340 = vmatprep.mubr.f32.mxu0 0.0
    %v341 = vand.u32 %v78, 4294901760
    %342 = vmatmul.mubr.f32.gmra.mxu0 %v341
    %v343 = vpop.f32.mrf.mxu0
    %v344 = vadd.f32 %v217, %v343
    %v345 = vpop.f32.mrf.mxu0
    %346 = vmatprep.mubr.f32.mxu0 0.0
    %v347 = vand.u32 %v81, 4294901760
    %348 = vmatmul.mubr.f32.gmra.mxu0 %v347
    %v349 = vpop.f32.mrf.mxu0
    %v350 = vadd.f32 %v227, %v349
    %v351 = vpop.f32.mrf.mxu0
    %352 = vdwg.mxu0
    %353 = vmatprep.subr.mxu0 0.0
    %354 = vmatpush1.msra.mxu0 0.0
    %355 = vmatprep.subr.mxu0 0.0
    %356 = vmatpush1.msra.mxu0 0.0
    %357 = vmatprep.subr.mxu0 0.0
    %358 = vmatpush1.msra.mxu0 0.0
    %359 = vmatprep.subr.mxu0 0.0
    %360 = vmatpush1.msra.mxu0 0.0
    %361 = vmatprep.subr.mxu0 0.0
    %362 = vmatpush1.msra.mxu0 0.0
    %363 = vmatprep.subr.mxu0 0.0
    %364 = vmatpush1.msra.mxu0 0.0
    %365 = vmatprep.subr.mxu0 0.0
    %366 = vmatpush1.msra.mxu0 0.0
    %367 = vmatprep.subr.mxu0 0.0
    %368 = vmatpush1.msra.mxu0 0.0
    %369 = vmatprep.subr.mxu0 0.0
    %370 = vmatpush1.msra.mxu0 0.0
    %371 = vmatprep.subr.mxu0 0.0
    %372 = vmatpush1.msra.mxu0 0.0
    %373 = vmatprep.subr.mxu0 0.0
    %374 = vmatpush1.msra.mxu0 0.0
    %375 = vmatprep.subr.mxu0 0.0
    %376 = vmatpush1.msra.mxu0 0.0
    %377 = vmatprep.subr.mxu0 0.0
    %378 = vmatpush1.msra.mxu0 0.0
    %379 = vmatprep.subr.mxu0 0.0
    %380 = vmatpush1.msra.mxu0 0.0
    %381 = vmatprep.subr.mxu0 0.0
    %v382 = vand.u32 %v50, 4294901760
    %v383 = vsub.f32 %v50, %v382
    %384 = vmatpush1.msra.mxu0 %v383
    %385 = vmatprep.subr.mxu0 0.0
    %v386 = vand.u32 %v49, 4294901760
    %v387 = vsub.f32 %v49, %v386
    %388 = vmatpush1.msra.mxu0 %v387
    %389 = vmatprep.subr.mxu0 0.0
    %390 = vmatpush2.msra.mxu0 0.0
    %391 = vmatprep.subr.mxu0 0.0
    %392 = vmatpush2.msra.mxu0 0.0
    %393 = vmatprep.subr.mxu0 0.0
    %394 = vmatpush2.msra.mxu0 0.0
    %395 = vmatprep.subr.mxu0 0.0
    %396 = vmatpush2.msra.mxu0 0.0
    %397 = vmatprep.subr.mxu0 0.0
    %398 = vmatpush2.msra.mxu0 0.0
    %399 = vmatprep.subr.mxu0 0.0
    %400 = vmatpush2.msra.mxu0 0.0
    %401 = vmatprep.subr.mxu0 0.0
    %402 = vmatpush2.msra.mxu0 0.0
    %403 = vmatprep.subr.mxu0 0.0
    %404 = vmatpush2.msra.mxu0 0.0
    %405 = vmatprep.subr.mxu0 0.0
    %406 = vmatpush2.msra.mxu0 0.0
    %407 = vmatprep.subr.mxu0 0.0
    %408 = vmatpush2.msra.mxu0 0.0
    %409 = vmatprep.subr.mxu0 0.0
    %410 = vmatpush2.msra.mxu0 0.0
    %411 = vmatprep.subr.mxu0 0.0
    %412 = vmatpush2.msra.mxu0 0.0
    %413 = vmatprep.subr.mxu0 0.0
    %414 = vmatpush2.msra.mxu0 0.0
    %415 = vmatprep.subr.mxu0 0.0
    %416 = vmatpush2.msra.mxu0 0.0
    %417 = vmatprep.subr.mxu0 0.0
    %418 = vmatpush2.msra.mxu0 0.0
    %419 = vmatprep.subr.mxu0 0.0
    %420 = vmatpush2.msra.mxu0 0.0
    %421 = vmatprep.mubr.f32.mxu0 0.0
    %v422 = vand.u32 %v60, 4294901760
    %v423 = vsub.f32 %v60, %v422
    %424 = vmatmul.mubr.f32.gmra.mxu0 %v423
    %v425 = vpop.f32.mrf.mxu0
    %v426 = vadd.f32 %v308, %v425
    %v427 = vpop.f32.mrf.mxu0
    %428 = vmatprep.mubr.f32.mxu0 0.0
    %v429 = vand.u32 %v63, 4294901760
    %v430 = vsub.f32 %v63, %v429
    %431 = vmatmul.mubr.f32.gmra.mxu0 %v430
    %v432 = vpop.f32.mrf.mxu0
    %v433 = vadd.f32 %v314, %v432
    %v434 = vpop.f32.mrf.mxu0
    %435 = vmatprep.mubr.f32.mxu0 0.0
    %v436 = vand.u32 %v66, 4294901760
    %v437 = vsub.f32 %v66, %v436
    %438 = vmatmul.mubr.f32.gmra.mxu0 %v437
    %v439 = vpop.f32.mrf.mxu0
    %v440 = vadd.f32 %v320, %v439
    %v441 = vpop.f32.mrf.mxu0
    %442 = vmatprep.mubr.f32.mxu0 0.0
    %v443 = vand.u32 %v69, 4294901760
    %v444 = vsub.f32 %v69, %v443
    %445 = vmatmul.mubr.f32.gmra.mxu0 %v444
    %v446 = vpop.f32.mrf.mxu0
    %v447 = vadd.f32 %v326, %v446
    %v448 = vpop.f32.mrf.mxu0
    %449 = vmatprep.mubr.f32.mxu0 0.0
    %v450 = vand.u32 %v72, 4294901760
    %v451 = vsub.f32 %v72, %v450
    %452 = vmatmul.mubr.f32.gmra.mxu0 %v451
    %v453 = vpop.f32.mrf.mxu0
    %v454 = vadd.f32 %v332, %v453
    %v455 = vpop.f32.mrf.mxu0
    %456 = vmatprep.mubr.f32.mxu0 0.0
    %v457 = vand.u32 %v75, 4294901760
    %v458 = vsub.f32 %v75, %v457
    %459 = vmatmul.mubr.f32.gmra.mxu0 %v458
    %v460 = vpop.f32.mrf.mxu0
    %v461 = vadd.f32 %v338, %v460
    %v462 = vpop.f32.mrf.mxu0
    %463 = vmatprep.mubr.f32.mxu0 0.0
    %v464 = vand.u32 %v78, 4294901760
    %v465 = vsub.f32 %v78, %v464
    %466 = vmatmul.mubr.f32.gmra.mxu0 %v465
    %v467 = vpop.f32.mrf.mxu0
    %v468 = vadd.f32 %v344, %v467
    %v469 = vpop.f32.mrf.mxu0
    %470 = vmatprep.mubr.f32.mxu0 0.0
    %v471 = vand.u32 %v81, 4294901760
    %v472 = vsub.f32 %v81, %v471
    %473 = vmatmul.mubr.f32.gmra.mxu0 %v472
    %v474 = vpop.f32.mrf.mxu0
    %v475 = vadd.f32 %v350, %v474
    %v476 = vpop.f32.mrf.mxu0
    %477 = vdwg.mxu0
    %478 = vmatprep.subr.mxu0 0.0
    %479 = vmatpush1.msra.mxu0 0.0
    %480 = vmatprep.subr.mxu0 0.0
    %481 = vmatpush1.msra.mxu0 0.0
    %482 = vmatprep.subr.mxu0 0.0
    %483 = vmatpush1.msra.mxu0 0.0
    %484 = vmatprep.subr.mxu0 0.0
    %485 = vmatpush1.msra.mxu0 0.0
    %486 = vmatprep.subr.mxu0 0.0
    %487 = vmatpush1.msra.mxu0 0.0
    %488 = vmatprep.subr.mxu0 0.0
    %489 = vmatpush1.msra.mxu0 0.0
    %490 = vmatprep.subr.mxu0 0.0
    %491 = vmatpush1.msra.mxu0 0.0
    %492 = vmatprep.subr.mxu0 0.0
    %493 = vmatpush1.msra.mxu0 0.0
    %494 = vmatprep.subr.mxu0 0.0
    %495 = vmatpush1.msra.mxu0 0.0
    %496 = vmatprep.subr.mxu0 0.0
    %497 = vmatpush1.msra.mxu0 0.0
    %498 = vmatprep.subr.mxu0 0.0
    %499 = vmatpush1.msra.mxu0 0.0
    %500 = vmatprep.subr.mxu0 0.0
    %501 = vmatpush1.msra.mxu0 0.0
    %502 = vmatprep.subr.mxu0 0.0
    %503 = vmatpush1.msra.mxu0 0.0
    %504 = vmatprep.subr.mxu0 0.0
    %505 = vmatpush1.msra.mxu0 0.0
    %506 = vmatprep.subr.mxu0 0.0
    %v507 = vand.u32 %v50, 4294901760
    %508 = vmatpush1.msra.mxu0 %v507
    %509 = vmatprep.subr.mxu0 0.0
    %v510 = vand.u32 %v49, 4294901760
    %511 = vmatpush1.msra.mxu0 %v510
    %512 = vmatprep.subr.mxu0 0.0
    %513 = vmatpush2.msra.mxu0 0.0
    %514 = vmatprep.subr.mxu0 0.0
    %515 = vmatpush2.msra.mxu0 0.0
    %516 = vmatprep.subr.mxu0 0.0
    %517 = vmatpush2.msra.mxu0 0.0
    %518 = vmatprep.subr.mxu0 0.0
    %519 = vmatpush2.msra.mxu0 0.0
    %520 = vmatprep.subr.mxu0 0.0
    %521 = vmatpush2.msra.mxu0 0.0
    %522 = vmatprep.subr.mxu0 0.0
    %523 = vmatpush2.msra.mxu0 0.0
    %524 = vmatprep.subr.mxu0 0.0
    %525 = vmatpush2.msra.mxu0 0.0
    %526 = vmatprep.subr.mxu0 0.0
    %527 = vmatpush2.msra.mxu0 0.0
    %528 = vmatprep.subr.mxu0 0.0
    %529 = vmatpush2.msra.mxu0 0.0
    %530 = vmatprep.subr.mxu0 0.0
    %531 = vmatpush2.msra.mxu0 0.0
    %532 = vmatprep.subr.mxu0 0.0
    %533 = vmatpush2.msra.mxu0 0.0
    %534 = vmatprep.subr.mxu0 0.0
    %535 = vmatpush2.msra.mxu0 0.0
    %536 = vmatprep.subr.mxu0 0.0
    %537 = vmatpush2.msra.mxu0 0.0
    %538 = vmatprep.subr.mxu0 0.0
    %539 = vmatpush2.msra.mxu0 0.0
    %540 = vmatprep.subr.mxu0 0.0
    %541 = vmatpush2.msra.mxu0 0.0
    %542 = vmatprep.subr.mxu0 0.0
    %543 = vmatpush2.msra.mxu0 0.0
    %544 = vmatprep.mubr.f32.mxu0 0.0
    %v545 = vand.u32 %v60, 4294901760
    %v546 = vsub.f32 %v60, %v545
    %v547 = vand.u32 %v546, 4294901760
    %548 = vmatmul.mubr.f32.gmra.mxu0 %v547
    %v549 = vpop.f32.mrf.mxu0
    %v550 = vadd.f32 %v426, %v549
    %v551 = vpop.f32.mrf.mxu0
    %552 = vmatprep.mubr.f32.mxu0 0.0
    %v553 = vand.u32 %v63, 4294901760
    %v554 = vsub.f32 %v63, %v553
    %v555 = vand.u32 %v554, 4294901760
    %556 = vmatmul.mubr.f32.gmra.mxu0 %v555
    %v557 = vpop.f32.mrf.mxu0
    %v558 = vadd.f32 %v433, %v557
    %v559 = vpop.f32.mrf.mxu0
    %560 = vmatprep.mubr.f32.mxu0 0.0
    %v561 = vand.u32 %v66, 4294901760
    %v562 = vsub.f32 %v66, %v561
    %v563 = vand.u32 %v562, 4294901760
    %564 = vmatmul.mubr.f32.gmra.mxu0 %v563
    %v565 = vpop.f32.mrf.mxu0
    %v566 = vadd.f32 %v440, %v565
    %v567 = vpop.f32.mrf.mxu0
    %568 = vmatprep.mubr.f32.mxu0 0.0
    %v569 = vand.u32 %v69, 4294901760
    %v570 = vsub.f32 %v69, %v569
    %v571 = vand.u32 %v570, 4294901760
    %572 = vmatmul.mubr.f32.gmra.mxu0 %v571
    %v573 = vpop.f32.mrf.mxu0
    %v574 = vadd.f32 %v447, %v573
    %v575 = vpop.f32.mrf.mxu0
    %576 = vmatprep.mubr.f32.mxu0 0.0
    %v577 = vand.u32 %v72, 4294901760
    %v578 = vsub.f32 %v72, %v577
    %v579 = vand.u32 %v578, 4294901760
    %580 = vmatmul.mubr.f32.gmra.mxu0 %v579
    %v581 = vpop.f32.mrf.mxu0
    %v582 = vadd.f32 %v454, %v581
    %v583 = vpop.f32.mrf.mxu0
    %584 = vmatprep.mubr.f32.mxu0 0.0
    %v585 = vand.u32 %v75, 4294901760
    %v586 = vsub.f32 %v75, %v585
    %v587 = vand.u32 %v586, 4294901760
    %588 = vmatmul.mubr.f32.gmra.mxu0 %v587
    %v589 = vpop.f32.mrf.mxu0
    %v590 = vadd.f32 %v461, %v589
    %v591 = vpop.f32.mrf.mxu0
    %592 = vmatprep.mubr.f32.mxu0 0.0
    %v593 = vand.u32 %v78, 4294901760
    %v594 = vsub.f32 %v78, %v593
    %v595 = vand.u32 %v594, 4294901760
    %596 = vmatmul.mubr.f32.gmra.mxu0 %v595
    %v597 = vpop.f32.mrf.mxu0
    %v598 = vadd.f32 %v468, %v597
    %v599 = vpop.f32.mrf.mxu0
    %600 = vmatprep.mubr.f32.mxu0 0.0
    %v601 = vand.u32 %v81, 4294901760
    %v602 = vsub.f32 %v81, %v601
    %v603 = vand.u32 %v602, 4294901760
    %604 = vmatmul.mubr.f32.gmra.mxu0 %v603
    %v605 = vpop.f32.mrf.mxu0
    %v606 = vadd.f32 %v475, %v605
    %v607 = vpop.f32.mrf.mxu0
    %608 = vdwg.mxu0
    %609 = vmatprep.subr.mxu0 0.0
    %610 = vmatpush1.msra.mxu0 0.0
    %611 = vmatprep.subr.mxu0 0.0
    %612 = vmatpush1.msra.mxu0 0.0
    %613 = vmatprep.subr.mxu0 0.0
    %614 = vmatpush1.msra.mxu0 0.0
    %615 = vmatprep.subr.mxu0 0.0
    %616 = vmatpush1.msra.mxu0 0.0
    %617 = vmatprep.subr.mxu0 0.0
    %618 = vmatpush1.msra.mxu0 0.0
    %619 = vmatprep.subr.mxu0 0.0
    %620 = vmatpush1.msra.mxu0 0.0
    %621 = vmatprep.subr.mxu0 0.0
    %622 = vmatpush1.msra.mxu0 0.0
    %623 = vmatprep.subr.mxu0 0.0
    %624 = vmatpush1.msra.mxu0 0.0
    %625 = vmatprep.subr.mxu0 0.0
    %626 = vmatpush1.msra.mxu0 0.0
    %627 = vmatprep.subr.mxu0 0.0
    %628 = vmatpush1.msra.mxu0 0.0
    %629 = vmatprep.subr.mxu0 0.0
    %630 = vmatpush1.msra.mxu0 0.0
    %631 = vmatprep.subr.mxu0 0.0
    %632 = vmatpush1.msra.mxu0 0.0
    %633 = vmatprep.subr.mxu0 0.0
    %634 = vmatpush1.msra.mxu0 0.0
    %635 = vmatprep.subr.mxu0 0.0
    %636 = vmatpush1.msra.mxu0 0.0
    %637 = vmatprep.subr.mxu0 0.0
    %v638 = vand.u32 %v50, 4294901760
    %v639 = vsub.f32 %v50, %v638
    %v640 = vand.u32 %v639, 4294901760
    %641 = vmatpush1.msra.mxu0 %v640
    %642 = vmatprep.subr.mxu0 0.0
    %v643 = vand.u32 %v49, 4294901760
    %v644 = vsub.f32 %v49, %v643
    %v645 = vand.u32 %v644, 4294901760
    %646 = vmatpush1.msra.mxu0 %v645
    %647 = vmatprep.subr.mxu0 0.0
    %648 = vmatpush2.msra.mxu0 0.0
    %649 = vmatprep.subr.mxu0 0.0
    %650 = vmatpush2.msra.mxu0 0.0
    %651 = vmatprep.subr.mxu0 0.0
    %652 = vmatpush2.msra.mxu0 0.0
    %653 = vmatprep.subr.mxu0 0.0
    %654 = vmatpush2.msra.mxu0 0.0
    %655 = vmatprep.subr.mxu0 0.0
    %656 = vmatpush2.msra.mxu0 0.0
    %657 = vmatprep.subr.mxu0 0.0
    %658 = vmatpush2.msra.mxu0 0.0
    %659 = vmatprep.subr.mxu0 0.0
    %660 = vmatpush2.msra.mxu0 0.0
    %661 = vmatprep.subr.mxu0 0.0
    %662 = vmatpush2.msra.mxu0 0.0
    %663 = vmatprep.subr.mxu0 0.0
    %664 = vmatpush2.msra.mxu0 0.0
    %665 = vmatprep.subr.mxu0 0.0
    %666 = vmatpush2.msra.mxu0 0.0
    %667 = vmatprep.subr.mxu0 0.0
    %668 = vmatpush2.msra.mxu0 0.0
    %669 = vmatprep.subr.mxu0 0.0
    %670 = vmatpush2.msra.mxu0 0.0
    %671 = vmatprep.subr.mxu0 0.0
    %672 = vmatpush2.msra.mxu0 0.0
    %673 = vmatprep.subr.mxu0 0.0
    %674 = vmatpush2.msra.mxu0 0.0
    %675 = vmatprep.subr.mxu0 0.0
    %676 = vmatpush2.msra.mxu0 0.0
    %677 = vmatprep.subr.mxu0 0.0
    %678 = vmatpush2.msra.mxu0 0.0
    %679 = vmatprep.mubr.f32.mxu0 0.0
    %v680 = vand.u32 %v60, 4294901760
    %681 = vmatmul.mubr.f32.gmra.mxu0 %v680
    %v682 = vpop.f32.mrf.mxu0
    %v683 = vadd.f32 %v550, %v682
    %v684 = vpop.f32.mrf.mxu0
    %685 = vmatprep.mubr.f32.mxu0 0.0
    %v686 = vand.u32 %v63, 4294901760
    %687 = vmatmul.mubr.f32.gmra.mxu0 %v686
    %v688 = vpop.f32.mrf.mxu0
    %v689 = vadd.f32 %v558, %v688
    %v690 = vpop.f32.mrf.mxu0
    %691 = vmatprep.mubr.f32.mxu0 0.0
    %v692 = vand.u32 %v66, 4294901760
    %693 = vmatmul.mubr.f32.gmra.mxu0 %v692
    %v694 = vpop.f32.mrf.mxu0
    %v695 = vadd.f32 %v566, %v694
    %v696 = vpop.f32.mrf.mxu0
    %697 = vmatprep.mubr.f32.mxu0 0.0
    %v698 = vand.u32 %v69, 4294901760
    %699 = vmatmul.mubr.f32.gmra.mxu0 %v698
    %v700 = vpop.f32.mrf.mxu0
    %v701 = vadd.f32 %v574, %v700
    %v702 = vpop.f32.mrf.mxu0
    %703 = vmatprep.mubr.f32.mxu0 0.0
    %v704 = vand.u32 %v72, 4294901760
    %705 = vmatmul.mubr.f32.gmra.mxu0 %v704
    %v706 = vpop.f32.mrf.mxu0
    %v707 = vadd.f32 %v582, %v706
    %v708 = vpop.f32.mrf.mxu0
    %709 = vmatprep.mubr.f32.mxu0 0.0
    %v710 = vand.u32 %v75, 4294901760
    %711 = vmatmul.mubr.f32.gmra.mxu0 %v710
    %v712 = vpop.f32.mrf.mxu0
    %v713 = vadd.f32 %v590, %v712
    %v714 = vpop.f32.mrf.mxu0
    %715 = vmatprep.mubr.f32.mxu0 0.0
    %v716 = vand.u32 %v78, 4294901760
    %717 = vmatmul.mubr.f32.gmra.mxu0 %v716
    %v718 = vpop.f32.mrf.mxu0
    %v719 = vadd.f32 %v598, %v718
    %v720 = vpop.f32.mrf.mxu0
    %721 = vmatprep.mubr.f32.mxu0 0.0
    %v722 = vand.u32 %v81, 4294901760
    %723 = vmatmul.mubr.f32.gmra.mxu0 %v722
    %v724 = vpop.f32.mrf.mxu0
    %v725 = vadd.f32 %v606, %v724
    %v726 = vpop.f32.mrf.mxu0
    %727 = vdwg.mxu0
    %728 = vmatprep.subr.mxu0 0.0
    %729 = vmatpush1.msra.mxu0 0.0
    %730 = vmatprep.subr.mxu0 0.0
    %731 = vmatpush1.msra.mxu0 0.0
    %732 = vmatprep.subr.mxu0 0.0
    %733 = vmatpush1.msra.mxu0 0.0
    %734 = vmatprep.subr.mxu0 0.0
    %735 = vmatpush1.msra.mxu0 0.0
    %736 = vmatprep.subr.mxu0 0.0
    %737 = vmatpush1.msra.mxu0 0.0
    %738 = vmatprep.subr.mxu0 0.0
    %739 = vmatpush1.msra.mxu0 0.0
    %740 = vmatprep.subr.mxu0 0.0
    %741 = vmatpush1.msra.mxu0 0.0
    %742 = vmatprep.subr.mxu0 0.0
    %743 = vmatpush1.msra.mxu0 0.0
    %744 = vmatprep.subr.mxu0 0.0
    %745 = vmatpush1.msra.mxu0 0.0
    %746 = vmatprep.subr.mxu0 0.0
    %747 = vmatpush1.msra.mxu0 0.0
    %748 = vmatprep.subr.mxu0 0.0
    %749 = vmatpush1.msra.mxu0 0.0
    %750 = vmatprep.subr.mxu0 0.0
    %751 = vmatpush1.msra.mxu0 0.0
    %752 = vmatprep.subr.mxu0 0.0
    %753 = vmatpush1.msra.mxu0 0.0
    %754 = vmatprep.subr.mxu0 0.0
    %755 = vmatpush1.msra.mxu0 0.0
    %756 = vmatprep.subr.mxu0 0.0
    %v757 = vand.u32 %v50, 4294901760
    %758 = vmatpush1.msra.mxu0 %v757
    %759 = vmatprep.subr.mxu0 0.0
    %v760 = vand.u32 %v49, 4294901760
    %761 = vmatpush1.msra.mxu0 %v760
    %762 = vmatprep.subr.mxu0 0.0
    %763 = vmatpush2.msra.mxu0 0.0
    %764 = vmatprep.subr.mxu0 0.0
    %765 = vmatpush2.msra.mxu0 0.0
    %766 = vmatprep.subr.mxu0 0.0
    %767 = vmatpush2.msra.mxu0 0.0
    %768 = vmatprep.subr.mxu0 0.0
    %769 = vmatpush2.msra.mxu0 0.0
    %770 = vmatprep.subr.mxu0 0.0
    %771 = vmatpush2.msra.mxu0 0.0
    %772 = vmatprep.subr.mxu0 0.0
    %773 = vmatpush2.msra.mxu0 0.0
    %774 = vmatprep.subr.mxu0 0.0
    %775 = vmatpush2.msra.mxu0 0.0
    %776 = vmatprep.subr.mxu0 0.0
    %777 = vmatpush2.msra.mxu0 0.0
    %778 = vmatprep.subr.mxu0 0.0
    %779 = vmatpush2.msra.mxu0 0.0
    %780 = vmatprep.subr.mxu0 0.0
    %781 = vmatpush2.msra.mxu0 0.0
    %782 = vmatprep.subr.mxu0 0.0
    %783 = vmatpush2.msra.mxu0 0.0
    %784 = vmatprep.subr.mxu0 0.0
    %785 = vmatpush2.msra.mxu0 0.0
    %786 = vmatprep.subr.mxu0 0.0
    %787 = vmatpush2.msra.mxu0 0.0
    %788 = vmatprep.subr.mxu0 0.0
    %789 = vmatpush2.msra.mxu0 0.0
    %790 = vmatprep.subr.mxu0 0.0
    %791 = vmatpush2.msra.mxu0 0.0
    %792 = vmatprep.subr.mxu0 0.0
    %793 = vmatpush2.msra.mxu0 0.0
    %794 = vmatprep.mubr.f32.mxu0 0.0
    %v795 = vand.u32 %v60, 4294901760
    %796 = vmatmul.mubr.f32.gmra.mxu0 %v795
    %v797 = vpop.f32.mrf.mxu0
    %v798 = vadd.f32 %v683, %v797
    %v799 = vpop.f32.mrf.mxu0
    %800 = vmatprep.mubr.f32.mxu0 0.0
    %v801 = vand.u32 %v63, 4294901760
    %802 = vmatmul.mubr.f32.gmra.mxu0 %v801
    %v803 = vpop.f32.mrf.mxu0
    %v804 = vadd.f32 %v689, %v803
    %v805 = vpop.f32.mrf.mxu0
    %806 = vmatprep.mubr.f32.mxu0 0.0
    %v807 = vand.u32 %v66, 4294901760
    %808 = vmatmul.mubr.f32.gmra.mxu0 %v807
    %v809 = vpop.f32.mrf.mxu0
    %v810 = vadd.f32 %v695, %v809
    %v811 = vpop.f32.mrf.mxu0
    %812 = vmatprep.mubr.f32.mxu0 0.0
    %v813 = vand.u32 %v69, 4294901760
    %814 = vmatmul.mubr.f32.gmra.mxu0 %v813
    %v815 = vpop.f32.mrf.mxu0
    %v816 = vadd.f32 %v701, %v815
    %v817 = vpop.f32.mrf.mxu0
    %818 = vmatprep.mubr.f32.mxu0 0.0
    %v819 = vand.u32 %v72, 4294901760
    %820 = vmatmul.mubr.f32.gmra.mxu0 %v819
    %v821 = vpop.f32.mrf.mxu0
    %v822 = vadd.f32 %v707, %v821
    %v823 = vpop.f32.mrf.mxu0
    %824 = vmatprep.mubr.f32.mxu0 0.0
    %v825 = vand.u32 %v75, 4294901760
    %826 = vmatmul.mubr.f32.gmra.mxu0 %v825
    %v827 = vpop.f32.mrf.mxu0
    %v828 = vadd.f32 %v713, %v827
    %v829 = vpop.f32.mrf.mxu0
    %830 = vmatprep.mubr.f32.mxu0 0.0
    %v831 = vand.u32 %v78, 4294901760
    %832 = vmatmul.mubr.f32.gmra.mxu0 %v831
    %v833 = vpop.f32.mrf.mxu0
    %v834 = vadd.f32 %v719, %v833
    %v835 = vpop.f32.mrf.mxu0
    %836 = vmatprep.mubr.f32.mxu0 0.0
    %v837 = vand.u32 %v81, 4294901760
    %838 = vmatmul.mubr.f32.gmra.mxu0 %v837
    %v839 = vpop.f32.mrf.mxu0
    %v840 = vadd.f32 %v725, %v839
    %v841 = vpop.f32.mrf.mxu0
    %842 = vdwg.mxu0
    %843 = vst [vmem:[#allocation3] sm:$0xff] %v798
    %844 = vst [vmem:[#allocation3 + $0x8] sm:$0xff] %v804
    %845 = vst [vmem:[#allocation3 + $0x10] sm:$0xff] %v810
    %846 = vst [vmem:[#allocation3 + $0x18] sm:$0xff] %v816
    %847 = vst [vmem:[#allocation3 + $0x20] sm:$0xff] %v822
    %848 = vst [vmem:[#allocation3 + $0x28] sm:$0xff] %v828
    %849 = vst [vmem:[#allocation3 + $0x30] sm:$0xff] %v834
    %850 = vst [vmem:[#allocation3 + $0x38] sm:$0xff] %v840
    %v851 = vld [vmem:[#allocation4] sm:$0xff]
    %v852 = vld [vmem:[#allocation4 + $0x8] sm:$0xff]
    %v853 = vld [vmem:[#allocation4 + $0x10] sm:$0xff]
    %v854 = vld [vmem:[#allocation4 + $0x18] sm:$0xff]
    %v855 = vld [vmem:[#allocation4 + $0x20] sm:$0xff]
    %v856 = vld [vmem:[#allocation4 + $0x28] sm:$0xff]
    %v857 = vld [vmem:[#allocation4 + $0x30] sm:$0xff]
    %v858 = vld [vmem:[#allocation4 + $0x38] sm:$0xff]
    %v859 = vld [vmem:[#allocation4 + $0x40] sm:$0xff]
    %v860 = vld [vmem:[#allocation4 + $0x48] sm:$0xff]
    %v861 = vld [vmem:[#allocation4 + $0x50] sm:$0xff]
    %v862 = vld [vmem:[#allocation4 + $0x58] sm:$0xff]
    %v863 = vld [vmem:[#allocation4 + $0x60] sm:$0xff]
    %v864 = vld [vmem:[#allocation4 + $0x68] sm:$0xff]
    %v865 = vld [vmem:[#allocation4 + $0x70] sm:$0xff]
    %v866 = vld [vmem:[#allocation4 + $0x78] sm:$0xff]
    %v867 = vmul.f32 %v851, 0.5
    %v868 = vmul.f32 %v852, 0.5
    %v869 = vmul.f32 %v853, 0.5
    %v870 = vmul.f32 %v854, 0.5
    %v871 = vmul.f32 %v855, 0.5
    %v872 = vmul.f32 %v856, 0.5
    %v873 = vmul.f32 %v857, 0.5
    %v874 = vmul.f32 %v858, 0.5
    %v875 = vmul.f32 %v859, 0.5
    %v876 = vmul.f32 %v860, 0.5
    %v877 = vmul.f32 %v861, 0.5
    %v878 = vmul.f32 %v862, 0.5
    %v879 = vmul.f32 %v863, 0.5
    %v880 = vmul.f32 %v864, 0.5
    %v881 = vmul.f32 %v865, 0.5
    %v882 = vmul.f32 %v866, 0.5
    %v883 = vld [vmem:[#allocation2] sm:$0xff]
    %v884 = vld [vmem:[#allocation3] sm:$0xff]
    %885 = vmatprep.subr.mxu0 0.0
    %v886 = vand.u32 %v882, 4294901760
    %887 = vmatpush1.msra.mxu0 %v886
    %888 = vmatprep.subr.mxu0 0.0
    %v889 = vand.u32 %v881, 4294901760
    %890 = vmatpush1.msra.mxu0 %v889
    %891 = vmatprep.subr.mxu0 0.0
    %v892 = vand.u32 %v880, 4294901760
    %893 = vmatpush1.msra.mxu0 %v892
    %894 = vmatprep.subr.mxu0 0.0
    %v895 = vand.u32 %v879, 4294901760
    %896 = vmatpush1.msra.mxu0 %v895
    %897 = vmatprep.subr.mxu0 0.0
    %v898 = vand.u32 %v878, 4294901760
    %899 = vmatpush1.msra.mxu0 %v898
    %900 = vmatprep.subr.mxu0 0.0
    %v901 = vand.u32 %v877, 4294901760
    %902 = vmatpush1.msra.mxu0 %v901
    %903 = vmatprep.subr.mxu0 0.0
    %v904 = vand.u32 %v876, 4294901760
    %905 = vmatpush1.msra.mxu0 %v904
    %906 = vmatprep.subr.mxu0 0.0
    %v907 = vand.u32 %v875, 4294901760
    %908 = vmatpush1.msra.mxu0 %v907
    %909 = vmatprep.subr.mxu0 0.0
    %v910 = vand.u32 %v874, 4294901760
    %911 = vmatpush1.msra.mxu0 %v910
    %912 = vmatprep.subr.mxu0 0.0
    %v913 = vand.u32 %v873, 4294901760
    %914 = vmatpush1.msra.mxu0 %v913
    %915 = vmatprep.subr.mxu0 0.0
    %v916 = vand.u32 %v872, 4294901760
    %917 = vmatpush1.msra.mxu0 %v916
    %918 = vmatprep.subr.mxu0 0.0
    %v919 = vand.u32 %v871, 4294901760
    %920 = vmatpush1.msra.mxu0 %v919
    %921 = vmatprep.subr.mxu0 0.0
    %v922 = vand.u32 %v870, 4294901760
    %923 = vmatpush1.msra.mxu0 %v922
    %924 = vmatprep.subr.mxu0 0.0
    %v925 = vand.u32 %v869, 4294901760
    %926 = vmatpush1.msra.mxu0 %v925
    %927 = vmatprep.subr.mxu0 0.0
    %v928 = vand.u32 %v868, 4294901760
    %929 = vmatpush1.msra.mxu0 %v928
    %930 = vmatprep.subr.mxu0 0.0
    %v931 = vand.u32 %v867, 4294901760
    %932 = vmatpush1.msra.mxu0 %v931
    %933 = vmatprep.subr.mxu0 0.0
    %934 = vmatpush2.msra.mxu0 0.0
    %935 = vmatprep.subr.mxu0 0.0
    %936 = vmatpush2.msra.mxu0 0.0
    %937 = vmatprep.subr.mxu0 0.0
    %938 = vmatpush2.msra.mxu0 0.0
    %939 = vmatprep.subr.mxu0 0.0
    %940 = vmatpush2.msra.mxu0 0.0
    %941 = vmatprep.subr.mxu0 0.0
    %942 = vmatpush2.msra.mxu0 0.0
    %943 = vmatprep.subr.mxu0 0.0
    %944 = vmatpush2.msra.mxu0 0.0
    %945 = vmatprep.subr.mxu0 0.0
    %946 = vmatpush2.msra.mxu0 0.0
    %947 = vmatprep.subr.mxu0 0.0
    %948 = vmatpush2.msra.mxu0 0.0
    %949 = vmatprep.subr.mxu0 0.0
    %950 = vmatpush2.msra.mxu0 0.0
    %951 = vmatprep.subr.mxu0 0.0
    %952 = vmatpush2.msra.mxu0 0.0
    %953 = vmatprep.subr.mxu0 0.0
    %954 = vmatpush2.msra.mxu0 0.0
    %955 = vmatprep.subr.mxu0 0.0
    %956 = vmatpush2.msra.mxu0 0.0
    %957 = vmatprep.subr.mxu0 0.0
    %958 = vmatpush2.msra.mxu0 0.0
    %959 = vmatprep.subr.mxu0 0.0
    %960 = vmatpush2.msra.mxu0 0.0
    %961 = vmatprep.subr.mxu0 0.0
    %962 = vmatpush2.msra.mxu0 0.0
    %963 = vmatprep.subr.mxu0 0.0
    %964 = vmatpush2.msra.mxu0 0.0
    %965 = vmatprep.mubr.f32.mxu0 0.0
    %v966 = vand.u32 %v883, 4294901760
    %v967 = vsub.f32 %v883, %v966
    %v968 = vand.u32 %v967, 4294901760
    %v969 = vsub.f32 %v967, %v968
    %v970 = vand.u32 %v969, 4294901760
    %971 = vmatmul.mubr.f32.gmra.mxu0 %v970
    %v972 = vpop.f32.mrf.mxu0
    %v973 = vadd.f32 0.0, %v972
    %v974 = vpop.f32.mrf.mxu0
    %975 = vdwg.mxu0
    %976 = vmatprep.subr.mxu0 0.0
    %v977 = vand.u32 %v882, 4294901760
    %v978 = vsub.f32 %v882, %v977
    %v979 = vand.u32 %v978, 4294901760
    %v980 = vsub.f32 %v978, %v979
    %v981 = vand.u32 %v980, 4294901760
    %982 = vmatpush1.msra.mxu0 %v981
    %983 = vmatprep.subr.mxu0 0.0
    %v984 = vand.u32 %v881, 4294901760
    %v985 = vsub.f32 %v881, %v984
    %v986 = vand.u32 %v985, 4294901760
    %v987 = vsub.f32 %v985, %v986
    %v988 = vand.u32 %v987, 4294901760
    %989 = vmatpush1.msra.mxu0 %v988
    %990 = vmatprep.subr.mxu0 0.0
    %v991 = vand.u32 %v880, 4294901760
    %v992 = vsub.f32 %v880, %v991
    %v993 = vand.u32 %v992, 4294901760
    %v994 = vsub.f32 %v992, %v993
    %v995 = vand.u32 %v994, 4294901760
    %996 = vmatpush1.msra.mxu0 %v995
    %997 = vmatprep.subr.mxu0 0.0
    %v998 = vand.u32 %v879, 4294901760
    %v999 = vsub.f32 %v879, %v998
    %v1000 = vand.u32 %v999, 4294901760
    %v1001 = vsub.f32 %v999, %v1000
    %v1002 = vand.u32 %v1001, 4294901760
    %1003 = vmatpush1.msra.mxu0 %v1002
    %1004 = vmatprep.subr.mxu0 0.0
    %v1005 = vand.u32 %v878, 4294901760
    %v1006 = vsub.f32 %v878, %v1005
    %v1007 = vand.u32 %v1006, 4294901760
    %v1008 = vsub.f32 %v1006, %v1007
    %v1009 = vand.u32 %v1008, 4294901760
    %1010 = vmatpush1.msra.mxu0 %v1009
    %1011 = vmatprep.subr.mxu0 0.0
    %v1012 = vand.u32 %v877, 4294901760
    %v1013 = vsub.f32 %v877, %v1012
    %v1014 = vand.u32 %v1013, 4294901760
    %v1015 = vsub.f32 %v1013, %v1014
    %v1016 = vand.u32 %v1015, 4294901760
    %1017 = vmatpush1.msra.mxu0 %v1016
    %1018 = vmatprep.subr.mxu0 0.0
    %v1019 = vand.u32 %v876, 4294901760
    %v1020 = vsub.f32 %v876, %v1019
    %v1021 = vand.u32 %v1020, 4294901760
    %v1022 = vsub.f32 %v1020, %v1021
    %v1023 = vand.u32 %v1022, 4294901760
    %1024 = vmatpush1.msra.mxu0 %v1023
    %1025 = vmatprep.subr.mxu0 0.0
    %v1026 = vand.u32 %v875, 4294901760
    %v1027 = vsub.f32 %v875, %v1026
    %v1028 = vand.u32 %v1027, 4294901760
    %v1029 = vsub.f32 %v1027, %v1028
    %v1030 = vand.u32 %v1029, 4294901760
    %1031 = vmatpush1.msra.mxu0 %v1030
    %1032 = vmatprep.subr.mxu0 0.0
    %v1033 = vand.u32 %v874, 4294901760
    %v1034 = vsub.f32 %v874, %v1033
    %v1035 = vand.u32 %v1034, 4294901760
    %v1036 = vsub.f32 %v1034, %v1035
    %v1037 = vand.u32 %v1036, 4294901760
    %1038 = vmatpush1.msra.mxu0 %v1037
    %1039 = vmatprep.subr.mxu0 0.0
    %v1040 = vand.u32 %v873, 4294901760
    %v1041 = vsub.f32 %v873, %v1040
    %v1042 = vand.u32 %v1041, 4294901760
    %v1043 = vsub.f32 %v1041, %v1042
    %v1044 = vand.u32 %v1043, 4294901760
    %1045 = vmatpush1.msra.mxu0 %v1044
    %1046 = vmatprep.subr.mxu0 0.0
    %v1047 = vand.u32 %v872, 4294901760
    %v1048 = vsub.f32 %v872, %v1047
    %v1049 = vand.u32 %v1048, 4294901760
    %v1050 = vsub.f32 %v1048, %v1049
    %v1051 = vand.u32 %v1050, 4294901760
    %1052 = vmatpush1.msra.mxu0 %v1051
    %1053 = vmatprep.subr.mxu0 0.0
    %v1054 = vand.u32 %v871, 4294901760
    %v1055 = vsub.f32 %v871, %v1054
    %v1056 = vand.u32 %v1055, 4294901760
    %v1057 = vsub.f32 %v1055, %v1056
    %v1058 = vand.u32 %v1057, 4294901760
    %1059 = vmatpush1.msra.mxu0 %v1058
    %1060 = vmatprep.subr.mxu0 0.0
    %v1061 = vand.u32 %v870, 4294901760
    %v1062 = vsub.f32 %v870, %v1061
    %v1063 = vand.u32 %v1062, 4294901760
    %v1064 = vsub.f32 %v1062, %v1063
    %v1065 = vand.u32 %v1064, 4294901760
    %1066 = vmatpush1.msra.mxu0 %v1065
    %1067 = vmatprep.subr.mxu0 0.0
    %v1068 = vand.u32 %v869, 4294901760
    %v1069 = vsub.f32 %v869, %v1068
    %v1070 = vand.u32 %v1069, 4294901760
    %v1071 = vsub.f32 %v1069, %v1070
    %v1072 = vand.u32 %v1071, 4294901760
    %1073 = vmatpush1.msra.mxu0 %v1072
    %1074 = vmatprep.subr.mxu0 0.0
    %v1075 = vand.u32 %v868, 4294901760
    %v1076 = vsub.f32 %v868, %v1075
    %v1077 = vand.u32 %v1076, 4294901760
    %v1078 = vsub.f32 %v1076, %v1077
    %v1079 = vand.u32 %v1078, 4294901760
    %1080 = vmatpush1.msra.mxu0 %v1079
    %1081 = vmatprep.subr.mxu0 0.0
    %v1082 = vand.u32 %v867, 4294901760
    %v1083 = vsub.f32 %v867, %v1082
    %v1084 = vand.u32 %v1083, 4294901760
    %v1085 = vsub.f32 %v1083, %v1084
    %v1086 = vand.u32 %v1085, 4294901760
    %1087 = vmatpush1.msra.mxu0 %v1086
    %1088 = vmatprep.subr.mxu0 0.0
    %1089 = vmatpush2.msra.mxu0 0.0
    %1090 = vmatprep.subr.mxu0 0.0
    %1091 = vmatpush2.msra.mxu0 0.0
    %1092 = vmatprep.subr.mxu0 0.0
    %1093 = vmatpush2.msra.mxu0 0.0
    %1094 = vmatprep.subr.mxu0 0.0
    %1095 = vmatpush2.msra.mxu0 0.0
    %1096 = vmatprep.subr.mxu0 0.0
    %1097 = vmatpush2.msra.mxu0 0.0
    %1098 = vmatprep.subr.mxu0 0.0
    %1099 = vmatpush2.msra.mxu0 0.0
    %1100 = vmatprep.subr.mxu0 0.0
    %1101 = vmatpush2.msra.mxu0 0.0
    %1102 = vmatprep.subr.mxu0 0.0
    %1103 = vmatpush2.msra.mxu0 0.0
    %1104 = vmatprep.subr.mxu0 0.0
    %1105 = vmatpush2.msra.mxu0 0.0
    %1106 = vmatprep.subr.mxu0 0.0
    %1107 = vmatpush2.msra.mxu0 0.0
    %1108 = vmatprep.subr.mxu0 0.0
    %1109 = vmatpush2.msra.mxu0 0.0
    %1110 = vmatprep.subr.mxu0 0.0
    %1111 = vmatpush2.msra.mxu0 0.0
    %1112 = vmatprep.subr.mxu0 0.0
    %1113 = vmatpush2.msra.mxu0 0.0
    %1114 = vmatprep.subr.mxu0 0.0
    %1115 = vmatpush2.msra.mxu0 0.0
    %1116 = vmatprep.subr.mxu0 0.0
    %1117 = vmatpush2.msra.mxu0 0.0
    %1118 = vmatprep.subr.mxu0 0.0
    %1119 = vmatpush2.msra.mxu0 0.0
    %1120 = vmatprep.mubr.f32.mxu0 0.0
    %v1121 = vand.u32 %v883, 4294901760
    %1122 = vmatmul.mubr.f32.gmra.mxu0 %v1121
    %v1123 = vpop.f32.mrf.mxu0
    %v1124 = vadd.f32 %v973, %v1123
    %v1125 = vpop.f32.mrf.mxu0
    %1126 = vdwg.mxu0
    %1127 = vmatprep.subr.mxu0 0.0
    %v1128 = vand.u32 %v882, 4294901760
    %v1129 = vsub.f32 %v882, %v1128
    %1130 = vmatpush1.msra.mxu0 %v1129
    %1131 = vmatprep.subr.mxu0 0.0
    %v1132 = vand.u32 %v881, 4294901760
    %v1133 = vsub.f32 %v881, %v1132
    %1134 = vmatpush1.msra.mxu0 %v1133
    %1135 = vmatprep.subr.mxu0 0.0
    %v1136 = vand.u32 %v880, 4294901760
    %v1137 = vsub.f32 %v880, %v1136
    %1138 = vmatpush1.msra.mxu0 %v1137
    %1139 = vmatprep.subr.mxu0 0.0
    %v1140 = vand.u32 %v879, 4294901760
    %v1141 = vsub.f32 %v879, %v1140
    %1142 = vmatpush1.msra.mxu0 %v1141
    %1143 = vmatprep.subr.mxu0 0.0
    %v1144 = vand.u32 %v878, 4294901760
    %v1145 = vsub.f32 %v878, %v1144
    %1146 = vmatpush1.msra.mxu0 %v1145
    %1147 = vmatprep.subr.mxu0 0.0
    %v1148 = vand.u32 %v877, 4294901760
    %v1149 = vsub.f32 %v877, %v1148
    %1150 = vmatpush1.msra.mxu0 %v1149
    %1151 = vmatprep.subr.mxu0 0.0
    %v1152 = vand.u32 %v876, 4294901760
    %v1153 = vsub.f32 %v876, %v1152
    %1154 = vmatpush1.msra.mxu0 %v1153
    %1155 = vmatprep.subr.mxu0 0.0
    %v1156 = vand.u32 %v875, 4294901760
    %v1157 = vsub.f32 %v875, %v1156
    %1158 = vmatpush1.msra.mxu0 %v1157
    %1159 = vmatprep.subr.mxu0 0.0
    %v1160 = vand.u32 %v874, 4294901760
    %v1161 = vsub.f32 %v874, %v1160
    %1162 = vmatpush1.msra.mxu0 %v1161
    %1163 = vmatprep.subr.mxu0 0.0
    %v1164 = vand.u32 %v873, 4294901760
    %v1165 = vsub.f32 %v873, %v1164
    %1166 = vmatpush1.msra.mxu0 %v1165
    %1167 = vmatprep.subr.mxu0 0.0
    %v1168 = vand.u32 %v872, 4294901760
    %v1169 = vsub.f32 %v872, %v1168
    %1170 = vmatpush1.msra.mxu0 %v1169
    %1171 = vmatprep.subr.mxu0 0.0
    %v1172 = vand.u32 %v871, 4294901760
    %v1173 = vsub.f32 %v871, %v1172
    %1174 = vmatpush1.msra.mxu0 %v1173
    %1175 = vmatprep.subr.mxu0 0.0
    %v1176 = vand.u32 %v870, 4294901760
    %v1177 = vsub.f32 %v870, %v1176
    %1178 = vmatpush1.msra.mxu0 %v1177
    %1179 = vmatprep.subr.mxu0 0.0
    %v1180 = vand.u32 %v869, 4294901760
    %v1181 = vsub.f32 %v869, %v1180
    %1182 = vmatpush1.msra.mxu0 %v1181
    %1183 = vmatprep.subr.mxu0 0.0
    %v1184 = vand.u32 %v868, 4294901760
    %v1185 = vsub.f32 %v868, %v1184
    %1186 = vmatpush1.msra.mxu0 %v1185
    %1187 = vmatprep.subr.mxu0 0.0
    %v1188 = vand.u32 %v867, 4294901760
    %v1189 = vsub.f32 %v867, %v1188
    %1190 = vmatpush1.msra.mxu0 %v1189
    %1191 = vmatprep.subr.mxu0 0.0
    %1192 = vmatpush2.msra.mxu0 0.0
    %1193 = vmatprep.subr.mxu0 0.0
    %1194 = vmatpush2.msra.mxu0 0.0
    %1195 = vmatprep.subr.mxu0 0.0
    %1196 = vmatpush2.msra.mxu0 0.0
    %1197 = vmatprep.subr.mxu0 0.0
    %1198 = vmatpush2.msra.mxu0 0.0
    %1199 = vmatprep.subr.mxu0 0.0
    %1200 = vmatpush2.msra.mxu0 0.0
    %1201 = vmatprep.subr.mxu0 0.0
    %1202 = vmatpush2.msra.mxu0 0.0
    %1203 = vmatprep.subr.mxu0 0.0
    %1204 = vmatpush2.msra.mxu0 0.0
    %1205 = vmatprep.subr.mxu0 0.0
    %1206 = vmatpush2.msra.mxu0 0.0
    %1207 = vmatprep.subr.mxu0 0.0
    %1208 = vmatpush2.msra.mxu0 0.0
    %1209 = vmatprep.subr.mxu0 0.0
    %1210 = vmatpush2.msra.mxu0 0.0
    %1211 = vmatprep.subr.mxu0 0.0
    %1212 = vmatpush2.msra.mxu0 0.0
    %1213 = vmatprep.subr.mxu0 0.0
    %1214 = vmatpush2.msra.mxu0 0.0
    %1215 = vmatprep.subr.mxu0 0.0
    %1216 = vmatpush2.msra.mxu0 0.0
    %1217 = vmatprep.subr.mxu0 0.0
    %1218 = vmatpush2.msra.mxu0 0.0
    %1219 = vmatprep.subr.mxu0 0.0
    %1220 = vmatpush2.msra.mxu0 0.0
    %1221 = vmatprep.subr.mxu0 0.0
    %1222 = vmatpush2.msra.mxu0 0.0
    %1223 = vmatprep.mubr.f32.mxu0 0.0
    %v1224 = vand.u32 %v883, 4294901760
    %v1225 = vsub.f32 %v883, %v1224
    %1226 = vmatmul.mubr.f32.gmra.mxu0 %v1225
    %v1227 = vpop.f32.mrf.mxu0
    %v1228 = vadd.f32 %v1124, %v1227
    %v1229 = vpop.f32.mrf.mxu0
    %1230 = vdwg.mxu0
    %1231 = vmatprep.subr.mxu0 0.0
    %v1232 = vand.u32 %v882, 4294901760
    %1233 = vmatpush1.msra.mxu0 %v1232
    %1234 = vmatprep.subr.mxu0 0.0
    %v1235 = vand.u32 %v881, 4294901760
    %1236 = vmatpush1.msra.mxu0 %v1235
    %1237 = vmatprep.subr.mxu0 0.0
    %v1238 = vand.u32 %v880, 4294901760
    %1239 = vmatpush1.msra.mxu0 %v1238
    %1240 = vmatprep.subr.mxu0 0.0
    %v1241 = vand.u32 %v879, 4294901760
    %1242 = vmatpush1.msra.mxu0 %v1241
    %1243 = vmatprep.subr.mxu0 0.0
    %v1244 = vand.u32 %v878, 4294901760
    %1245 = vmatpush1.msra.mxu0 %v1244
    %1246 = vmatprep.subr.mxu0 0.0
    %v1247 = vand.u32 %v877, 4294901760
    %1248 = vmatpush1.msra.mxu0 %v1247
    %1249 = vmatprep.subr.mxu0 0.0
    %v1250 = vand.u32 %v876, 4294901760
    %1251 = vmatpush1.msra.mxu0 %v1250
    %1252 = vmatprep.subr.mxu0 0.0
    %v1253 = vand.u32 %v875, 4294901760
    %1254 = vmatpush1.msra.mxu0 %v1253
    %1255 = vmatprep.subr.mxu0 0.0
    %v1256 = vand.u32 %v874, 4294901760
    %1257 = vmatpush1.msra.mxu0 %v1256
    %1258 = vmatprep.subr.mxu0 0.0
    %v1259 = vand.u32 %v873, 4294901760
    %1260 = vmatpush1.msra.mxu0 %v1259
    %1261 = vmatprep.subr.mxu0 0.0
    %v1262 = vand.u32 %v872, 4294901760
    %1263 = vmatpush1.msra.mxu0 %v1262
    %1264 = vmatprep.subr.mxu0 0.0
    %v1265 = vand.u32 %v871, 4294901760
    %1266 = vmatpush1.msra.mxu0 %v1265
    %1267 = vmatprep.subr.mxu0 0.0
    %v1268 = vand.u32 %v870, 4294901760
    %1269 = vmatpush1.msra.mxu0 %v1268
    %1270 = vmatprep.subr.mxu0 0.0
    %v1271 = vand.u32 %v869, 4294901760
    %1272 = vmatpush1.msra.mxu0 %v1271
    %1273 = vmatprep.subr.mxu0 0.0
    %v1274 = vand.u32 %v868, 4294901760
    %1275 = vmatpush1.msra.mxu0 %v1274
    %1276 = vmatprep.subr.mxu0 0.0
    %v1277 = vand.u32 %v867, 4294901760
    %1278 = vmatpush1.msra.mxu0 %v1277
    %1279 = vmatprep.subr.mxu0 0.0
    %1280 = vmatpush2.msra.mxu0 0.0
    %1281 = vmatprep.subr.mxu0 0.0
    %1282 = vmatpush2.msra.mxu0 0.0
    %1283 = vmatprep.subr.mxu0 0.0
    %1284 = vmatpush2.msra.mxu0 0.0
    %1285 = vmatprep.subr.mxu0 0.0
    %1286 = vmatpush2.msra.mxu0 0.0
    %1287 = vmatprep.subr.mxu0 0.0
    %1288 = vmatpush2.msra.mxu0 0.0
    %1289 = vmatprep.subr.mxu0 0.0
    %1290 = vmatpush2.msra.mxu0 0.0
    %1291 = vmatprep.subr.mxu0 0.0
    %1292 = vmatpush2.msra.mxu0 0.0
    %1293 = vmatprep.subr.mxu0 0.0
    %1294 = vmatpush2.msra.mxu0 0.0
    %1295 = vmatprep.subr.mxu0 0.0
    %1296 = vmatpush2.msra.mxu0 0.0
    %1297 = vmatprep.subr.mxu0 0.0
    %1298 = vmatpush2.msra.mxu0 0.0
    %1299 = vmatprep.subr.mxu0 0.0
    %1300 = vmatpush2.msra.mxu0 0.0
    %1301 = vmatprep.subr.mxu0 0.0
    %1302 = vmatpush2.msra.mxu0 0.0
    %1303 = vmatprep.subr.mxu0 0.0
    %1304 = vmatpush2.msra.mxu0 0.0
    %1305 = vmatprep.subr.mxu0 0.0
    %1306 = vmatpush2.msra.mxu0 0.0
    %1307 = vmatprep.subr.mxu0 0.0
    %1308 = vmatpush2.msra.mxu0 0.0
    %1309 = vmatprep.subr.mxu0 0.0
    %1310 = vmatpush2.msra.mxu0 0.0
    %1311 = vmatprep.mubr.f32.mxu0 0.0
    %v1312 = vand.u32 %v883, 4294901760
    %v1313 = vsub.f32 %v883, %v1312
    %v1314 = vand.u32 %v1313, 4294901760
    %1315 = vmatmul.mubr.f32.gmra.mxu0 %v1314
    %v1316 = vpop.f32.mrf.mxu0
    %v1317 = vadd.f32 %v1228, %v1316
    %v1318 = vpop.f32.mrf.mxu0
    %1319 = vdwg.mxu0
    %1320 = vmatprep.subr.mxu0 0.0
    %v1321 = vand.u32 %v882, 4294901760
    %v1322 = vsub.f32 %v882, %v1321
    %v1323 = vand.u32 %v1322, 4294901760
    %1324 = vmatpush1.msra.mxu0 %v1323
    %1325 = vmatprep.subr.mxu0 0.0
    %v1326 = vand.u32 %v881, 4294901760
    %v1327 = vsub.f32 %v881, %v1326
    %v1328 = vand.u32 %v1327, 4294901760
    %1329 = vmatpush1.msra.mxu0 %v1328
    %1330 = vmatprep.subr.mxu0 0.0
    %v1331 = vand.u32 %v880, 4294901760
    %v1332 = vsub.f32 %v880, %v1331
    %v1333 = vand.u32 %v1332, 4294901760
    %1334 = vmatpush1.msra.mxu0 %v1333
    %1335 = vmatprep.subr.mxu0 0.0
    %v1336 = vand.u32 %v879, 4294901760
    %v1337 = vsub.f32 %v879, %v1336
    %v1338 = vand.u32 %v1337, 4294901760
    %1339 = vmatpush1.msra.mxu0 %v1338
    %1340 = vmatprep.subr.mxu0 0.0
    %v1341 = vand.u32 %v878, 4294901760
    %v1342 = vsub.f32 %v878, %v1341
    %v1343 = vand.u32 %v1342, 4294901760
    %1344 = vmatpush1.msra.mxu0 %v1343
    %1345 = vmatprep.subr.mxu0 0.0
    %v1346 = vand.u32 %v877, 4294901760
    %v1347 = vsub.f32 %v877, %v1346
    %v1348 = vand.u32 %v1347, 4294901760
    %1349 = vmatpush1.msra.mxu0 %v1348
    %1350 = vmatprep.subr.mxu0 0.0
    %v1351 = vand.u32 %v876, 4294901760
    %v1352 = vsub.f32 %v876, %v1351
    %v1353 = vand.u32 %v1352, 4294901760
    %1354 = vmatpush1.msra.mxu0 %v1353
    %1355 = vmatprep.subr.mxu0 0.0
    %v1356 = vand.u32 %v875, 4294901760
    %v1357 = vsub.f32 %v875, %v1356
    %v1358 = vand.u32 %v1357, 4294901760
    %1359 = vmatpush1.msra.mxu0 %v1358
    %1360 = vmatprep.subr.mxu0 0.0
    %v1361 = vand.u32 %v874, 4294901760
    %v1362 = vsub.f32 %v874, %v1361
    %v1363 = vand.u32 %v1362, 4294901760
    %1364 = vmatpush1.msra.mxu0 %v1363
    %1365 = vmatprep.subr.mxu0 0.0
    %v1366 = vand.u32 %v873, 4294901760
    %v1367 = vsub.f32 %v873, %v1366
    %v1368 = vand.u32 %v1367, 4294901760
    %1369 = vmatpush1.msra.mxu0 %v1368
    %1370 = vmatprep.subr.mxu0 0.0
    %v1371 = vand.u32 %v872, 4294901760
    %v1372 = vsub.f32 %v872, %v1371
    %v1373 = vand.u32 %v1372, 4294901760
    %1374 = vmatpush1.msra.mxu0 %v1373
    %1375 = vmatprep.subr.mxu0 0.0
    %v1376 = vand.u32 %v871, 4294901760
    %v1377 = vsub.f32 %v871, %v1376
    %v1378 = vand.u32 %v1377, 4294901760
    %1379 = vmatpush1.msra.mxu0 %v1378
    %1380 = vmatprep.subr.mxu0 0.0
    %v1381 = vand.u32 %v870, 4294901760
    %v1382 = vsub.f32 %v870, %v1381
    %v1383 = vand.u32 %v1382, 4294901760
    %1384 = vmatpush1.msra.mxu0 %v1383
    %1385 = vmatprep.subr.mxu0 0.0
    %v1386 = vand.u32 %v869, 4294901760
    %v1387 = vsub.f32 %v869, %v1386
    %v1388 = vand.u32 %v1387, 4294901760
    %1389 = vmatpush1.msra.mxu0 %v1388
    %1390 = vmatprep.subr.mxu0 0.0
    %v1391 = vand.u32 %v868, 4294901760
    %v1392 = vsub.f32 %v868, %v1391
    %v1393 = vand.u32 %v1392, 4294901760
    %1394 = vmatpush1.msra.mxu0 %v1393
    %1395 = vmatprep.subr.mxu0 0.0
    %v1396 = vand.u32 %v867, 4294901760
    %v1397 = vsub.f32 %v867, %v1396
    %v1398 = vand.u32 %v1397, 4294901760
    %1399 = vmatpush1.msra.mxu0 %v1398
    %1400 = vmatprep.subr.mxu0 0.0
    %1401 = vmatpush2.msra.mxu0 0.0
    %1402 = vmatprep.subr.mxu0 0.0
    %1403 = vmatpush2.msra.mxu0 0.0
    %1404 = vmatprep.subr.mxu0 0.0
    %1405 = vmatpush2.msra.mxu0 0.0
    %1406 = vmatprep.subr.mxu0 0.0
    %1407 = vmatpush2.msra.mxu0 0.0
    %1408 = vmatprep.subr.mxu0 0.0
    %1409 = vmatpush2.msra.mxu0 0.0
    %1410 = vmatprep.subr.mxu0 0.0
    %1411 = vmatpush2.msra.mxu0 0.0
    %1412 = vmatprep.subr.mxu0 0.0
    %1413 = vmatpush2.msra.mxu0 0.0
    %1414 = vmatprep.subr.mxu0 0.0
    %1415 = vmatpush2.msra.mxu0 0.0
    %1416 = vmatprep.subr.mxu0 0.0
    %1417 = vmatpush2.msra.mxu0 0.0
    %1418 = vmatprep.subr.mxu0 0.0
    %1419 = vmatpush2.msra.mxu0 0.0
    %1420 = vmatprep.subr.mxu0 0.0
    %1421 = vmatpush2.msra.mxu0 0.0
    %1422 = vmatprep.subr.mxu0 0.0
    %1423 = vmatpush2.msra.mxu0 0.0
    %1424 = vmatprep.subr.mxu0 0.0
    %1425 = vmatpush2.msra.mxu0 0.0
    %1426 = vmatprep.subr.mxu0 0.0
    %1427 = vmatpush2.msra.mxu0 0.0
    %1428 = vmatprep.subr.mxu0 0.0
    %1429 = vmatpush2.msra.mxu0 0.0
    %1430 = vmatprep.subr.mxu0 0.0
    %1431 = vmatpush2.msra.mxu0 0.0
    %1432 = vmatprep.mubr.f32.mxu0 0.0
    %v1433 = vand.u32 %v883, 4294901760
    %1434 = vmatmul.mubr.f32.gmra.mxu0 %v1433
    %v1435 = vpop.f32.mrf.mxu0
    %v1436 = vadd.f32 %v1317, %v1435
    %v1437 = vpop.f32.mrf.mxu0
    %1438 = vdwg.mxu0
    %1439 = vmatprep.subr.mxu0 0.0
    %v1440 = vand.u32 %v882, 4294901760
    %1441 = vmatpush1.msra.mxu0 %v1440
    %1442 = vmatprep.subr.mxu0 0.0
    %v1443 = vand.u32 %v881, 4294901760
    %1444 = vmatpush1.msra.mxu0 %v1443
    %1445 = vmatprep.subr.mxu0 0.0
    %v1446 = vand.u32 %v880, 4294901760
    %1447 = vmatpush1.msra.mxu0 %v1446
    %1448 = vmatprep.subr.mxu0 0.0
    %v1449 = vand.u32 %v879, 4294901760
    %1450 = vmatpush1.msra.mxu0 %v1449
    %1451 = vmatprep.subr.mxu0 0.0
    %v1452 = vand.u32 %v878, 4294901760
    %1453 = vmatpush1.msra.mxu0 %v1452
    %1454 = vmatprep.subr.mxu0 0.0
    %v1455 = vand.u32 %v877, 4294901760
    %1456 = vmatpush1.msra.mxu0 %v1455
    %1457 = vmatprep.subr.mxu0 0.0
    %v1458 = vand.u32 %v876, 4294901760
    %1459 = vmatpush1.msra.mxu0 %v1458
    %1460 = vmatprep.subr.mxu0 0.0
    %v1461 = vand.u32 %v875, 4294901760
    %1462 = vmatpush1.msra.mxu0 %v1461
    %1463 = vmatprep.subr.mxu0 0.0
    %v1464 = vand.u32 %v874, 4294901760
    %1465 = vmatpush1.msra.mxu0 %v1464
    %1466 = vmatprep.subr.mxu0 0.0
    %v1467 = vand.u32 %v873, 4294901760
    %1468 = vmatpush1.msra.mxu0 %v1467
    %1469 = vmatprep.subr.mxu0 0.0
    %v1470 = vand.u32 %v872, 4294901760
    %1471 = vmatpush1.msra.mxu0 %v1470
    %1472 = vmatprep.subr.mxu0 0.0
    %v1473 = vand.u32 %v871, 4294901760
    %1474 = vmatpush1.msra.mxu0 %v1473
    %1475 = vmatprep.subr.mxu0 0.0
    %v1476 = vand.u32 %v870, 4294901760
    %1477 = vmatpush1.msra.mxu0 %v1476
    %1478 = vmatprep.subr.mxu0 0.0
    %v1479 = vand.u32 %v869, 4294901760
    %1480 = vmatpush1.msra.mxu0 %v1479
    %1481 = vmatprep.subr.mxu0 0.0
    %v1482 = vand.u32 %v868, 4294901760
    %1483 = vmatpush1.msra.mxu0 %v1482
    %1484 = vmatprep.subr.mxu0 0.0
    %v1485 = vand.u32 %v867, 4294901760
    %1486 = vmatpush1.msra.mxu0 %v1485
    %1487 = vmatprep.subr.mxu0 0.0
    %1488 = vmatpush2.msra.mxu0 0.0
    %1489 = vmatprep.subr.mxu0 0.0
    %1490 = vmatpush2.msra.mxu0 0.0
    %1491 = vmatprep.subr.mxu0 0.0
    %1492 = vmatpush2.msra.mxu0 0.0
    %1493 = vmatprep.subr.mxu0 0.0
    %1494 = vmatpush2.msra.mxu0 0.0
    %1495 = vmatprep.subr.mxu0 0.0
    %1496 = vmatpush2.msra.mxu0 0.0
    %1497 = vmatprep.subr.mxu0 0.0
    %1498 = vmatpush2.msra.mxu0 0.0
    %1499 = vmatprep.subr.mxu0 0.0
    %1500 = vmatpush2.msra.mxu0 0.0
    %1501 = vmatprep.subr.mxu0 0.0
    %1502 = vmatpush2.msra.mxu0 0.0
    %1503 = vmatprep.subr.mxu0 0.0
    %1504 = vmatpush2.msra.mxu0 0.0
    %1505 = vmatprep.subr.mxu0 0.0
    %1506 = vmatpush2.msra.mxu0 0.0
    %1507 = vmatprep.subr.mxu0 0.0
    %1508 = vmatpush2.msra.mxu0 0.0
    %1509 = vmatprep.subr.mxu0 0.0
    %1510 = vmatpush2.msra.mxu0 0.0
    %1511 = vmatprep.subr.mxu0 0.0
    %1512 = vmatpush2.msra.mxu0 0.0
    %1513 = vmatprep.subr.mxu0 0.0
    %1514 = vmatpush2.msra.mxu0 0.0
    %1515 = vmatprep.subr.mxu0 0.0
    %1516 = vmatpush2.msra.mxu0 0.0
    %1517 = vmatprep.subr.mxu0 0.0
    %1518 = vmatpush2.msra.mxu0 0.0
    %1519 = vmatprep.mubr.f32.mxu0 0.0
    %v1520 = vand.u32 %v883, 4294901760
    %1521 = vmatmul.mubr.f32.gmra.mxu0 %v1520
    %v1522 = vpop.f32.mrf.mxu0
    %v1523 = vadd.f32 %v1436, %v1522
    %v1524 = vpop.f32.mrf.mxu0
    %1525 = vdwg.mxu0
    %v1526 = vadd.f32 %v884, %v1523
    %v1527 = vtanh.pop %v1526
    %v1528 = vld [vmem:[#allocation3 + $0x8] sm:$0xff]
    %1529 = vmatprep.subr.mxu0 0.0
    %v1530 = vand.u32 %v882, 4294901760
    %1531 = vmatpush1.msra.mxu0 %v1530
    %1532 = vmatprep.subr.mxu0 0.0
    %v1533 = vand.u32 %v881, 4294901760
    %1534 = vmatpush1.msra.mxu0 %v1533
    %1535 = vmatprep.subr.mxu0 0.0
    %v1536 = vand.u32 %v880, 4294901760
    %1537 = vmatpush1.msra.mxu0 %v1536
    %1538 = vmatprep.subr.mxu0 0.0
    %v1539 = vand.u32 %v879, 4294901760
    %1540 = vmatpush1.msra.mxu0 %v1539
    %1541 = vmatprep.subr.mxu0 0.0
    %v1542 = vand.u32 %v878, 4294901760
    %1543 = vmatpush1.msra.mxu0 %v1542
    %1544 = vmatprep.subr.mxu0 0.0
    %v1545 = vand.u32 %v877, 4294901760
    %1546 = vmatpush1.msra.mxu0 %v1545
    %1547 = vmatprep.subr.mxu0 0.0
    %v1548 = vand.u32 %v876, 4294901760
    %1549 = vmatpush1.msra.mxu0 %v1548
    %1550 = vmatprep.subr.mxu0 0.0
    %v1551 = vand.u32 %v875, 4294901760
    %1552 = vmatpush1.msra.mxu0 %v1551
    %1553 = vmatprep.subr.mxu0 0.0
    %v1554 = vand.u32 %v874, 4294901760
    %1555 = vmatpush1.msra.mxu0 %v1554
    %1556 = vmatprep.subr.mxu0 0.0
    %v1557 = vand.u32 %v873, 4294901760
    %1558 = vmatpush1.msra.mxu0 %v1557
    %1559 = vmatprep.subr.mxu0 0.0
    %v1560 = vand.u32 %v872, 4294901760
    %1561 = vmatpush1.msra.mxu0 %v1560
    %1562 = vmatprep.subr.mxu0 0.0
    %v1563 = vand.u32 %v871, 4294901760
    %1564 = vmatpush1.msra.mxu0 %v1563
    %1565 = vmatprep.subr.mxu0 0.0
    %v1566 = vand.u32 %v870, 4294901760
    %1567 = vmatpush1.msra.mxu0 %v1566
    %1568 = vmatprep.subr.mxu0 0.0
    %v1569 = vand.u32 %v869, 4294901760
    %1570 = vmatpush1.msra.mxu0 %v1569
    %1571 = vmatprep.subr.mxu0 0.0
    %v1572 = vand.u32 %v868, 4294901760
    %1573 = vmatpush1.msra.mxu0 %v1572
    %1574 = vmatprep.subr.mxu0 0.0
    %v1575 = vand.u32 %v867, 4294901760
    %1576 = vmatpush1.msra.mxu0 %v1575
    %1577 = vmatprep.subr.mxu0 0.0
    %1578 = vmatpush2.msra.mxu0 0.0
    %1579 = vmatprep.subr.mxu0 0.0
    %1580 = vmatpush2.msra.mxu0 0.0
    %1581 = vmatprep.subr.mxu0 0.0
    %1582 = vmatpush2.msra.mxu0 0.0
    %1583 = vmatprep.subr.mxu0 0.0
    %1584 = vmatpush2.msra.mxu0 0.0
    %1585 = vmatprep.subr.mxu0 0.0
    %1586 = vmatpush2.msra.mxu0 0.0
    %1587 = vmatprep.subr.mxu0 0.0
    %1588 = vmatpush2.msra.mxu0 0.0
    %1589 = vmatprep.subr.mxu0 0.0
    %1590 = vmatpush2.msra.mxu0 0.0
    %1591 = vmatprep.subr.mxu0 0.0
    %1592 = vmatpush2.msra.mxu0 0.0
    %1593 = vmatprep.subr.mxu0 0.0
    %1594 = vmatpush2.msra.mxu0 0.0
    %1595 = vmatprep.subr.mxu0 0.0
    %1596 = vmatpush2.msra.mxu0 0.0
    %1597 = vmatprep.subr.mxu0 0.0
    %1598 = vmatpush2.msra.mxu0 0.0
    %1599 = vmatprep.subr.mxu0 0.0
    %1600 = vmatpush2.msra.mxu0 0.0
    %1601 = vmatprep.subr.mxu0 0.0
    %1602 = vmatpush2.msra.mxu0 0.0
    %1603 = vmatprep.subr.mxu0 0.0
    %1604 = vmatpush2.msra.mxu0 0.0
    %1605 = vmatprep.subr.mxu0 0.0
    %1606 = vmatpush2.msra.mxu0 0.0
    %1607 = vmatprep.subr.mxu0 0.0
    %1608 = vmatpush2.msra.mxu0 0.0
    %1609 = vmatprep.mubr.f32.mxu0 0.0
    %v1610 = vand.u32 %v1527, 4294901760
    %v1611 = vsub.f32 %v1527, %v1610
    %v1612 = vand.u32 %v1611, 4294901760
    %v1613 = vsub.f32 %v1611, %v1612
    %v1614 = vand.u32 %v1613, 4294901760
    %1615 = vmatmul.mubr.f32.gmra.mxu0 %v1614
    %v1616 = vpop.f32.mrf.mxu0
    %v1617 = vadd.f32 0.0, %v1616
    %v1618 = vpop.f32.mrf.mxu0
    %1619 = vdwg.mxu0
    %1620 = vmatprep.subr.mxu0 0.0
    %v1621 = vand.u32 %v882, 4294901760
    %v1622 = vsub.f32 %v882, %v1621
    %v1623 = vand.u32 %v1622, 4294901760
    %v1624 = vsub.f32 %v1622, %v1623
    %v1625 = vand.u32 %v1624, 4294901760
    %1626 = vmatpush1.msra.mxu0 %v1625
    %1627 = vmatprep.subr.mxu0 0.0
    %v1628 = vand.u32 %v881, 4294901760
    %v1629 = vsub.f32 %v881, %v1628
    %v1630 = vand.u32 %v1629, 4294901760
    %v1631 = vsub.f32 %v1629, %v1630
    %v1632 = vand.u32 %v1631, 4294901760
    %1633 = vmatpush1.msra.mxu0 %v1632
    %1634 = vmatprep.subr.mxu0 0.0
    %v1635 = vand.u32 %v880, 4294901760
    %v1636 = vsub.f32 %v880, %v1635
    %v1637 = vand.u32 %v1636, 4294901760
    %v1638 = vsub.f32 %v1636, %v1637
    %v1639 = vand.u32 %v1638, 4294901760
    %1640 = vmatpush1.msra.mxu0 %v1639
    %1641 = vmatprep.subr.mxu0 0.0
    %v1642 = vand.u32 %v879, 4294901760
    %v1643 = vsub.f32 %v879, %v1642
    %v1644 = vand.u32 %v1643, 4294901760
    %v1645 = vsub.f32 %v1643, %v1644
    %v1646 = vand.u32 %v1645, 4294901760
    %1647 = vmatpush1.msra.mxu0 %v1646
    %1648 = vmatprep.subr.mxu0 0.0
    %v1649 = vand.u32 %v878, 4294901760
    %v1650 = vsub.f32 %v878, %v1649
    %v1651 = vand.u32 %v1650, 4294901760
    %v1652 = vsub.f32 %v1650, %v1651
    %v1653 = vand.u32 %v1652, 4294901760
    %1654 = vmatpush1.msra.mxu0 %v1653
    %1655 = vmatprep.subr.mxu0 0.0
    %v1656 = vand.u32 %v877, 4294901760
    %v1657 = vsub.f32 %v877, %v1656
    %v1658 = vand.u32 %v1657, 4294901760
    %v1659 = vsub.f32 %v1657, %v1658
    %v1660 = vand.u32 %v1659, 4294901760
    %1661 = vmatpush1.msra.mxu0 %v1660
    %1662 = vmatprep.subr.mxu0 0.0
    %v1663 = vand.u32 %v876, 4294901760
    %v1664 = vsub.f32 %v876, %v1663
    %v1665 = vand.u32 %v1664, 4294901760
    %v1666 = vsub.f32 %v1664, %v1665
    %v1667 = vand.u32 %v1666, 4294901760
    %1668 = vmatpush1.msra.mxu0 %v1667
    %1669 = vmatprep.subr.mxu0 0.0
    %v1670 = vand.u32 %v875, 4294901760
    %v1671 = vsub.f32 %v875, %v1670
    %v1672 = vand.u32 %v1671, 4294901760
    %v1673 = vsub.f32 %v1671, %v1672
    %v1674 = vand.u32 %v1673, 4294901760
    %1675 = vmatpush1.msra.mxu0 %v1674
    %1676 = vmatprep.subr.mxu0 0.0
    %v1677 = vand.u32 %v874, 4294901760
    %v1678 = vsub.f32 %v874, %v1677
    %v1679 = vand.u32 %v1678, 4294901760
    %v1680 = vsub.f32 %v1678, %v1679
    %v1681 = vand.u32 %v1680, 4294901760
    %1682 = vmatpush1.msra.mxu0 %v1681
    %1683 = vmatprep.subr.mxu0 0.0
    %v1684 = vand.u32 %v873, 4294901760
    %v1685 = vsub.f32 %v873, %v1684
    %v1686 = vand.u32 %v1685, 4294901760
    %v1687 = vsub.f32 %v1685, %v1686
    %v1688 = vand.u32 %v1687, 4294901760
    %1689 = vmatpush1.msra.mxu0 %v1688
    %1690 = vmatprep.subr.mxu0 0.0
    %v1691 = vand.u32 %v872, 4294901760
    %v1692 = vsub.f32 %v872, %v1691
    %v1693 = vand.u32 %v1692, 4294901760
    %v1694 = vsub.f32 %v1692, %v1693
    %v1695 = vand.u32 %v1694, 4294901760
    %1696 = vmatpush1.msra.mxu0 %v1695
    %1697 = vmatprep.subr.mxu0 0.0
    %v1698 = vand.u32 %v871, 4294901760
    %v1699 = vsub.f32 %v871, %v1698
    %v1700 = vand.u32 %v1699, 4294901760
    %v1701 = vsub.f32 %v1699, %v1700
    %v1702 = vand.u32 %v1701, 4294901760
    %1703 = vmatpush1.msra.mxu0 %v1702
    %1704 = vmatprep.subr.mxu0 0.0
    %v1705 = vand.u32 %v870, 4294901760
    %v1706 = vsub.f32 %v870, %v1705
    %v1707 = vand.u32 %v1706, 4294901760
    %v1708 = vsub.f32 %v1706, %v1707
    %v1709 = vand.u32 %v1708, 4294901760
    %1710 = vmatpush1.msra.mxu0 %v1709
    %1711 = vmatprep.subr.mxu0 0.0
    %v1712 = vand.u32 %v869, 4294901760
    %v1713 = vsub.f32 %v869, %v1712
    %v1714 = vand.u32 %v1713, 4294901760
    %v1715 = vsub.f32 %v1713, %v1714
    %v1716 = vand.u32 %v1715, 4294901760
    %1717 = vmatpush1.msra.mxu0 %v1716
    %1718 = vmatprep.subr.mxu0 0.0
    %v1719 = vand.u32 %v868, 4294901760
    %v1720 = vsub.f32 %v868, %v1719
    %v1721 = vand.u32 %v1720, 4294901760
    %v1722 = vsub.f32 %v1720, %v1721
    %v1723 = vand.u32 %v1722, 4294901760
    %1724 = vmatpush1.msra.mxu0 %v1723
    %1725 = vmatprep.subr.mxu0 0.0
    %v1726 = vand.u32 %v867, 4294901760
    %v1727 = vsub.f32 %v867, %v1726
    %v1728 = vand.u32 %v1727, 4294901760
    %v1729 = vsub.f32 %v1727, %v1728
    %v1730 = vand.u32 %v1729, 4294901760
    %1731 = vmatpush1.msra.mxu0 %v1730
    %1732 = vmatprep.subr.mxu0 0.0
    %1733 = vmatpush2.msra.mxu0 0.0
    %1734 = vmatprep.subr.mxu0 0.0
    %1735 = vmatpush2.msra.mxu0 0.0
    %1736 = vmatprep.subr.mxu0 0.0
    %1737 = vmatpush2.msra.mxu0 0.0
    %1738 = vmatprep.subr.mxu0 0.0
    %1739 = vmatpush2.msra.mxu0 0.0
    %1740 = vmatprep.subr.mxu0 0.0
    %1741 = vmatpush2.msra.mxu0 0.0
    %1742 = vmatprep.subr.mxu0 0.0
    %1743 = vmatpush2.msra.mxu0 0.0
    %1744 = vmatprep.subr.mxu0 0.0
    %1745 = vmatpush2.msra.mxu0 0.0
    %1746 = vmatprep.subr.mxu0 0.0
    %1747 = vmatpush2.msra.mxu0 0.0
    %1748 = vmatprep.subr.mxu0 0.0
    %1749 = vmatpush2.msra.mxu0 0.0
    %1750 = vmatprep.subr.mxu0 0.0
    %1751 = vmatpush2.msra.mxu0 0.0
    %1752 = vmatprep.subr.mxu0 0.0
    %1753 = vmatpush2.msra.mxu0 0.0
    %1754 = vmatprep.subr.mxu0 0.0
    %1755 = vmatpush2.msra.mxu0 0.0
    %1756 = vmatprep.subr.mxu0 0.0
    %1757 = vmatpush2.msra.mxu0 0.0
    %1758 = vmatprep.subr.mxu0 0.0
    %1759 = vmatpush2.msra.mxu0 0.0
    %1760 = vmatprep.subr.mxu0 0.0
    %1761 = vmatpush2.msra.mxu0 0.0
    %1762 = vmatprep.subr.mxu0 0.0
    %1763 = vmatpush2.msra.mxu0 0.0
    %1764 = vmatprep.mubr.f32.mxu0 0.0
    %v1765 = vand.u32 %v1527, 4294901760
    %1766 = vmatmul.mubr.f32.gmra.mxu0 %v1765
    %v1767 = vpop.f32.mrf.mxu0
    %v1768 = vadd.f32 %v1617, %v1767
    %v1769 = vpop.f32.mrf.mxu0
    %1770 = vdwg.mxu0
    %1771 = vmatprep.subr.mxu0 0.0
    %v1772 = vand.u32 %v882, 4294901760
    %v1773 = vsub.f32 %v882, %v1772
    %1774 = vmatpush1.msra.mxu0 %v1773
    %1775 = vmatprep.subr.mxu0 0.0
    %v1776 = vand.u32 %v881, 4294901760
    %v1777 = vsub.f32 %v881, %v1776
    %1778 = vmatpush1.msra.mxu0 %v1777
    %1779 = vmatprep.subr.mxu0 0.0
    %v1780 = vand.u32 %v880, 4294901760
    %v1781 = vsub.f32 %v880, %v1780
    %1782 = vmatpush1.msra.mxu0 %v1781
    %1783 = vmatprep.subr.mxu0 0.0
    %v1784 = vand.u32 %v879, 4294901760
    %v1785 = vsub.f32 %v879, %v1784
    %1786 = vmatpush1.msra.mxu0 %v1785
    %1787 = vmatprep.subr.mxu0 0.0
    %v1788 = vand.u32 %v878, 4294901760
    %v1789 = vsub.f32 %v878, %v1788
    %1790 = vmatpush1.msra.mxu0 %v1789
    %1791 = vmatprep.subr.mxu0 0.0
    %v1792 = vand.u32 %v877, 4294901760
    %v1793 = vsub.f32 %v877, %v1792
    %1794 = vmatpush1.msra.mxu0 %v1793
    %1795 = vmatprep.subr.mxu0 0.0
    %v1796 = vand.u32 %v876, 4294901760
    %v1797 = vsub.f32 %v876, %v1796
    %1798 = vmatpush1.msra.mxu0 %v1797
    %1799 = vmatprep.subr.mxu0 0.0
    %v1800 = vand.u32 %v875, 4294901760
    %v1801 = vsub.f32 %v875, %v1800
    %1802 = vmatpush1.msra.mxu0 %v1801
    %1803 = vmatprep.subr.mxu0 0.0
    %v1804 = vand.u32 %v874, 4294901760
    %v1805 = vsub.f32 %v874, %v1804
    %1806 = vmatpush1.msra.mxu0 %v1805
    %1807 = vmatprep.subr.mxu0 0.0
    %v1808 = vand.u32 %v873, 4294901760
    %v1809 = vsub.f32 %v873, %v1808
    %1810 = vmatpush1.msra.mxu0 %v1809
    %1811 = vmatprep.subr.mxu0 0.0
    %v1812 = vand.u32 %v872, 4294901760
    %v1813 = vsub.f32 %v872, %v1812
    %1814 = vmatpush1.msra.mxu0 %v1813
    %1815 = vmatprep.subr.mxu0 0.0
    %v1816 = vand.u32 %v871, 4294901760
    %v1817 = vsub.f32 %v871, %v1816
    %1818 = vmatpush1.msra.mxu0 %v1817
    %1819 = vmatprep.subr.mxu0 0.0
    %v1820 = vand.u32 %v870, 4294901760
    %v1821 = vsub.f32 %v870, %v1820
    %1822 = vmatpush1.msra.mxu0 %v1821
    %1823 = vmatprep.subr.mxu0 0.0
    %v1824 = vand.u32 %v869, 4294901760
    %v1825 = vsub.f32 %v869, %v1824
    %1826 = vmatpush1.msra.mxu0 %v1825
    %1827 = vmatprep.subr.mxu0 0.0
    %v1828 = vand.u32 %v868, 4294901760
    %v1829 = vsub.f32 %v868, %v1828
    %1830 = vmatpush1.msra.mxu0 %v1829
    %1831 = vmatprep.subr.mxu0 0.0
    %v1832 = vand.u32 %v867, 4294901760
    %v1833 = vsub.f32 %v867, %v1832
    %1834 = vmatpush1.msra.mxu0 %v1833
    %1835 = vmatprep.subr.mxu0 0.0
    %1836 = vmatpush2.msra.mxu0 0.0
    %1837 = vmatprep.subr.mxu0 0.0
    %1838 = vmatpush2.msra.mxu0 0.0
    %1839 = vmatprep.subr.mxu0 0.0
    %1840 = vmatpush2.msra.mxu0 0.0
    %1841 = vmatprep.subr.mxu0 0.0
    %1842 = vmatpush2.msra.mxu0 0.0
    %1843 = vmatprep.subr.mxu0 0.0
    %1844 = vmatpush2.msra.mxu0 0.0
    %1845 = vmatprep.subr.mxu0 0.0
    %1846 = vmatpush2.msra.mxu0 0.0
    %1847 = vmatprep.subr.mxu0 0.0
    %1848 = vmatpush2.msra.mxu0 0.0
    %1849 = vmatprep.subr.mxu0 0.0
    %1850 = vmatpush2.msra.mxu0 0.0
    %1851 = vmatprep.subr.mxu0 0.0
    %1852 = vmatpush2.msra.mxu0 0.0
    %1853 = vmatprep.subr.mxu0 0.0
    %1854 = vmatpush2.msra.mxu0 0.0
    %1855 = vmatprep.subr.mxu0 0.0
    %1856 = vmatpush2.msra.mxu0 0.0
    %1857 = vmatprep.subr.mxu0 0.0
    %1858 = vmatpush2.msra.mxu0 0.0
    %1859 = vmatprep.subr.mxu0 0.0
    %1860 = vmatpush2.msra.mxu0 0.0
    %1861 = vmatprep.subr.mxu0 0.0
    %1862 = vmatpush2.msra.mxu0 0.0
    %1863 = vmatprep.subr.mxu0 0.0
    %1864 = vmatpush2.msra.mxu0 0.0
    %1865 = vmatprep.subr.mxu0 0.0
    %1866 = vmatpush2.msra.mxu0 0.0
    %1867 = vmatprep.mubr.f32.mxu0 0.0
    %v1868 = vand.u32 %v1527, 4294901760
    %v1869 = vsub.f32 %v1527, %v1868
    %1870 = vmatmul.mubr.f32.gmra.mxu0 %v1869
    %v1871 = vpop.f32.mrf.mxu0
    %v1872 = vadd.f32 %v1768, %v1871
    %v1873 = vpop.f32.mrf.mxu0
    %1874 = vdwg.mxu0
    %1875 = vmatprep.subr.mxu0 0.0
    %v1876 = vand.u32 %v882, 4294901760
    %1877 = vmatpush1.msra.mxu0 %v1876
    %1878 = vmatprep.subr.mxu0 0.0
    %v1879 = vand.u32 %v881, 4294901760
    %1880 = vmatpush1.msra.mxu0 %v1879
    %1881 = vmatprep.subr.mxu0 0.0
    %v1882 = vand.u32 %v880, 4294901760
    %1883 = vmatpush1.msra.mxu0 %v1882
    %1884 = vmatprep.subr.mxu0 0.0
    %v1885 = vand.u32 %v879, 4294901760
    %1886 = vmatpush1.msra.mxu0 %v1885
    %1887 = vmatprep.subr.mxu0 0.0
    %v1888 = vand.u32 %v878, 4294901760
    %1889 = vmatpush1.msra.mxu0 %v1888
    %1890 = vmatprep.subr.mxu0 0.0
    %v1891 = vand.u32 %v877, 4294901760
    %1892 = vmatpush1.msra.mxu0 %v1891
    %1893 = vmatprep.subr.mxu0 0.0
    %v1894 = vand.u32 %v876, 4294901760
    %1895 = vmatpush1.msra.mxu0 %v1894
    %1896 = vmatprep.subr.mxu0 0.0
    %v1897 = vand.u32 %v875, 4294901760
    %1898 = vmatpush1.msra.mxu0 %v1897
    %1899 = vmatprep.subr.mxu0 0.0
    %v1900 = vand.u32 %v874, 4294901760
    %1901 = vmatpush1.msra.mxu0 %v1900
    %1902 = vmatprep.subr.mxu0 0.0
    %v1903 = vand.u32 %v873, 4294901760
    %1904 = vmatpush1.msra.mxu0 %v1903
    %1905 = vmatprep.subr.mxu0 0.0
    %v1906 = vand.u32 %v872, 4294901760
    %1907 = vmatpush1.msra.mxu0 %v1906
    %1908 = vmatprep.subr.mxu0 0.0
    %v1909 = vand.u32 %v871, 4294901760
    %1910 = vmatpush1.msra.mxu0 %v1909
    %1911 = vmatprep.subr.mxu0 0.0
    %v1912 = vand.u32 %v870, 4294901760
    %1913 = vmatpush1.msra.mxu0 %v1912
    %1914 = vmatprep.subr.mxu0 0.0
    %v1915 = vand.u32 %v869, 4294901760
    %1916 = vmatpush1.msra.mxu0 %v1915
    %1917 = vmatprep.subr.mxu0 0.0
    %v1918 = vand.u32 %v868, 4294901760
    %1919 = vmatpush1.msra.mxu0 %v1918
    %1920 = vmatprep.subr.mxu0 0.0
    %v1921 = vand.u32 %v867, 4294901760
    %1922 = vmatpush1.msra.mxu0 %v1921
    %1923 = vmatprep.subr.mxu0 0.0
    %1924 = vmatpush2.msra.mxu0 0.0
    %1925 = vmatprep.subr.mxu0 0.0
    %1926 = vmatpush2.msra.mxu0 0.0
    %1927 = vmatprep.subr.mxu0 0.0
    %1928 = vmatpush2.msra.mxu0 0.0
    %1929 = vmatprep.subr.mxu0 0.0
    %1930 = vmatpush2.msra.mxu0 0.0
    %1931 = vmatprep.subr.mxu0 0.0
    %1932 = vmatpush2.msra.mxu0 0.0
    %1933 = vmatprep.subr.mxu0 0.0
    %1934 = vmatpush2.msra.mxu0 0.0
    %1935 = vmatprep.subr.mxu0 0.0
    %1936 = vmatpush2.msra.mxu0 0.0
    %1937 = vmatprep.subr.mxu0 0.0
    %1938 = vmatpush2.msra.mxu0 0.0
    %1939 = vmatprep.subr.mxu0 0.0
    %1940 = vmatpush2.msra.mxu0 0.0
    %1941 = vmatprep.subr.mxu0 0.0
    %1942 = vmatpush2.msra.mxu0 0.0
    %1943 = vmatprep.subr.mxu0 0.0
    %1944 = vmatpush2.msra.mxu0 0.0
    %1945 = vmatprep.subr.mxu0 0.0
    %1946 = vmatpush2.msra.mxu0 0.0
    %1947 = vmatprep.subr.mxu0 0.0
    %1948 = vmatpush2.msra.mxu0 0.0
    %1949 = vmatprep.subr.mxu0 0.0
    %1950 = vmatpush2.msra.mxu0 0.0
    %1951 = vmatprep.subr.mxu0 0.0
    %1952 = vmatpush2.msra.mxu0 0.0
    %1953 = vmatprep.subr.mxu0 0.0
    %1954 = vmatpush2.msra.mxu0 0.0
    %1955 = vmatprep.mubr.f32.mxu0 0.0
    %v1956 = vand.u32 %v1527, 4294901760
    %v1957 = vsub.f32 %v1527, %v1956
    %v1958 = vand.u32 %v1957, 4294901760
    %1959 = vmatmul.mubr.f32.gmra.mxu0 %v1958
    %v1960 = vpop.f32.mrf.mxu0
    %v1961 = vadd.f32 %v1872, %v1960
    %v1962 = vpop.f32.mrf.mxu0
    %1963 = vdwg.mxu0
    %1964 = vmatprep.subr.mxu0 0.0
    %v1965 = vand.u32 %v882, 4294901760
    %v1966 = vsub.f32 %v882, %v1965
    %v1967 = vand.u32 %v1966, 4294901760
    %1968 = vmatpush1.msra.mxu0 %v1967
    %1969 = vmatprep.subr.mxu0 0.0
    %v1970 = vand.u32 %v881, 4294901760
    %v1971 = vsub.f32 %v881, %v1970
    %v1972 = vand.u32 %v1971, 4294901760
    %1973 = vmatpush1.msra.mxu0 %v1972
    %1974 = vmatprep.subr.mxu0 0.0
    %v1975 = vand.u32 %v880, 4294901760
    %v1976 = vsub.f32 %v880, %v1975
    %v1977 = vand.u32 %v1976, 4294901760
    %1978 = vmatpush1.msra.mxu0 %v1977
    %1979 = vmatprep.subr.mxu0 0.0
    %v1980 = vand.u32 %v879, 4294901760
    %v1981 = vsub.f32 %v879, %v1980
    %v1982 = vand.u32 %v1981, 4294901760
    %1983 = vmatpush1.msra.mxu0 %v1982
    %1984 = vmatprep.subr.mxu0 0.0
    %v1985 = vand.u32 %v878, 4294901760
    %v1986 = vsub.f32 %v878, %v1985
    %v1987 = vand.u32 %v1986, 4294901760
    %1988 = vmatpush1.msra.mxu0 %v1987
    %1989 = vmatprep.subr.mxu0 0.0
    %v1990 = vand.u32 %v877, 4294901760
    %v1991 = vsub.f32 %v877, %v1990
    %v1992 = vand.u32 %v1991, 4294901760
    %1993 = vmatpush1.msra.mxu0 %v1992
    %1994 = vmatprep.subr.mxu0 0.0
    %v1995 = vand.u32 %v876, 4294901760
    %v1996 = vsub.f32 %v876, %v1995
    %v1997 = vand.u32 %v1996, 4294901760
    %1998 = vmatpush1.msra.mxu0 %v1997
    %1999 = vmatprep.subr.mxu0 0.0
    %v2000 = vand.u32 %v875, 4294901760
    %v2001 = vsub.f32 %v875, %v2000
    %v2002 = vand.u32 %v2001, 4294901760
    %2003 = vmatpush1.msra.mxu0 %v2002
    %2004 = vmatprep.subr.mxu0 0.0
    %v2005 = vand.u32 %v874, 4294901760
    %v2006 = vsub.f32 %v874, %v2005
    %v2007 = vand.u32 %v2006, 4294901760
    %2008 = vmatpush1.msra.mxu0 %v2007
    %2009 = vmatprep.subr.mxu0 0.0
    %v2010 = vand.u32 %v873, 4294901760
    %v2011 = vsub.f32 %v873, %v2010
    %v2012 = vand.u32 %v2011, 4294901760
    %2013 = vmatpush1.msra.mxu0 %v2012
    %2014 = vmatprep.subr.mxu0 0.0
    %v2015 = vand.u32 %v872, 4294901760
    %v2016 = vsub.f32 %v872, %v2015
    %v2017 = vand.u32 %v2016, 4294901760
    %2018 = vmatpush1.msra.mxu0 %v2017
    %2019 = vmatprep.subr.mxu0 0.0
    %v2020 = vand.u32 %v871, 4294901760
    %v2021 = vsub.f32 %v871, %v2020
    %v2022 = vand.u32 %v2021, 4294901760
    %2023 = vmatpush1.msra.mxu0 %v2022
    %2024 = vmatprep.subr.mxu0 0.0
    %v2025 = vand.u32 %v870, 4294901760
    %v2026 = vsub.f32 %v870, %v2025
    %v2027 = vand.u32 %v2026, 4294901760
    %2028 = vmatpush1.msra.mxu0 %v2027
    %2029 = vmatprep.subr.mxu0 0.0
    %v2030 = vand.u32 %v869, 4294901760
    %v2031 = vsub.f32 %v869, %v2030
    %v2032 = vand.u32 %v2031, 4294901760
    %2033 = vmatpush1.msra.mxu0 %v2032
    %2034 = vmatprep.subr.mxu0 0.0
    %v2035 = vand.u32 %v868, 4294901760
    %v2036 = vsub.f32 %v868, %v2035
    %v2037 = vand.u32 %v2036, 4294901760
    %2038 = vmatpush1.msra.mxu0 %v2037
    %2039 = vmatprep.subr.mxu0 0.0
    %v2040 = vand.u32 %v867, 4294901760
    %v2041 = vsub.f32 %v867, %v2040
    %v2042 = vand.u32 %v2041, 4294901760
    %2043 = vmatpush1.msra.mxu0 %v2042
    %2044 = vmatprep.subr.mxu0 0.0
    %2045 = vmatpush2.msra.mxu0 0.0
    %2046 = vmatprep.subr.mxu0 0.0
    %2047 = vmatpush2.msra.mxu0 0.0
    %2048 = vmatprep.subr.mxu0 0.0
    %2049 = vmatpush2.msra.mxu0 0.0
    %2050 = vmatprep.subr.mxu0 0.0
    %2051 = vmatpush2.msra.mxu0 0.0
    %2052 = vmatprep.subr.mxu0 0.0
    %2053 = vmatpush2.msra.mxu0 0.0
    %2054 = vmatprep.subr.mxu0 0.0
    %2055 = vmatpush2.msra.mxu0 0.0
    %2056 = vmatprep.subr.mxu0 0.0
    %2057 = vmatpush2.msra.mxu0 0.0
    %2058 = vmatprep.subr.mxu0 0.0
    %2059 = vmatpush2.msra.mxu0 0.0
    %2060 = vmatprep.subr.mxu0 0.0
    %2061 = vmatpush2.msra.mxu0 0.0
    %2062 = vmatprep.subr.mxu0 0.0
    %2063 = vmatpush2.msra.mxu0 0.0
    %2064 = vmatprep.subr.mxu0 0.0
    %2065 = vmatpush2.msra.mxu0 0.0
    %2066 = vmatprep.subr.mxu0 0.0
    %2067 = vmatpush2.msra.mxu0 0.0
    %2068 = vmatprep.subr.mxu0 0.0
    %2069 = vmatpush2.msra.mxu0 0.0
    %2070 = vmatprep.subr.mxu0 0.0
    %2071 = vmatpush2.msra.mxu0 0.0
    %2072 = vmatprep.subr.mxu0 0.0
    %2073 = vmatpush2.msra.mxu0 0.0
    %2074 = vmatprep.subr.mxu0 0.0
    %2075 = vmatpush2.msra.mxu0 0.0
    %2076 = vmatprep.mubr.f32.mxu0 0.0
    %v2077 = vand.u32 %v1527, 4294901760
    %2078 = vmatmul.mubr.f32.gmra.mxu0 %v2077
    %v2079 = vpop.f32.mrf.mxu0
    %v2080 = vadd.f32 %v1961, %v2079
    %v2081 = vpop.f32.mrf.mxu0
    %2082 = vdwg.mxu0
    %2083 = vmatprep.subr.mxu0 0.0
    %v2084 = vand.u32 %v882, 4294901760
    %2085 = vmatpush1.msra.mxu0 %v2084
    %2086 = vmatprep.subr.mxu0 0.0
    %v2087 = vand.u32 %v881, 4294901760
    %2088 = vmatpush1.msra.mxu0 %v2087
    %2089 = vmatprep.subr.mxu0 0.0
    %v2090 = vand.u32 %v880, 4294901760
    %2091 = vmatpush1.msra.mxu0 %v2090
    %2092 = vmatprep.subr.mxu0 0.0
    %v2093 = vand.u32 %v879, 4294901760
    %2094 = vmatpush1.msra.mxu0 %v2093
    %2095 = vmatprep.subr.mxu0 0.0
    %v2096 = vand.u32 %v878, 4294901760
    %2097 = vmatpush1.msra.mxu0 %v2096
    %2098 = vmatprep.subr.mxu0 0.0
    %v2099 = vand.u32 %v877, 4294901760
    %2100 = vmatpush1.msra.mxu0 %v2099
    %2101 = vmatprep.subr.mxu0 0.0
    %v2102 = vand.u32 %v876, 4294901760
    %2103 = vmatpush1.msra.mxu0 %v2102
    %2104 = vmatprep.subr.mxu0 0.0
    %v2105 = vand.u32 %v875, 4294901760
    %2106 = vmatpush1.msra.mxu0 %v2105
    %2107 = vmatprep.subr.mxu0 0.0
    %v2108 = vand.u32 %v874, 4294901760
    %2109 = vmatpush1.msra.mxu0 %v2108
    %2110 = vmatprep.subr.mxu0 0.0
    %v2111 = vand.u32 %v873, 4294901760
    %2112 = vmatpush1.msra.mxu0 %v2111
    %2113 = vmatprep.subr.mxu0 0.0
    %v2114 = vand.u32 %v872, 4294901760
    %2115 = vmatpush1.msra.mxu0 %v2114
    %2116 = vmatprep.subr.mxu0 0.0
    %v2117 = vand.u32 %v871, 4294901760
    %2118 = vmatpush1.msra.mxu0 %v2117
    %2119 = vmatprep.subr.mxu0 0.0
    %v2120 = vand.u32 %v870, 4294901760
    %2121 = vmatpush1.msra.mxu0 %v2120
    %2122 = vmatprep.subr.mxu0 0.0
    %v2123 = vand.u32 %v869, 4294901760
    %2124 = vmatpush1.msra.mxu0 %v2123
    %2125 = vmatprep.subr.mxu0 0.0
    %v2126 = vand.u32 %v868, 4294901760
    %2127 = vmatpush1.msra.mxu0 %v2126
    %2128 = vmatprep.subr.mxu0 0.0
    %v2129 = vand.u32 %v867, 4294901760
    %2130 = vmatpush1.msra.mxu0 %v2129
    %2131 = vmatprep.subr.mxu0 0.0
    %2132 = vmatpush2.msra.mxu0 0.0
    %2133 = vmatprep.subr.mxu0 0.0
    %2134 = vmatpush2.msra.mxu0 0.0
    %2135 = vmatprep.subr.mxu0 0.0
    %2136 = vmatpush2.msra.mxu0 0.0
    %2137 = vmatprep.subr.mxu0 0.0
    %2138 = vmatpush2.msra.mxu0 0.0
    %2139 = vmatprep.subr.mxu0 0.0
    %2140 = vmatpush2.msra.mxu0 0.0
    %2141 = vmatprep.subr.mxu0 0.0
    %2142 = vmatpush2.msra.mxu0 0.0
    %2143 = vmatprep.subr.mxu0 0.0
    %2144 = vmatpush2.msra.mxu0 0.0
    %2145 = vmatprep.subr.mxu0 0.0
    %2146 = vmatpush2.msra.mxu0 0.0
    %2147 = vmatprep.subr.mxu0 0.0
    %2148 = vmatpush2.msra.mxu0 0.0
    %2149 = vmatprep.subr.mxu0 0.0
    %2150 = vmatpush2.msra.mxu0 0.0
    %2151 = vmatprep.subr.mxu0 0.0
    %2152 = vmatpush2.msra.mxu0 0.0
    %2153 = vmatprep.subr.mxu0 0.0
    %2154 = vmatpush2.msra.mxu0 0.0
    %2155 = vmatprep.subr.mxu0 0.0
    %2156 = vmatpush2.msra.mxu0 0.0
    %2157 = vmatprep.subr.mxu0 0.0
    %2158 = vmatpush2.msra.mxu0 0.0
    %2159 = vmatprep.subr.mxu0 0.0
    %2160 = vmatpush2.msra.mxu0 0.0
    %2161 = vmatprep.subr.mxu0 0.0
    %2162 = vmatpush2.msra.mxu0 0.0
    %2163 = vmatprep.mubr.f32.mxu0 0.0
    %v2164 = vand.u32 %v1527, 4294901760
    %2165 = vmatmul.mubr.f32.gmra.mxu0 %v2164
    %v2166 = vpop.f32.mrf.mxu0
    %v2167 = vadd.f32 %v2080, %v2166
    %v2168 = vpop.f32.mrf.mxu0
    %2169 = vdwg.mxu0
    %v2170 = vadd.f32 %v1528, %v2167
    %v2171 = vtanh.pop %v2170
    %v2172 = vld [vmem:[#allocation3 + $0x10] sm:$0xff]
    %2173 = vmatprep.subr.mxu0 0.0
    %v2174 = vand.u32 %v882, 4294901760
    %2175 = vmatpush1.msra.mxu0 %v2174
    %2176 = vmatprep.subr.mxu0 0.0
    %v2177 = vand.u32 %v881, 4294901760
    %2178 = vmatpush1.msra.mxu0 %v2177
    %2179 = vmatprep.subr.mxu0 0.0
    %v2180 = vand.u32 %v880, 4294901760
    %2181 = vmatpush1.msra.mxu0 %v2180
    %2182 = vmatprep.subr.mxu0 0.0
    %v2183 = vand.u32 %v879, 4294901760
    %2184 = vmatpush1.msra.mxu0 %v2183
    %2185 = vmatprep.subr.mxu0 0.0
    %v2186 = vand.u32 %v878, 4294901760
    %2187 = vmatpush1.msra.mxu0 %v2186
    %2188 = vmatprep.subr.mxu0 0.0
    %v2189 = vand.u32 %v877, 4294901760
    %2190 = vmatpush1.msra.mxu0 %v2189
    %2191 = vmatprep.subr.mxu0 0.0
    %v2192 = vand.u32 %v876, 4294901760
    %2193 = vmatpush1.msra.mxu0 %v2192
    %2194 = vmatprep.subr.mxu0 0.0
    %v2195 = vand.u32 %v875, 4294901760
    %2196 = vmatpush1.msra.mxu0 %v2195
    %2197 = vmatprep.subr.mxu0 0.0
    %v2198 = vand.u32 %v874, 4294901760
    %2199 = vmatpush1.msra.mxu0 %v2198
    %2200 = vmatprep.subr.mxu0 0.0
    %v2201 = vand.u32 %v873, 4294901760
    %2202 = vmatpush1.msra.mxu0 %v2201
    %2203 = vmatprep.subr.mxu0 0.0
    %v2204 = vand.u32 %v872, 4294901760
    %2205 = vmatpush1.msra.mxu0 %v2204
    %2206 = vmatprep.subr.mxu0 0.0
    %v2207 = vand.u32 %v871, 4294901760
    %2208 = vmatpush1.msra.mxu0 %v2207
    %2209 = vmatprep.subr.mxu0 0.0
    %v2210 = vand.u32 %v870, 4294901760
    %2211 = vmatpush1.msra.mxu0 %v2210
    %2212 = vmatprep.subr.mxu0 0.0
    %v2213 = vand.u32 %v869, 4294901760
    %2214 = vmatpush1.msra.mxu0 %v2213
    %2215 = vmatprep.subr.mxu0 0.0
    %v2216 = vand.u32 %v868, 4294901760
    %2217 = vmatpush1.msra.mxu0 %v2216
    %2218 = vmatprep.subr.mxu0 0.0
    %v2219 = vand.u32 %v867, 4294901760
    %2220 = vmatpush1.msra.mxu0 %v2219
    %2221 = vmatprep.subr.mxu0 0.0
    %2222 = vmatpush2.msra.mxu0 0.0
    %2223 = vmatprep.subr.mxu0 0.0
    %2224 = vmatpush2.msra.mxu0 0.0
    %2225 = vmatprep.subr.mxu0 0.0
    %2226 = vmatpush2.msra.mxu0 0.0
    %2227 = vmatprep.subr.mxu0 0.0
    %2228 = vmatpush2.msra.mxu0 0.0
    %2229 = vmatprep.subr.mxu0 0.0
    %2230 = vmatpush2.msra.mxu0 0.0
    %2231 = vmatprep.subr.mxu0 0.0
    %2232 = vmatpush2.msra.mxu0 0.0
    %2233 = vmatprep.subr.mxu0 0.0
    %2234 = vmatpush2.msra.mxu0 0.0
    %2235 = vmatprep.subr.mxu0 0.0
    %2236 = vmatpush2.msra.mxu0 0.0
    %2237 = vmatprep.subr.mxu0 0.0
    %2238 = vmatpush2.msra.mxu0 0.0
    %2239 = vmatprep.subr.mxu0 0.0
    %2240 = vmatpush2.msra.mxu0 0.0
    %2241 = vmatprep.subr.mxu0 0.0
    %2242 = vmatpush2.msra.mxu0 0.0
    %2243 = vmatprep.subr.mxu0 0.0
    %2244 = vmatpush2.msra.mxu0 0.0
    %2245 = vmatprep.subr.mxu0 0.0
    %2246 = vmatpush2.msra.mxu0 0.0
    %2247 = vmatprep.subr.mxu0 0.0
    %2248 = vmatpush2.msra.mxu0 0.0
    %2249 = vmatprep.subr.mxu0 0.0
    %2250 = vmatpush2.msra.mxu0 0.0
    %2251 = vmatprep.subr.mxu0 0.0
    %2252 = vmatpush2.msra.mxu0 0.0
    %2253 = vmatprep.mubr.f32.mxu0 0.0
    %v2254 = vand.u32 %v2171, 4294901760
    %v2255 = vsub.f32 %v2171, %v2254
    %v2256 = vand.u32 %v2255, 4294901760
    %v2257 = vsub.f32 %v2255, %v2256
    %v2258 = vand.u32 %v2257, 4294901760
    %2259 = vmatmul.mubr.f32.gmra.mxu0 %v2258
    %v2260 = vpop.f32.mrf.mxu0
    %v2261 = vadd.f32 0.0, %v2260
    %v2262 = vpop.f32.mrf.mxu0
    %2263 = vdwg.mxu0
    %2264 = vmatprep.subr.mxu0 0.0
    %v2265 = vand.u32 %v882, 4294901760
    %v2266 = vsub.f32 %v882, %v2265
    %v2267 = vand.u32 %v2266, 4294901760
    %v2268 = vsub.f32 %v2266, %v2267
    %v2269 = vand.u32 %v2268, 4294901760
    %2270 = vmatpush1.msra.mxu0 %v2269
    %2271 = vmatprep.subr.mxu0 0.0
    %v2272 = vand.u32 %v881, 4294901760
    %v2273 = vsub.f32 %v881, %v2272
    %v2274 = vand.u32 %v2273, 4294901760
    %v2275 = vsub.f32 %v2273, %v2274
    %v2276 = vand.u32 %v2275, 4294901760
    %2277 = vmatpush1.msra.mxu0 %v2276
    %2278 = vmatprep.subr.mxu0 0.0
    %v2279 = vand.u32 %v880, 4294901760
    %v2280 = vsub.f32 %v880, %v2279
    %v2281 = vand.u32 %v2280, 4294901760
    %v2282 = vsub.f32 %v2280, %v2281
    %v2283 = vand.u32 %v2282, 4294901760
    %2284 = vmatpush1.msra.mxu0 %v2283
    %2285 = vmatprep.subr.mxu0 0.0
    %v2286 = vand.u32 %v879, 4294901760
    %v2287 = vsub.f32 %v879, %v2286
    %v2288 = vand.u32 %v2287, 4294901760
    %v2289 = vsub.f32 %v2287, %v2288
    %v2290 = vand.u32 %v2289, 4294901760
    %2291 = vmatpush1.msra.mxu0 %v2290
    %2292 = vmatprep.subr.mxu0 0.0
    %v2293 = vand.u32 %v878, 4294901760
    %v2294 = vsub.f32 %v878, %v2293
    %v2295 = vand.u32 %v2294, 4294901760
    %v2296 = vsub.f32 %v2294, %v2295
    %v2297 = vand.u32 %v2296, 4294901760
    %2298 = vmatpush1.msra.mxu0 %v2297
    %2299 = vmatprep.subr.mxu0 0.0
    %v2300 = vand.u32 %v877, 4294901760
    %v2301 = vsub.f32 %v877, %v2300
    %v2302 = vand.u32 %v2301, 4294901760
    %v2303 = vsub.f32 %v2301, %v2302
    %v2304 = vand.u32 %v2303, 4294901760
    %2305 = vmatpush1.msra.mxu0 %v2304
    %2306 = vmatprep.subr.mxu0 0.0
    %v2307 = vand.u32 %v876, 4294901760
    %v2308 = vsub.f32 %v876, %v2307
    %v2309 = vand.u32 %v2308, 4294901760
    %v2310 = vsub.f32 %v2308, %v2309
    %v2311 = vand.u32 %v2310, 4294901760
    %2312 = vmatpush1.msra.mxu0 %v2311
    %2313 = vmatprep.subr.mxu0 0.0
    %v2314 = vand.u32 %v875, 4294901760
    %v2315 = vsub.f32 %v875, %v2314
    %v2316 = vand.u32 %v2315, 4294901760
    %v2317 = vsub.f32 %v2315, %v2316
    %v2318 = vand.u32 %v2317, 4294901760
    %2319 = vmatpush1.msra.mxu0 %v2318
    %2320 = vmatprep.subr.mxu0 0.0
    %v2321 = vand.u32 %v874, 4294901760
    %v2322 = vsub.f32 %v874, %v2321
    %v2323 = vand.u32 %v2322, 4294901760
    %v2324 = vsub.f32 %v2322, %v2323
    %v2325 = vand.u32 %v2324, 4294901760
    %2326 = vmatpush1.msra.mxu0 %v2325
    %2327 = vmatprep.subr.mxu0 0.0
    %v2328 = vand.u32 %v873, 4294901760
    %v2329 = vsub.f32 %v873, %v2328
    %v2330 = vand.u32 %v2329, 4294901760
    %v2331 = vsub.f32 %v2329, %v2330
    %v2332 = vand.u32 %v2331, 4294901760
    %2333 = vmatpush1.msra.mxu0 %v2332
    %2334 = vmatprep.subr.mxu0 0.0
    %v2335 = vand.u32 %v872, 4294901760
    %v2336 = vsub.f32 %v872, %v2335
    %v2337 = vand.u32 %v2336, 4294901760
    %v2338 = vsub.f32 %v2336, %v2337
    %v2339 = vand.u32 %v2338, 4294901760
    %2340 = vmatpush1.msra.mxu0 %v2339
    %2341 = vmatprep.subr.mxu0 0.0
    %v2342 = vand.u32 %v871, 4294901760
    %v2343 = vsub.f32 %v871, %v2342
    %v2344 = vand.u32 %v2343, 4294901760
    %v2345 = vsub.f32 %v2343, %v2344
    %v2346 = vand.u32 %v2345, 4294901760
    %2347 = vmatpush1.msra.mxu0 %v2346
    %2348 = vmatprep.subr.mxu0 0.0
    %v2349 = vand.u32 %v870, 4294901760
    %v2350 = vsub.f32 %v870, %v2349
    %v2351 = vand.u32 %v2350, 4294901760
    %v2352 = vsub.f32 %v2350, %v2351
    %v2353 = vand.u32 %v2352, 4294901760
    %2354 = vmatpush1.msra.mxu0 %v2353
    %2355 = vmatprep.subr.mxu0 0.0
    %v2356 = vand.u32 %v869, 4294901760
    %v2357 = vsub.f32 %v869, %v2356
    %v2358 = vand.u32 %v2357, 4294901760
    %v2359 = vsub.f32 %v2357, %v2358
    %v2360 = vand.u32 %v2359, 4294901760
    %2361 = vmatpush1.msra.mxu0 %v2360
    %2362 = vmatprep.subr.mxu0 0.0
    %v2363 = vand.u32 %v868, 4294901760
    %v2364 = vsub.f32 %v868, %v2363
    %v2365 = vand.u32 %v2364, 4294901760
    %v2366 = vsub.f32 %v2364, %v2365
    %v2367 = vand.u32 %v2366, 4294901760
    %2368 = vmatpush1.msra.mxu0 %v2367
    %2369 = vmatprep.subr.mxu0 0.0
    %v2370 = vand.u32 %v867, 4294901760
    %v2371 = vsub.f32 %v867, %v2370
    %v2372 = vand.u32 %v2371, 4294901760
    %v2373 = vsub.f32 %v2371, %v2372
    %v2374 = vand.u32 %v2373, 4294901760
    %2375 = vmatpush1.msra.mxu0 %v2374
    %2376 = vmatprep.subr.mxu0 0.0
    %2377 = vmatpush2.msra.mxu0 0.0
    %2378 = vmatprep.subr.mxu0 0.0
    %2379 = vmatpush2.msra.mxu0 0.0
    %2380 = vmatprep.subr.mxu0 0.0
    %2381 = vmatpush2.msra.mxu0 0.0
    %2382 = vmatprep.subr.mxu0 0.0
    %2383 = vmatpush2.msra.mxu0 0.0
    %2384 = vmatprep.subr.mxu0 0.0
    %2385 = vmatpush2.msra.mxu0 0.0
    %2386 = vmatprep.subr.mxu0 0.0
    %2387 = vmatpush2.msra.mxu0 0.0
    %2388 = vmatprep.subr.mxu0 0.0
    %2389 = vmatpush2.msra.mxu0 0.0
    %2390 = vmatprep.subr.mxu0 0.0
    %2391 = vmatpush2.msra.mxu0 0.0
    %2392 = vmatprep.subr.mxu0 0.0
    %2393 = vmatpush2.msra.mxu0 0.0
    %2394 = vmatprep.subr.mxu0 0.0
    %2395 = vmatpush2.msra.mxu0 0.0
    %2396 = vmatprep.subr.mxu0 0.0
    %2397 = vmatpush2.msra.mxu0 0.0
    %2398 = vmatprep.subr.mxu0 0.0
    %2399 = vmatpush2.msra.mxu0 0.0
    %2400 = vmatprep.subr.mxu0 0.0
    %2401 = vmatpush2.msra.mxu0 0.0
    %2402 = vmatprep.subr.mxu0 0.0
    %2403 = vmatpush2.msra.mxu0 0.0
    %2404 = vmatprep.subr.mxu0 0.0
    %2405 = vmatpush2.msra.mxu0 0.0
    %2406 = vmatprep.subr.mxu0 0.0
    %2407 = vmatpush2.msra.mxu0 0.0
    %2408 = vmatprep.mubr.f32.mxu0 0.0
    %v2409 = vand.u32 %v2171, 4294901760
    %2410 = vmatmul.mubr.f32.gmra.mxu0 %v2409
    %v2411 = vpop.f32.mrf.mxu0
    %v2412 = vadd.f32 %v2261, %v2411
    %v2413 = vpop.f32.mrf.mxu0
    %2414 = vdwg.mxu0
    %2415 = vmatprep.subr.mxu0 0.0
    %v2416 = vand.u32 %v882, 4294901760
    %v2417 = vsub.f32 %v882, %v2416
    %2418 = vmatpush1.msra.mxu0 %v2417
    %2419 = vmatprep.subr.mxu0 0.0
    %v2420 = vand.u32 %v881, 4294901760
    %v2421 = vsub.f32 %v881, %v2420
    %2422 = vmatpush1.msra.mxu0 %v2421
    %2423 = vmatprep.subr.mxu0 0.0
    %v2424 = vand.u32 %v880, 4294901760
    %v2425 = vsub.f32 %v880, %v2424
    %2426 = vmatpush1.msra.mxu0 %v2425
    %2427 = vmatprep.subr.mxu0 0.0
    %v2428 = vand.u32 %v879, 4294901760
    %v2429 = vsub.f32 %v879, %v2428
    %2430 = vmatpush1.msra.mxu0 %v2429
    %2431 = vmatprep.subr.mxu0 0.0
    %v2432 = vand.u32 %v878, 4294901760
    %v2433 = vsub.f32 %v878, %v2432
    %2434 = vmatpush1.msra.mxu0 %v2433
    %2435 = vmatprep.subr.mxu0 0.0
    %v2436 = vand.u32 %v877, 4294901760
    %v2437 = vsub.f32 %v877, %v2436
    %2438 = vmatpush1.msra.mxu0 %v2437
    %2439 = vmatprep.subr.mxu0 0.0
    %v2440 = vand.u32 %v876, 4294901760
    %v2441 = vsub.f32 %v876, %v2440
    %2442 = vmatpush1.msra.mxu0 %v2441
    %2443 = vmatprep.subr.mxu0 0.0
    %v2444 = vand.u32 %v875, 4294901760
    %v2445 = vsub.f32 %v875, %v2444
    %2446 = vmatpush1.msra.mxu0 %v2445
    %2447 = vmatprep.subr.mxu0 0.0
    %v2448 = vand.u32 %v874, 4294901760
    %v2449 = vsub.f32 %v874, %v2448
    %2450 = vmatpush1.msra.mxu0 %v2449
    %2451 = vmatprep.subr.mxu0 0.0
    %v2452 = vand.u32 %v873, 4294901760
    %v2453 = vsub.f32 %v873, %v2452
    %2454 = vmatpush1.msra.mxu0 %v2453
    %2455 = vmatprep.subr.mxu0 0.0
    %v2456 = vand.u32 %v872, 4294901760
    %v2457 = vsub.f32 %v872, %v2456
    %2458 = vmatpush1.msra.mxu0 %v2457
    %2459 = vmatprep.subr.mxu0 0.0
    %v2460 = vand.u32 %v871, 4294901760
    %v2461 = vsub.f32 %v871, %v2460
    %2462 = vmatpush1.msra.mxu0 %v2461
    %2463 = vmatprep.subr.mxu0 0.0
    %v2464 = vand.u32 %v870, 4294901760
    %v2465 = vsub.f32 %v870, %v2464
    %2466 = vmatpush1.msra.mxu0 %v2465
    %2467 = vmatprep.subr.mxu0 0.0
    %v2468 = vand.u32 %v869, 4294901760
    %v2469 = vsub.f32 %v869, %v2468
    %2470 = vmatpush1.msra.mxu0 %v2469
    %2471 = vmatprep.subr.mxu0 0.0
    %v2472 = vand.u32 %v868, 4294901760
    %v2473 = vsub.f32 %v868, %v2472
    %2474 = vmatpush1.msra.mxu0 %v2473
    %2475 = vmatprep.subr.mxu0 0.0
    %v2476 = vand.u32 %v867, 4294901760
    %v2477 = vsub.f32 %v867, %v2476
    %2478 = vmatpush1.msra.mxu0 %v2477
    %2479 = vmatprep.subr.mxu0 0.0
    %2480 = vmatpush2.msra.mxu0 0.0
    %2481 = vmatprep.subr.mxu0 0.0
    %2482 = vmatpush2.msra.mxu0 0.0
    %2483 = vmatprep.subr.mxu0 0.0
    %2484 = vmatpush2.msra.mxu0 0.0
    %2485 = vmatprep.subr.mxu0 0.0
    %2486 = vmatpush2.msra.mxu0 0.0
    %2487 = vmatprep.subr.mxu0 0.0
    %2488 = vmatpush2.msra.mxu0 0.0
    %2489 = vmatprep.subr.mxu0 0.0
    %2490 = vmatpush2.msra.mxu0 0.0
    %2491 = vmatprep.subr.mxu0 0.0
    %2492 = vmatpush2.msra.mxu0 0.0
    %2493 = vmatprep.subr.mxu0 0.0
    %2494 = vmatpush2.msra.mxu0 0.0
    %2495 = vmatprep.subr.mxu0 0.0
    %2496 = vmatpush2.msra.mxu0 0.0
    %2497 = vmatprep.subr.mxu0 0.0
    %2498 = vmatpush2.msra.mxu0 0.0
    %2499 = vmatprep.subr.mxu0 0.0
    %2500 = vmatpush2.msra.mxu0 0.0
    %2501 = vmatprep.subr.mxu0 0.0
    %2502 = vmatpush2.msra.mxu0 0.0
    %2503 = vmatprep.subr.mxu0 0.0
    %2504 = vmatpush2.msra.mxu0 0.0
    %2505 = vmatprep.subr.mxu0 0.0
    %2506 = vmatpush2.msra.mxu0 0.0
    %2507 = vmatprep.subr.mxu0 0.0
    %2508 = vmatpush2.msra.mxu0 0.0
    %2509 = vmatprep.subr.mxu0 0.0
    %2510 = vmatpush2.msra.mxu0 0.0
    %2511 = vmatprep.mubr.f32.mxu0 0.0
    %v2512 = vand.u32 %v2171, 4294901760
    %v2513 = vsub.f32 %v2171, %v2512
    %2514 = vmatmul.mubr.f32.gmra.mxu0 %v2513
    %v2515 = vpop.f32.mrf.mxu0
    %v2516 = vadd.f32 %v2412, %v2515
    %v2517 = vpop.f32.mrf.mxu0
    %2518 = vdwg.mxu0
    %2519 = vmatprep.subr.mxu0 0.0
    %v2520 = vand.u32 %v882, 4294901760
    %2521 = vmatpush1.msra.mxu0 %v2520
    %2522 = vmatprep.subr.mxu0 0.0
    %v2523 = vand.u32 %v881, 4294901760
    %2524 = vmatpush1.msra.mxu0 %v2523
    %2525 = vmatprep.subr.mxu0 0.0
    %v2526 = vand.u32 %v880, 4294901760
    %2527 = vmatpush1.msra.mxu0 %v2526
    %2528 = vmatprep.subr.mxu0 0.0
    %v2529 = vand.u32 %v879, 4294901760
    %2530 = vmatpush1.msra.mxu0 %v2529
    %2531 = vmatprep.subr.mxu0 0.0
    %v2532 = vand.u32 %v878, 4294901760
    %2533 = vmatpush1.msra.mxu0 %v2532
    %2534 = vmatprep.subr.mxu0 0.0
    %v2535 = vand.u32 %v877, 4294901760
    %2536 = vmatpush1.msra.mxu0 %v2535
    %2537 = vmatprep.subr.mxu0 0.0
    %v2538 = vand.u32 %v876, 4294901760
    %2539 = vmatpush1.msra.mxu0 %v2538
    %2540 = vmatprep.subr.mxu0 0.0
    %v2541 = vand.u32 %v875, 4294901760
    %2542 = vmatpush1.msra.mxu0 %v2541
    %2543 = vmatprep.subr.mxu0 0.0
    %v2544 = vand.u32 %v874, 4294901760
    %2545 = vmatpush1.msra.mxu0 %v2544
    %2546 = vmatprep.subr.mxu0 0.0
    %v2547 = vand.u32 %v873, 4294901760
    %2548 = vmatpush1.msra.mxu0 %v2547
    %2549 = vmatprep.subr.mxu0 0.0
    %v2550 = vand.u32 %v872, 4294901760
    %2551 = vmatpush1.msra.mxu0 %v2550
    %2552 = vmatprep.subr.mxu0 0.0
    %v2553 = vand.u32 %v871, 4294901760
    %2554 = vmatpush1.msra.mxu0 %v2553
    %2555 = vmatprep.subr.mxu0 0.0
    %v2556 = vand.u32 %v870, 4294901760
    %2557 = vmatpush1.msra.mxu0 %v2556
    %2558 = vmatprep.subr.mxu0 0.0
    %v2559 = vand.u32 %v869, 4294901760
    %2560 = vmatpush1.msra.mxu0 %v2559
    %2561 = vmatprep.subr.mxu0 0.0
    %v2562 = vand.u32 %v868, 4294901760
    %2563 = vmatpush1.msra.mxu0 %v2562
    %2564 = vmatprep.subr.mxu0 0.0
    %v2565 = vand.u32 %v867, 4294901760
    %2566 = vmatpush1.msra.mxu0 %v2565
    %2567 = vmatprep.subr.mxu0 0.0
    %2568 = vmatpush2.msra.mxu0 0.0
    %2569 = vmatprep.subr.mxu0 0.0
    %2570 = vmatpush2.msra.mxu0 0.0
    %2571 = vmatprep.subr.mxu0 0.0
    %2572 = vmatpush2.msra.mxu0 0.0
    %2573 = vmatprep.subr.mxu0 0.0
    %2574 = vmatpush2.msra.mxu0 0.0
    %2575 = vmatprep.subr.mxu0 0.0
    %2576 = vmatpush2.msra.mxu0 0.0
    %2577 = vmatprep.subr.mxu0 0.0
    %2578 = vmatpush2.msra.mxu0 0.0
    %2579 = vmatprep.subr.mxu0 0.0
    %2580 = vmatpush2.msra.mxu0 0.0
    %2581 = vmatprep.subr.mxu0 0.0
    %2582 = vmatpush2.msra.mxu0 0.0
    %2583 = vmatprep.subr.mxu0 0.0
    %2584 = vmatpush2.msra.mxu0 0.0
    %2585 = vmatprep.subr.mxu0 0.0
    %2586 = vmatpush2.msra.mxu0 0.0
    %2587 = vmatprep.subr.mxu0 0.0
    %2588 = vmatpush2.msra.mxu0 0.0
    %2589 = vmatprep.subr.mxu0 0.0
    %2590 = vmatpush2.msra.mxu0 0.0
    %2591 = vmatprep.subr.mxu0 0.0
    %2592 = vmatpush2.msra.mxu0 0.0
    %2593 = vmatprep.subr.mxu0 0.0
    %2594 = vmatpush2.msra.mxu0 0.0
    %2595 = vmatprep.subr.mxu0 0.0
    %2596 = vmatpush2.msra.mxu0 0.0
    %2597 = vmatprep.subr.mxu0 0.0
    %2598 = vmatpush2.msra.mxu0 0.0
    %2599 = vmatprep.mubr.f32.mxu0 0.0
    %v2600 = vand.u32 %v2171, 4294901760
    %v2601 = vsub.f32 %v2171, %v2600
    %v2602 = vand.u32 %v2601, 4294901760
    %2603 = vmatmul.mubr.f32.gmra.mxu0 %v2602
    %v2604 = vpop.f32.mrf.mxu0
    %v2605 = vadd.f32 %v2516, %v2604
    %v2606 = vpop.f32.mrf.mxu0
    %2607 = vdwg.mxu0
    %2608 = vmatprep.subr.mxu0 0.0
    %v2609 = vand.u32 %v882, 4294901760
    %v2610 = vsub.f32 %v882, %v2609
    %v2611 = vand.u32 %v2610, 4294901760
    %2612 = vmatpush1.msra.mxu0 %v2611
    %2613 = vmatprep.subr.mxu0 0.0
    %v2614 = vand.u32 %v881, 4294901760
    %v2615 = vsub.f32 %v881, %v2614
    %v2616 = vand.u32 %v2615, 4294901760
    %2617 = vmatpush1.msra.mxu0 %v2616
    %2618 = vmatprep.subr.mxu0 0.0
    %v2619 = vand.u32 %v880, 4294901760
    %v2620 = vsub.f32 %v880, %v2619
    %v2621 = vand.u32 %v2620, 4294901760
    %2622 = vmatpush1.msra.mxu0 %v2621
    %2623 = vmatprep.subr.mxu0 0.0
    %v2624 = vand.u32 %v879, 4294901760
    %v2625 = vsub.f32 %v879, %v2624
    %v2626 = vand.u32 %v2625, 4294901760
    %2627 = vmatpush1.msra.mxu0 %v2626
    %2628 = vmatprep.subr.mxu0 0.0
    %v2629 = vand.u32 %v878, 4294901760
    %v2630 = vsub.f32 %v878, %v2629
    %v2631 = vand.u32 %v2630, 4294901760
    %2632 = vmatpush1.msra.mxu0 %v2631
    %2633 = vmatprep.subr.mxu0 0.0
    %v2634 = vand.u32 %v877, 4294901760
    %v2635 = vsub.f32 %v877, %v2634
    %v2636 = vand.u32 %v2635, 4294901760
    %2637 = vmatpush1.msra.mxu0 %v2636
    %2638 = vmatprep.subr.mxu0 0.0
    %v2639 = vand.u32 %v876, 4294901760
    %v2640 = vsub.f32 %v876, %v2639
    %v2641 = vand.u32 %v2640, 4294901760
    %2642 = vmatpush1.msra.mxu0 %v2641
    %2643 = vmatprep.subr.mxu0 0.0
    %v2644 = vand.u32 %v875, 4294901760
    %v2645 = vsub.f32 %v875, %v2644
    %v2646 = vand.u32 %v2645, 4294901760
    %2647 = vmatpush1.msra.mxu0 %v2646
    %2648 = vmatprep.subr.mxu0 0.0
    %v2649 = vand.u32 %v874, 4294901760
    %v2650 = vsub.f32 %v874, %v2649
    %v2651 = vand.u32 %v2650, 4294901760
    %2652 = vmatpush1.msra.mxu0 %v2651
    %2653 = vmatprep.subr.mxu0 0.0
    %v2654 = vand.u32 %v873, 4294901760
    %v2655 = vsub.f32 %v873, %v2654
    %v2656 = vand.u32 %v2655, 4294901760
    %2657 = vmatpush1.msra.mxu0 %v2656
    %2658 = vmatprep.subr.mxu0 0.0
    %v2659 = vand.u32 %v872, 4294901760
    %v2660 = vsub.f32 %v872, %v2659
    %v2661 = vand.u32 %v2660, 4294901760
    %2662 = vmatpush1.msra.mxu0 %v2661
    %2663 = vmatprep.subr.mxu0 0.0
    %v2664 = vand.u32 %v871, 4294901760
    %v2665 = vsub.f32 %v871, %v2664
    %v2666 = vand.u32 %v2665, 4294901760
    %2667 = vmatpush1.msra.mxu0 %v2666
    %2668 = vmatprep.subr.mxu0 0.0
    %v2669 = vand.u32 %v870, 4294901760
    %v2670 = vsub.f32 %v870, %v2669
    %v2671 = vand.u32 %v2670, 4294901760
    %2672 = vmatpush1.msra.mxu0 %v2671
    %2673 = vmatprep.subr.mxu0 0.0
    %v2674 = vand.u32 %v869, 4294901760
    %v2675 = vsub.f32 %v869, %v2674
    %v2676 = vand.u32 %v2675, 4294901760
    %2677 = vmatpush1.msra.mxu0 %v2676
    %2678 = vmatprep.subr.mxu0 0.0
    %v2679 = vand.u32 %v868, 4294901760
    %v2680 = vsub.f32 %v868, %v2679
    %v2681 = vand.u32 %v2680, 4294901760
    %2682 = vmatpush1.msra.mxu0 %v2681
    %2683 = vmatprep.subr.mxu0 0.0
    %v2684 = vand.u32 %v867, 4294901760
    %v2685 = vsub.f32 %v867, %v2684
    %v2686 = vand.u32 %v2685, 4294901760
    %2687 = vmatpush1.msra.mxu0 %v2686
    %2688 = vmatprep.subr.mxu0 0.0
    %2689 = vmatpush2.msra.mxu0 0.0
    %2690 = vmatprep.subr.mxu0 0.0
    %2691 = vmatpush2.msra.mxu0 0.0
    %2692 = vmatprep.subr.mxu0 0.0
    %2693 = vmatpush2.msra.mxu0 0.0
    %2694 = vmatprep.subr.mxu0 0.0
    %2695 = vmatpush2.msra.mxu0 0.0
    %2696 = vmatprep.subr.mxu0 0.0
    %2697 = vmatpush2.msra.mxu0 0.0
    %2698 = vmatprep.subr.mxu0 0.0
    %2699 = vmatpush2.msra.mxu0 0.0
    %2700 = vmatprep.subr.mxu0 0.0
    %2701 = vmatpush2.msra.mxu0 0.0
    %2702 = vmatprep.subr.mxu0 0.0
    %2703 = vmatpush2.msra.mxu0 0.0
    %2704 = vmatprep.subr.mxu0 0.0
    %2705 = vmatpush2.msra.mxu0 0.0
    %2706 = vmatprep.subr.mxu0 0.0
    %2707 = vmatpush2.msra.mxu0 0.0
    %2708 = vmatprep.subr.mxu0 0.0
    %2709 = vmatpush2.msra.mxu0 0.0
    %2710 = vmatprep.subr.mxu0 0.0
    %2711 = vmatpush2.msra.mxu0 0.0
    %2712 = vmatprep.subr.mxu0 0.0
    %2713 = vmatpush2.msra.mxu0 0.0
    %2714 = vmatprep.subr.mxu0 0.0
    %2715 = vmatpush2.msra.mxu0 0.0
    %2716 = vmatprep.subr.mxu0 0.0
    %2717 = vmatpush2.msra.mxu0 0.0
    %2718 = vmatprep.subr.mxu0 0.0
    %2719 = vmatpush2.msra.mxu0 0.0
    %2720 = vmatprep.mubr.f32.mxu0 0.0
    %v2721 = vand.u32 %v2171, 4294901760
    %2722 = vmatmul.mubr.f32.gmra.mxu0 %v2721
    %v2723 = vpop.f32.mrf.mxu0
    %v2724 = vadd.f32 %v2605, %v2723
    %v2725 = vpop.f32.mrf.mxu0
    %2726 = vdwg.mxu0
    %2727 = vmatprep.subr.mxu0 0.0
    %v2728 = vand.u32 %v882, 4294901760
    %2729 = vmatpush1.msra.mxu0 %v2728
    %2730 = vmatprep.subr.mxu0 0.0
    %v2731 = vand.u32 %v881, 4294901760
    %2732 = vmatpush1.msra.mxu0 %v2731
    %2733 = vmatprep.subr.mxu0 0.0
    %v2734 = vand.u32 %v880, 4294901760
    %2735 = vmatpush1.msra.mxu0 %v2734
    %2736 = vmatprep.subr.mxu0 0.0
    %v2737 = vand.u32 %v879, 4294901760
    %2738 = vmatpush1.msra.mxu0 %v2737
    %2739 = vmatprep.subr.mxu0 0.0
    %v2740 = vand.u32 %v878, 4294901760
    %2741 = vmatpush1.msra.mxu0 %v2740
    %2742 = vmatprep.subr.mxu0 0.0
    %v2743 = vand.u32 %v877, 4294901760
    %2744 = vmatpush1.msra.mxu0 %v2743
    %2745 = vmatprep.subr.mxu0 0.0
    %v2746 = vand.u32 %v876, 4294901760
    %2747 = vmatpush1.msra.mxu0 %v2746
    %2748 = vmatprep.subr.mxu0 0.0
    %v2749 = vand.u32 %v875, 4294901760
    %2750 = vmatpush1.msra.mxu0 %v2749
    %2751 = vmatprep.subr.mxu0 0.0
    %v2752 = vand.u32 %v874, 4294901760
    %2753 = vmatpush1.msra.mxu0 %v2752
    %2754 = vmatprep.subr.mxu0 0.0
    %v2755 = vand.u32 %v873, 4294901760
    %2756 = vmatpush1.msra.mxu0 %v2755
    %2757 = vmatprep.subr.mxu0 0.0
    %v2758 = vand.u32 %v872, 4294901760
    %2759 = vmatpush1.msra.mxu0 %v2758
    %2760 = vmatprep.subr.mxu0 0.0
    %v2761 = vand.u32 %v871, 4294901760
    %2762 = vmatpush1.msra.mxu0 %v2761
    %2763 = vmatprep.subr.mxu0 0.0
    %v2764 = vand.u32 %v870, 4294901760
    %2765 = vmatpush1.msra.mxu0 %v2764
    %2766 = vmatprep.subr.mxu0 0.0
    %v2767 = vand.u32 %v869, 4294901760
    %2768 = vmatpush1.msra.mxu0 %v2767
    %2769 = vmatprep.subr.mxu0 0.0
    %v2770 = vand.u32 %v868, 4294901760
    %2771 = vmatpush1.msra.mxu0 %v2770
    %2772 = vmatprep.subr.mxu0 0.0
    %v2773 = vand.u32 %v867, 4294901760
    %2774 = vmatpush1.msra.mxu0 %v2773
    %2775 = vmatprep.subr.mxu0 0.0
    %2776 = vmatpush2.msra.mxu0 0.0
    %2777 = vmatprep.subr.mxu0 0.0
    %2778 = vmatpush2.msra.mxu0 0.0
    %2779 = vmatprep.subr.mxu0 0.0
    %2780 = vmatpush2.msra.mxu0 0.0
    %2781 = vmatprep.subr.mxu0 0.0
    %2782 = vmatpush2.msra.mxu0 0.0
    %2783 = vmatprep.subr.mxu0 0.0
    %2784 = vmatpush2.msra.mxu0 0.0
    %2785 = vmatprep.subr.mxu0 0.0
    %2786 = vmatpush2.msra.mxu0 0.0
    %2787 = vmatprep.subr.mxu0 0.0
    %2788 = vmatpush2.msra.mxu0 0.0
    %2789 = vmatprep.subr.mxu0 0.0
    %2790 = vmatpush2.msra.mxu0 0.0
    %2791 = vmatprep.subr.mxu0 0.0
    %2792 = vmatpush2.msra.mxu0 0.0
    %2793 = vmatprep.subr.mxu0 0.0
    %2794 = vmatpush2.msra.mxu0 0.0
    %2795 = vmatprep.subr.mxu0 0.0
    %2796 = vmatpush2.msra.mxu0 0.0
    %2797 = vmatprep.subr.mxu0 0.0
    %2798 = vmatpush2.msra.mxu0 0.0
    %2799 = vmatprep.subr.mxu0 0.0
    %2800 = vmatpush2.msra.mxu0 0.0
    %2801 = vmatprep.subr.mxu0 0.0
    %2802 = vmatpush2.msra.mxu0 0.0
    %2803 = vmatprep.subr.mxu0 0.0
    %2804 = vmatpush2.msra.mxu0 0.0
    %2805 = vmatprep.subr.mxu0 0.0
    %2806 = vmatpush2.msra.mxu0 0.0
    %2807 = vmatprep.mubr.f32.mxu0 0.0
    %v2808 = vand.u32 %v2171, 4294901760
    %2809 = vmatmul.mubr.f32.gmra.mxu0 %v2808
    %v2810 = vpop.f32.mrf.mxu0
    %v2811 = vadd.f32 %v2724, %v2810
    %v2812 = vpop.f32.mrf.mxu0
    %2813 = vdwg.mxu0
    %v2814 = vadd.f32 %v2172, %v2811
    %v2815 = vtanh.pop %v2814
    %v2816 = vld [vmem:[#allocation3 + $0x18] sm:$0xff]
    %2817 = vmatprep.subr.mxu0 0.0
    %v2818 = vand.u32 %v882, 4294901760
    %2819 = vmatpush1.msra.mxu0 %v2818
    %2820 = vmatprep.subr.mxu0 0.0
    %v2821 = vand.u32 %v881, 4294901760
    %2822 = vmatpush1.msra.mxu0 %v2821
    %2823 = vmatprep.subr.mxu0 0.0
    %v2824 = vand.u32 %v880, 4294901760
    %2825 = vmatpush1.msra.mxu0 %v2824
    %2826 = vmatprep.subr.mxu0 0.0
    %v2827 = vand.u32 %v879, 4294901760
    %2828 = vmatpush1.msra.mxu0 %v2827
    %2829 = vmatprep.subr.mxu0 0.0
    %v2830 = vand.u32 %v878, 4294901760
    %2831 = vmatpush1.msra.mxu0 %v2830
    %2832 = vmatprep.subr.mxu0 0.0
    %v2833 = vand.u32 %v877, 4294901760
    %2834 = vmatpush1.msra.mxu0 %v2833
    %2835 = vmatprep.subr.mxu0 0.0
    %v2836 = vand.u32 %v876, 4294901760
    %2837 = vmatpush1.msra.mxu0 %v2836
    %2838 = vmatprep.subr.mxu0 0.0
    %v2839 = vand.u32 %v875, 4294901760
    %2840 = vmatpush1.msra.mxu0 %v2839
    %2841 = vmatprep.subr.mxu0 0.0
    %v2842 = vand.u32 %v874, 4294901760
    %2843 = vmatpush1.msra.mxu0 %v2842
    %2844 = vmatprep.subr.mxu0 0.0
    %v2845 = vand.u32 %v873, 4294901760
    %2846 = vmatpush1.msra.mxu0 %v2845
    %2847 = vmatprep.subr.mxu0 0.0
    %v2848 = vand.u32 %v872, 4294901760
    %2849 = vmatpush1.msra.mxu0 %v2848
    %2850 = vmatprep.subr.mxu0 0.0
    %v2851 = vand.u32 %v871, 4294901760
    %2852 = vmatpush1.msra.mxu0 %v2851
    %2853 = vmatprep.subr.mxu0 0.0
    %v2854 = vand.u32 %v870, 4294901760
    %2855 = vmatpush1.msra.mxu0 %v2854
    %2856 = vmatprep.subr.mxu0 0.0
    %v2857 = vand.u32 %v869, 4294901760
    %2858 = vmatpush1.msra.mxu0 %v2857
    %2859 = vmatprep.subr.mxu0 0.0
    %v2860 = vand.u32 %v868, 4294901760
    %2861 = vmatpush1.msra.mxu0 %v2860
    %2862 = vmatprep.subr.mxu0 0.0
    %v2863 = vand.u32 %v867, 4294901760
    %2864 = vmatpush1.msra.mxu0 %v2863
    %2865 = vmatprep.subr.mxu0 0.0
    %2866 = vmatpush2.msra.mxu0 0.0
    %2867 = vmatprep.subr.mxu0 0.0
    %2868 = vmatpush2.msra.mxu0 0.0
    %2869 = vmatprep.subr.mxu0 0.0
    %2870 = vmatpush2.msra.mxu0 0.0
    %2871 = vmatprep.subr.mxu0 0.0
    %2872 = vmatpush2.msra.mxu0 0.0
    %2873 = vmatprep.subr.mxu0 0.0
    %2874 = vmatpush2.msra.mxu0 0.0
    %2875 = vmatprep.subr.mxu0 0.0
    %2876 = vmatpush2.msra.mxu0 0.0
    %2877 = vmatprep.subr.mxu0 0.0
    %2878 = vmatpush2.msra.mxu0 0.0
    %2879 = vmatprep.subr.mxu0 0.0
    %2880 = vmatpush2.msra.mxu0 0.0
    %2881 = vmatprep.subr.mxu0 0.0
    %2882 = vmatpush2.msra.mxu0 0.0
    %2883 = vmatprep.subr.mxu0 0.0
    %2884 = vmatpush2.msra.mxu0 0.0
    %2885 = vmatprep.subr.mxu0 0.0
    %2886 = vmatpush2.msra.mxu0 0.0
    %2887 = vmatprep.subr.mxu0 0.0
    %2888 = vmatpush2.msra.mxu0 0.0
    %2889 = vmatprep.subr.mxu0 0.0
    %2890 = vmatpush2.msra.mxu0 0.0
    %2891 = vmatprep.subr.mxu0 0.0
    %2892 = vmatpush2.msra.mxu0 0.0
    %2893 = vmatprep.subr.mxu0 0.0
    %2894 = vmatpush2.msra.mxu0 0.0
    %2895 = vmatprep.subr.mxu0 0.0
    %2896 = vmatpush2.msra.mxu0 0.0
    %2897 = vmatprep.mubr.f32.mxu0 0.0
    %v2898 = vand.u32 %v2815, 4294901760
    %v2899 = vsub.f32 %v2815, %v2898
    %v2900 = vand.u32 %v2899, 4294901760
    %v2901 = vsub.f32 %v2899, %v2900
    %v2902 = vand.u32 %v2901, 4294901760
    %2903 = vmatmul.mubr.f32.gmra.mxu0 %v2902
    %v2904 = vpop.f32.mrf.mxu0
    %v2905 = vadd.f32 0.0, %v2904
    %v2906 = vpop.f32.mrf.mxu0
    %2907 = vdwg.mxu0
    %2908 = vmatprep.subr.mxu0 0.0
    %v2909 = vand.u32 %v882, 4294901760
    %v2910 = vsub.f32 %v882, %v2909
    %v2911 = vand.u32 %v2910, 4294901760
    %v2912 = vsub.f32 %v2910, %v2911
    %v2913 = vand.u32 %v2912, 4294901760
    %2914 = vmatpush1.msra.mxu0 %v2913
    %2915 = vmatprep.subr.mxu0 0.0
    %v2916 = vand.u32 %v881, 4294901760
    %v2917 = vsub.f32 %v881, %v2916
    %v2918 = vand.u32 %v2917, 4294901760
    %v2919 = vsub.f32 %v2917, %v2918
    %v2920 = vand.u32 %v2919, 4294901760
    %2921 = vmatpush1.msra.mxu0 %v2920
    %2922 = vmatprep.subr.mxu0 0.0
    %v2923 = vand.u32 %v880, 4294901760
    %v2924 = vsub.f32 %v880, %v2923
    %v2925 = vand.u32 %v2924, 4294901760
    %v2926 = vsub.f32 %v2924, %v2925
    %v2927 = vand.u32 %v2926, 4294901760
    %2928 = vmatpush1.msra.mxu0 %v2927
    %2929 = vmatprep.subr.mxu0 0.0
    %v2930 = vand.u32 %v879, 4294901760
    %v2931 = vsub.f32 %v879, %v2930
    %v2932 = vand.u32 %v2931, 4294901760
    %v2933 = vsub.f32 %v2931, %v2932
    %v2934 = vand.u32 %v2933, 4294901760
    %2935 = vmatpush1.msra.mxu0 %v2934
    %2936 = vmatprep.subr.mxu0 0.0
    %v2937 = vand.u32 %v878, 4294901760
    %v2938 = vsub.f32 %v878, %v2937
    %v2939 = vand.u32 %v2938, 4294901760
    %v2940 = vsub.f32 %v2938, %v2939
    %v2941 = vand.u32 %v2940, 4294901760
    %2942 = vmatpush1.msra.mxu0 %v2941
    %2943 = vmatprep.subr.mxu0 0.0
    %v2944 = vand.u32 %v877, 4294901760
    %v2945 = vsub.f32 %v877, %v2944
    %v2946 = vand.u32 %v2945, 4294901760
    %v2947 = vsub.f32 %v2945, %v2946
    %v2948 = vand.u32 %v2947, 4294901760
    %2949 = vmatpush1.msra.mxu0 %v2948
    %2950 = vmatprep.subr.mxu0 0.0
    %v2951 = vand.u32 %v876, 4294901760
    %v2952 = vsub.f32 %v876, %v2951
    %v2953 = vand.u32 %v2952, 4294901760
    %v2954 = vsub.f32 %v2952, %v2953
    %v2955 = vand.u32 %v2954, 4294901760
    %2956 = vmatpush1.msra.mxu0 %v2955
    %2957 = vmatprep.subr.mxu0 0.0
    %v2958 = vand.u32 %v875, 4294901760
    %v2959 = vsub.f32 %v875, %v2958
    %v2960 = vand.u32 %v2959, 4294901760
    %v2961 = vsub.f32 %v2959, %v2960
    %v2962 = vand.u32 %v2961, 4294901760
    %2963 = vmatpush1.msra.mxu0 %v2962
    %2964 = vmatprep.subr.mxu0 0.0
    %v2965 = vand.u32 %v874, 4294901760
    %v2966 = vsub.f32 %v874, %v2965
    %v2967 = vand.u32 %v2966, 4294901760
    %v2968 = vsub.f32 %v2966, %v2967
    %v2969 = vand.u32 %v2968, 4294901760
    %2970 = vmatpush1.msra.mxu0 %v2969
    %2971 = vmatprep.subr.mxu0 0.0
    %v2972 = vand.u32 %v873, 4294901760
    %v2973 = vsub.f32 %v873, %v2972
    %v2974 = vand.u32 %v2973, 4294901760
    %v2975 = vsub.f32 %v2973, %v2974
    %v2976 = vand.u32 %v2975, 4294901760
    %2977 = vmatpush1.msra.mxu0 %v2976
    %2978 = vmatprep.subr.mxu0 0.0
    %v2979 = vand.u32 %v872, 4294901760
    %v2980 = vsub.f32 %v872, %v2979
    %v2981 = vand.u32 %v2980, 4294901760
    %v2982 = vsub.f32 %v2980, %v2981
    %v2983 = vand.u32 %v2982, 4294901760
    %2984 = vmatpush1.msra.mxu0 %v2983
    %2985 = vmatprep.subr.mxu0 0.0
    %v2986 = vand.u32 %v871, 4294901760
    %v2987 = vsub.f32 %v871, %v2986
    %v2988 = vand.u32 %v2987, 4294901760
    %v2989 = vsub.f32 %v2987, %v2988
    %v2990 = vand.u32 %v2989, 4294901760
    %2991 = vmatpush1.msra.mxu0 %v2990
    %2992 = vmatprep.subr.mxu0 0.0
    %v2993 = vand.u32 %v870, 4294901760
    %v2994 = vsub.f32 %v870, %v2993
    %v2995 = vand.u32 %v2994, 4294901760
    %v2996 = vsub.f32 %v2994, %v2995
    %v2997 = vand.u32 %v2996, 4294901760
    %2998 = vmatpush1.msra.mxu0 %v2997
    %2999 = vmatprep.subr.mxu0 0.0
    %v3000 = vand.u32 %v869, 4294901760
    %v3001 = vsub.f32 %v869, %v3000
    %v3002 = vand.u32 %v3001, 4294901760
    %v3003 = vsub.f32 %v3001, %v3002
    %v3004 = vand.u32 %v3003, 4294901760
    %3005 = vmatpush1.msra.mxu0 %v3004
    %3006 = vmatprep.subr.mxu0 0.0
    %v3007 = vand.u32 %v868, 4294901760
    %v3008 = vsub.f32 %v868, %v3007
    %v3009 = vand.u32 %v3008, 4294901760
    %v3010 = vsub.f32 %v3008, %v3009
    %v3011 = vand.u32 %v3010, 4294901760
    %3012 = vmatpush1.msra.mxu0 %v3011
    %3013 = vmatprep.subr.mxu0 0.0
    %v3014 = vand.u32 %v867, 4294901760
    %v3015 = vsub.f32 %v867, %v3014
    %v3016 = vand.u32 %v3015, 4294901760
    %v3017 = vsub.f32 %v3015, %v3016
    %v3018 = vand.u32 %v3017, 4294901760
    %3019 = vmatpush1.msra.mxu0 %v3018
    %3020 = vmatprep.subr.mxu0 0.0
    %3021 = vmatpush2.msra.mxu0 0.0
    %3022 = vmatprep.subr.mxu0 0.0
    %3023 = vmatpush2.msra.mxu0 0.0
    %3024 = vmatprep.subr.mxu0 0.0
    %3025 = vmatpush2.msra.mxu0 0.0
    %3026 = vmatprep.subr.mxu0 0.0
    %3027 = vmatpush2.msra.mxu0 0.0
    %3028 = vmatprep.subr.mxu0 0.0
    %3029 = vmatpush2.msra.mxu0 0.0
    %3030 = vmatprep.subr.mxu0 0.0
    %3031 = vmatpush2.msra.mxu0 0.0
    %3032 = vmatprep.subr.mxu0 0.0
    %3033 = vmatpush2.msra.mxu0 0.0
    %3034 = vmatprep.subr.mxu0 0.0
    %3035 = vmatpush2.msra.mxu0 0.0
    %3036 = vmatprep.subr.mxu0 0.0
    %3037 = vmatpush2.msra.mxu0 0.0
    %3038 = vmatprep.subr.mxu0 0.0
    %3039 = vmatpush2.msra.mxu0 0.0
    %3040 = vmatprep.subr.mxu0 0.0
    %3041 = vmatpush2.msra.mxu0 0.0
    %3042 = vmatprep.subr.mxu0 0.0
    %3043 = vmatpush2.msra.mxu0 0.0
    %3044 = vmatprep.subr.mxu0 0.0
    %3045 = vmatpush2.msra.mxu0 0.0
    %3046 = vmatprep.subr.mxu0 0.0
    %3047 = vmatpush2.msra.mxu0 0.0
    %3048 = vmatprep.subr.mxu0 0.0
    %3049 = vmatpush2.msra.mxu0 0.0
    %3050 = vmatprep.subr.mxu0 0.0
    %3051 = vmatpush2.msra.mxu0 0.0
    %3052 = vmatprep.mubr.f32.mxu0 0.0
    %v3053 = vand.u32 %v2815, 4294901760
    %3054 = vmatmul.mubr.f32.gmra.mxu0 %v3053
    %v3055 = vpop.f32.mrf.mxu0
    %v3056 = vadd.f32 %v2905, %v3055
    %v3057 = vpop.f32.mrf.mxu0
    %3058 = vdwg.mxu0
    %3059 = vmatprep.subr.mxu0 0.0
    %v3060 = vand.u32 %v882, 4294901760
    %v3061 = vsub.f32 %v882, %v3060
    %3062 = vmatpush1.msra.mxu0 %v3061
    %3063 = vmatprep.subr.mxu0 0.0
    %v3064 = vand.u32 %v881, 4294901760
    %v3065 = vsub.f32 %v881, %v3064
    %3066 = vmatpush1.msra.mxu0 %v3065
    %3067 = vmatprep.subr.mxu0 0.0
    %v3068 = vand.u32 %v880, 4294901760
    %v3069 = vsub.f32 %v880, %v3068
    %3070 = vmatpush1.msra.mxu0 %v3069
    %3071 = vmatprep.subr.mxu0 0.0
    %v3072 = vand.u32 %v879, 4294901760
    %v3073 = vsub.f32 %v879, %v3072
    %3074 = vmatpush1.msra.mxu0 %v3073
    %3075 = vmatprep.subr.mxu0 0.0
    %v3076 = vand.u32 %v878, 4294901760
    %v3077 = vsub.f32 %v878, %v3076
    %3078 = vmatpush1.msra.mxu0 %v3077
    %3079 = vmatprep.subr.mxu0 0.0
    %v3080 = vand.u32 %v877, 4294901760
    %v3081 = vsub.f32 %v877, %v3080
    %3082 = vmatpush1.msra.mxu0 %v3081
    %3083 = vmatprep.subr.mxu0 0.0
    %v3084 = vand.u32 %v876, 4294901760
    %v3085 = vsub.f32 %v876, %v3084
    %3086 = vmatpush1.msra.mxu0 %v3085
    %3087 = vmatprep.subr.mxu0 0.0
    %v3088 = vand.u32 %v875, 4294901760
    %v3089 = vsub.f32 %v875, %v3088
    %3090 = vmatpush1.msra.mxu0 %v3089
    %3091 = vmatprep.subr.mxu0 0.0
    %v3092 = vand.u32 %v874, 4294901760
    %v3093 = vsub.f32 %v874, %v3092
    %3094 = vmatpush1.msra.mxu0 %v3093
    %3095 = vmatprep.subr.mxu0 0.0
    %v3096 = vand.u32 %v873, 4294901760
    %v3097 = vsub.f32 %v873, %v3096
    %3098 = vmatpush1.msra.mxu0 %v3097
    %3099 = vmatprep.subr.mxu0 0.0
    %v3100 = vand.u32 %v872, 4294901760
    %v3101 = vsub.f32 %v872, %v3100
    %3102 = vmatpush1.msra.mxu0 %v3101
    %3103 = vmatprep.subr.mxu0 0.0
    %v3104 = vand.u32 %v871, 4294901760
    %v3105 = vsub.f32 %v871, %v3104
    %3106 = vmatpush1.msra.mxu0 %v3105
    %3107 = vmatprep.subr.mxu0 0.0
    %v3108 = vand.u32 %v870, 4294901760
    %v3109 = vsub.f32 %v870, %v3108
    %3110 = vmatpush1.msra.mxu0 %v3109
    %3111 = vmatprep.subr.mxu0 0.0
    %v3112 = vand.u32 %v869, 4294901760
    %v3113 = vsub.f32 %v869, %v3112
    %3114 = vmatpush1.msra.mxu0 %v3113
    %3115 = vmatprep.subr.mxu0 0.0
    %v3116 = vand.u32 %v868, 4294901760
    %v3117 = vsub.f32 %v868, %v3116
    %3118 = vmatpush1.msra.mxu0 %v3117
    %3119 = vmatprep.subr.mxu0 0.0
    %v3120 = vand.u32 %v867, 4294901760
    %v3121 = vsub.f32 %v867, %v3120
    %3122 = vmatpush1.msra.mxu0 %v3121
    %3123 = vmatprep.subr.mxu0 0.0
    %3124 = vmatpush2.msra.mxu0 0.0
    %3125 = vmatprep.subr.mxu0 0.0
    %3126 = vmatpush2.msra.mxu0 0.0
    %3127 = vmatprep.subr.mxu0 0.0
    %3128 = vmatpush2.msra.mxu0 0.0
    %3129 = vmatprep.subr.mxu0 0.0
    %3130 = vmatpush2.msra.mxu0 0.0
    %3131 = vmatprep.subr.mxu0 0.0
    %3132 = vmatpush2.msra.mxu0 0.0
    %3133 = vmatprep.subr.mxu0 0.0
    %3134 = vmatpush2.msra.mxu0 0.0
    %3135 = vmatprep.subr.mxu0 0.0
    %3136 = vmatpush2.msra.mxu0 0.0
    %3137 = vmatprep.subr.mxu0 0.0
    %3138 = vmatpush2.msra.mxu0 0.0
    %3139 = vmatprep.subr.mxu0 0.0
    %3140 = vmatpush2.msra.mxu0 0.0
    %3141 = vmatprep.subr.mxu0 0.0
    %3142 = vmatpush2.msra.mxu0 0.0
    %3143 = vmatprep.subr.mxu0 0.0
    %3144 = vmatpush2.msra.mxu0 0.0
    %3145 = vmatprep.subr.mxu0 0.0
    %3146 = vmatpush2.msra.mxu0 0.0
    %3147 = vmatprep.subr.mxu0 0.0
    %3148 = vmatpush2.msra.mxu0 0.0
    %3149 = vmatprep.subr.mxu0 0.0
    %3150 = vmatpush2.msra.mxu0 0.0
    %3151 = vmatprep.subr.mxu0 0.0
    %3152 = vmatpush2.msra.mxu0 0.0
    %3153 = vmatprep.subr.mxu0 0.0
    %3154 = vmatpush2.msra.mxu0 0.0
    %3155 = vmatprep.mubr.f32.mxu0 0.0
    %v3156 = vand.u32 %v2815, 4294901760
    %v3157 = vsub.f32 %v2815, %v3156
    %3158 = vmatmul.mubr.f32.gmra.mxu0 %v3157
    %v3159 = vpop.f32.mrf.mxu0
    %v3160 = vadd.f32 %v3056, %v3159
    %v3161 = vpop.f32.mrf.mxu0
    %3162 = vdwg.mxu0
    %3163 = vmatprep.subr.mxu0 0.0
    %v3164 = vand.u32 %v882, 4294901760
    %3165 = vmatpush1.msra.mxu0 %v3164
    %3166 = vmatprep.subr.mxu0 0.0
    %v3167 = vand.u32 %v881, 4294901760
    %3168 = vmatpush1.msra.mxu0 %v3167
    %3169 = vmatprep.subr.mxu0 0.0
    %v3170 = vand.u32 %v880, 4294901760
    %3171 = vmatpush1.msra.mxu0 %v3170
    %3172 = vmatprep.subr.mxu0 0.0
    %v3173 = vand.u32 %v879, 4294901760
    %3174 = vmatpush1.msra.mxu0 %v3173
    %3175 = vmatprep.subr.mxu0 0.0
    %v3176 = vand.u32 %v878, 4294901760
    %3177 = vmatpush1.msra.mxu0 %v3176
    %3178 = vmatprep.subr.mxu0 0.0
    %v3179 = vand.u32 %v877, 4294901760
    %3180 = vmatpush1.msra.mxu0 %v3179
    %3181 = vmatprep.subr.mxu0 0.0
    %v3182 = vand.u32 %v876, 4294901760
    %3183 = vmatpush1.msra.mxu0 %v3182
    %3184 = vmatprep.subr.mxu0 0.0
    %v3185 = vand.u32 %v875, 4294901760
    %3186 = vmatpush1.msra.mxu0 %v3185
    %3187 = vmatprep.subr.mxu0 0.0
    %v3188 = vand.u32 %v874, 4294901760
    %3189 = vmatpush1.msra.mxu0 %v3188
    %3190 = vmatprep.subr.mxu0 0.0
    %v3191 = vand.u32 %v873, 4294901760
    %3192 = vmatpush1.msra.mxu0 %v3191
    %3193 = vmatprep.subr.mxu0 0.0
    %v3194 = vand.u32 %v872, 4294901760
    %3195 = vmatpush1.msra.mxu0 %v3194
    %3196 = vmatprep.subr.mxu0 0.0
    %v3197 = vand.u32 %v871, 4294901760
    %3198 = vmatpush1.msra.mxu0 %v3197
    %3199 = vmatprep.subr.mxu0 0.0
    %v3200 = vand.u32 %v870, 4294901760
    %3201 = vmatpush1.msra.mxu0 %v3200
    %3202 = vmatprep.subr.mxu0 0.0
    %v3203 = vand.u32 %v869, 4294901760
    %3204 = vmatpush1.msra.mxu0 %v3203
    %3205 = vmatprep.subr.mxu0 0.0
    %v3206 = vand.u32 %v868, 4294901760
    %3207 = vmatpush1.msra.mxu0 %v3206
    %3208 = vmatprep.subr.mxu0 0.0
    %v3209 = vand.u32 %v867, 4294901760
    %3210 = vmatpush1.msra.mxu0 %v3209
    %3211 = vmatprep.subr.mxu0 0.0
    %3212 = vmatpush2.msra.mxu0 0.0
    %3213 = vmatprep.subr.mxu0 0.0
    %3214 = vmatpush2.msra.mxu0 0.0
    %3215 = vmatprep.subr.mxu0 0.0
    %3216 = vmatpush2.msra.mxu0 0.0
    %3217 = vmatprep.subr.mxu0 0.0
    %3218 = vmatpush2.msra.mxu0 0.0
    %3219 = vmatprep.subr.mxu0 0.0
    %3220 = vmatpush2.msra.mxu0 0.0
    %3221 = vmatprep.subr.mxu0 0.0
    %3222 = vmatpush2.msra.mxu0 0.0
    %3223 = vmatprep.subr.mxu0 0.0
    %3224 = vmatpush2.msra.mxu0 0.0
    %3225 = vmatprep.subr.mxu0 0.0
    %3226 = vmatpush2.msra.mxu0 0.0
    %3227 = vmatprep.subr.mxu0 0.0
    %3228 = vmatpush2.msra.mxu0 0.0
    %3229 = vmatprep.subr.mxu0 0.0
    %3230 = vmatpush2.msra.mxu0 0.0
    %3231 = vmatprep.subr.mxu0 0.0
    %3232 = vmatpush2.msra.mxu0 0.0
    %3233 = vmatprep.subr.mxu0 0.0
    %3234 = vmatpush2.msra.mxu0 0.0
    %3235 = vmatprep.subr.mxu0 0.0
    %3236 = vmatpush2.msra.mxu0 0.0
    %3237 = vmatprep.subr.mxu0 0.0
    %3238 = vmatpush2.msra.mxu0 0.0
    %3239 = vmatprep.subr.mxu0 0.0
    %3240 = vmatpush2.msra.mxu0 0.0
    %3241 = vmatprep.subr.mxu0 0.0
    %3242 = vmatpush2.msra.mxu0 0.0
    %3243 = vmatprep.mubr.f32.mxu0 0.0
    %v3244 = vand.u32 %v2815, 4294901760
    %v3245 = vsub.f32 %v2815, %v3244
    %v3246 = vand.u32 %v3245, 4294901760
    %3247 = vmatmul.mubr.f32.gmra.mxu0 %v3246
    %v3248 = vpop.f32.mrf.mxu0
    %v3249 = vadd.f32 %v3160, %v3248
    %v3250 = vpop.f32.mrf.mxu0
    %3251 = vdwg.mxu0
    %3252 = vmatprep.subr.mxu0 0.0
    %v3253 = vand.u32 %v882, 4294901760
    %v3254 = vsub.f32 %v882, %v3253
    %v3255 = vand.u32 %v3254, 4294901760
    %3256 = vmatpush1.msra.mxu0 %v3255
    %3257 = vmatprep.subr.mxu0 0.0
    %v3258 = vand.u32 %v881, 4294901760
    %v3259 = vsub.f32 %v881, %v3258
    %v3260 = vand.u32 %v3259, 4294901760
    %3261 = vmatpush1.msra.mxu0 %v3260
    %3262 = vmatprep.subr.mxu0 0.0
    %v3263 = vand.u32 %v880, 4294901760
    %v3264 = vsub.f32 %v880, %v3263
    %v3265 = vand.u32 %v3264, 4294901760
    %3266 = vmatpush1.msra.mxu0 %v3265
    %3267 = vmatprep.subr.mxu0 0.0
    %v3268 = vand.u32 %v879, 4294901760
    %v3269 = vsub.f32 %v879, %v3268
    %v3270 = vand.u32 %v3269, 4294901760
    %3271 = vmatpush1.msra.mxu0 %v3270
    %3272 = vmatprep.subr.mxu0 0.0
    %v3273 = vand.u32 %v878, 4294901760
    %v3274 = vsub.f32 %v878, %v3273
    %v3275 = vand.u32 %v3274, 4294901760
    %3276 = vmatpush1.msra.mxu0 %v3275
    %3277 = vmatprep.subr.mxu0 0.0
    %v3278 = vand.u32 %v877, 4294901760
    %v3279 = vsub.f32 %v877, %v3278
    %v3280 = vand.u32 %v3279, 4294901760
    %3281 = vmatpush1.msra.mxu0 %v3280
    %3282 = vmatprep.subr.mxu0 0.0
    %v3283 = vand.u32 %v876, 4294901760
    %v3284 = vsub.f32 %v876, %v3283
    %v3285 = vand.u32 %v3284, 4294901760
    %3286 = vmatpush1.msra.mxu0 %v3285
    %3287 = vmatprep.subr.mxu0 0.0
    %v3288 = vand.u32 %v875, 4294901760
    %v3289 = vsub.f32 %v875, %v3288
    %v3290 = vand.u32 %v3289, 4294901760
    %3291 = vmatpush1.msra.mxu0 %v3290
    %3292 = vmatprep.subr.mxu0 0.0
    %v3293 = vand.u32 %v874, 4294901760
    %v3294 = vsub.f32 %v874, %v3293
    %v3295 = vand.u32 %v3294, 4294901760
    %3296 = vmatpush1.msra.mxu0 %v3295
    %3297 = vmatprep.subr.mxu0 0.0
    %v3298 = vand.u32 %v873, 4294901760
    %v3299 = vsub.f32 %v873, %v3298
    %v3300 = vand.u32 %v3299, 4294901760
    %3301 = vmatpush1.msra.mxu0 %v3300
    %3302 = vmatprep.subr.mxu0 0.0
    %v3303 = vand.u32 %v872, 4294901760
    %v3304 = vsub.f32 %v872, %v3303
    %v3305 = vand.u32 %v3304, 4294901760
    %3306 = vmatpush1.msra.mxu0 %v3305
    %3307 = vmatprep.subr.mxu0 0.0
    %v3308 = vand.u32 %v871, 4294901760
    %v3309 = vsub.f32 %v871, %v3308
    %v3310 = vand.u32 %v3309, 4294901760
    %3311 = vmatpush1.msra.mxu0 %v3310
    %3312 = vmatprep.subr.mxu0 0.0
    %v3313 = vand.u32 %v870, 4294901760
    %v3314 = vsub.f32 %v870, %v3313
    %v3315 = vand.u32 %v3314, 4294901760
    %3316 = vmatpush1.msra.mxu0 %v3315
    %3317 = vmatprep.subr.mxu0 0.0
    %v3318 = vand.u32 %v869, 4294901760
    %v3319 = vsub.f32 %v869, %v3318
    %v3320 = vand.u32 %v3319, 4294901760
    %3321 = vmatpush1.msra.mxu0 %v3320
    %3322 = vmatprep.subr.mxu0 0.0
    %v3323 = vand.u32 %v868, 4294901760
    %v3324 = vsub.f32 %v868, %v3323
    %v3325 = vand.u32 %v3324, 4294901760
    %3326 = vmatpush1.msra.mxu0 %v3325
    %3327 = vmatprep.subr.mxu0 0.0
    %v3328 = vand.u32 %v867, 4294901760
    %v3329 = vsub.f32 %v867, %v3328
    %v3330 = vand.u32 %v3329, 4294901760
    %3331 = vmatpush1.msra.mxu0 %v3330
    %3332 = vmatprep.subr.mxu0 0.0
    %3333 = vmatpush2.msra.mxu0 0.0
    %3334 = vmatprep.subr.mxu0 0.0
    %3335 = vmatpush2.msra.mxu0 0.0
    %3336 = vmatprep.subr.mxu0 0.0
    %3337 = vmatpush2.msra.mxu0 0.0
    %3338 = vmatprep.subr.mxu0 0.0
    %3339 = vmatpush2.msra.mxu0 0.0
    %3340 = vmatprep.subr.mxu0 0.0
    %3341 = vmatpush2.msra.mxu0 0.0
    %3342 = vmatprep.subr.mxu0 0.0
    %3343 = vmatpush2.msra.mxu0 0.0
    %3344 = vmatprep.subr.mxu0 0.0
    %3345 = vmatpush2.msra.mxu0 0.0
    %3346 = vmatprep.subr.mxu0 0.0
    %3347 = vmatpush2.msra.mxu0 0.0
    %3348 = vmatprep.subr.mxu0 0.0
    %3349 = vmatpush2.msra.mxu0 0.0
    %3350 = vmatprep.subr.mxu0 0.0
    %3351 = vmatpush2.msra.mxu0 0.0
    %3352 = vmatprep.subr.mxu0 0.0
    %3353 = vmatpush2.msra.mxu0 0.0
    %3354 = vmatprep.subr.mxu0 0.0
    %3355 = vmatpush2.msra.mxu0 0.0
    %3356 = vmatprep.subr.mxu0 0.0
    %3357 = vmatpush2.msra.mxu0 0.0
    %3358 = vmatprep.subr.mxu0 0.0
    %3359 = vmatpush2.msra.mxu0 0.0
    %3360 = vmatprep.subr.mxu0 0.0
    %3361 = vmatpush2.msra.mxu0 0.0
    %3362 = vmatprep.subr.mxu0 0.0
    %3363 = vmatpush2.msra.mxu0 0.0
    %3364 = vmatprep.mubr.f32.mxu0 0.0
    %v3365 = vand.u32 %v2815, 4294901760
    %3366 = vmatmul.mubr.f32.gmra.mxu0 %v3365
    %v3367 = vpop.f32.mrf.mxu0
    %v3368 = vadd.f32 %v3249, %v3367
    %v3369 = vpop.f32.mrf.mxu0
    %3370 = vdwg.mxu0
    %3371 = vmatprep.subr.mxu0 0.0
    %v3372 = vand.u32 %v882, 4294901760
    %3373 = vmatpush1.msra.mxu0 %v3372
    %3374 = vmatprep.subr.mxu0 0.0
    %v3375 = vand.u32 %v881, 4294901760
    %3376 = vmatpush1.msra.mxu0 %v3375
    %3377 = vmatprep.subr.mxu0 0.0
    %v3378 = vand.u32 %v880, 4294901760
    %3379 = vmatpush1.msra.mxu0 %v3378
    %3380 = vmatprep.subr.mxu0 0.0
    %v3381 = vand.u32 %v879, 4294901760
    %3382 = vmatpush1.msra.mxu0 %v3381
    %3383 = vmatprep.subr.mxu0 0.0
    %v3384 = vand.u32 %v878, 4294901760
    %3385 = vmatpush1.msra.mxu0 %v3384
    %3386 = vmatprep.subr.mxu0 0.0
    %v3387 = vand.u32 %v877, 4294901760
    %3388 = vmatpush1.msra.mxu0 %v3387
    %3389 = vmatprep.subr.mxu0 0.0
    %v3390 = vand.u32 %v876, 4294901760
    %3391 = vmatpush1.msra.mxu0 %v3390
    %3392 = vmatprep.subr.mxu0 0.0
    %v3393 = vand.u32 %v875, 4294901760
    %3394 = vmatpush1.msra.mxu0 %v3393
    %3395 = vmatprep.subr.mxu0 0.0
    %v3396 = vand.u32 %v874, 4294901760
    %3397 = vmatpush1.msra.mxu0 %v3396
    %3398 = vmatprep.subr.mxu0 0.0
    %v3399 = vand.u32 %v873, 4294901760
    %3400 = vmatpush1.msra.mxu0 %v3399
    %3401 = vmatprep.subr.mxu0 0.0
    %v3402 = vand.u32 %v872, 4294901760
    %3403 = vmatpush1.msra.mxu0 %v3402
    %3404 = vmatprep.subr.mxu0 0.0
    %v3405 = vand.u32 %v871, 4294901760
    %3406 = vmatpush1.msra.mxu0 %v3405
    %3407 = vmatprep.subr.mxu0 0.0
    %v3408 = vand.u32 %v870, 4294901760
    %3409 = vmatpush1.msra.mxu0 %v3408
    %3410 = vmatprep.subr.mxu0 0.0
    %v3411 = vand.u32 %v869, 4294901760
    %3412 = vmatpush1.msra.mxu0 %v3411
    %3413 = vmatprep.subr.mxu0 0.0
    %v3414 = vand.u32 %v868, 4294901760
    %3415 = vmatpush1.msra.mxu0 %v3414
    %3416 = vmatprep.subr.mxu0 0.0
    %v3417 = vand.u32 %v867, 4294901760
    %3418 = vmatpush1.msra.mxu0 %v3417
    %3419 = vmatprep.subr.mxu0 0.0
    %3420 = vmatpush2.msra.mxu0 0.0
    %3421 = vmatprep.subr.mxu0 0.0
    %3422 = vmatpush2.msra.mxu0 0.0
    %3423 = vmatprep.subr.mxu0 0.0
    %3424 = vmatpush2.msra.mxu0 0.0
    %3425 = vmatprep.subr.mxu0 0.0
    %3426 = vmatpush2.msra.mxu0 0.0
    %3427 = vmatprep.subr.mxu0 0.0
    %3428 = vmatpush2.msra.mxu0 0.0
    %3429 = vmatprep.subr.mxu0 0.0
    %3430 = vmatpush2.msra.mxu0 0.0
    %3431 = vmatprep.subr.mxu0 0.0
    %3432 = vmatpush2.msra.mxu0 0.0
    %3433 = vmatprep.subr.mxu0 0.0
    %3434 = vmatpush2.msra.mxu0 0.0
    %3435 = vmatprep.subr.mxu0 0.0
    %3436 = vmatpush2.msra.mxu0 0.0
    %3437 = vmatprep.subr.mxu0 0.0
    %3438 = vmatpush2.msra.mxu0 0.0
    %3439 = vmatprep.subr.mxu0 0.0
    %3440 = vmatpush2.msra.mxu0 0.0
    %3441 = vmatprep.subr.mxu0 0.0
    %3442 = vmatpush2.msra.mxu0 0.0
    %3443 = vmatprep.subr.mxu0 0.0
    %3444 = vmatpush2.msra.mxu0 0.0
    %3445 = vmatprep.subr.mxu0 0.0
    %3446 = vmatpush2.msra.mxu0 0.0
    %3447 = vmatprep.subr.mxu0 0.0
    %3448 = vmatpush2.msra.mxu0 0.0
    %3449 = vmatprep.subr.mxu0 0.0
    %3450 = vmatpush2.msra.mxu0 0.0
    %3451 = vmatprep.mubr.f32.mxu0 0.0
    %v3452 = vand.u32 %v2815, 4294901760
    %3453 = vmatmul.mubr.f32.gmra.mxu0 %v3452
    %v3454 = vpop.f32.mrf.mxu0
    %v3455 = vadd.f32 %v3368, %v3454
    %v3456 = vpop.f32.mrf.mxu0
    %3457 = vdwg.mxu0
    %v3458 = vadd.f32 %v2816, %v3455
    %v3459 = vtanh.pop %v3458
    %v3460 = vld [vmem:[#allocation3 + $0x20] sm:$0xff]
    %3461 = vmatprep.subr.mxu0 0.0
    %v3462 = vand.u32 %v882, 4294901760
    %3463 = vmatpush1.msra.mxu0 %v3462
    %3464 = vmatprep.subr.mxu0 0.0
    %v3465 = vand.u32 %v881, 4294901760
    %3466 = vmatpush1.msra.mxu0 %v3465
    %3467 = vmatprep.subr.mxu0 0.0
    %v3468 = vand.u32 %v880, 4294901760
    %3469 = vmatpush1.msra.mxu0 %v3468
    %3470 = vmatprep.subr.mxu0 0.0
    %v3471 = vand.u32 %v879, 4294901760
    %3472 = vmatpush1.msra.mxu0 %v3471
    %3473 = vmatprep.subr.mxu0 0.0
    %v3474 = vand.u32 %v878, 4294901760
    %3475 = vmatpush1.msra.mxu0 %v3474
    %3476 = vmatprep.subr.mxu0 0.0
    %v3477 = vand.u32 %v877, 4294901760
    %3478 = vmatpush1.msra.mxu0 %v3477
    %3479 = vmatprep.subr.mxu0 0.0
    %v3480 = vand.u32 %v876, 4294901760
    %3481 = vmatpush1.msra.mxu0 %v3480
    %3482 = vmatprep.subr.mxu0 0.0
    %v3483 = vand.u32 %v875, 4294901760
    %3484 = vmatpush1.msra.mxu0 %v3483
    %3485 = vmatprep.subr.mxu0 0.0
    %v3486 = vand.u32 %v874, 4294901760
    %3487 = vmatpush1.msra.mxu0 %v3486
    %3488 = vmatprep.subr.mxu0 0.0
    %v3489 = vand.u32 %v873, 4294901760
    %3490 = vmatpush1.msra.mxu0 %v3489
    %3491 = vmatprep.subr.mxu0 0.0
    %v3492 = vand.u32 %v872, 4294901760
    %3493 = vmatpush1.msra.mxu0 %v3492
    %3494 = vmatprep.subr.mxu0 0.0
    %v3495 = vand.u32 %v871, 4294901760
    %3496 = vmatpush1.msra.mxu0 %v3495
    %3497 = vmatprep.subr.mxu0 0.0
    %v3498 = vand.u32 %v870, 4294901760
    %3499 = vmatpush1.msra.mxu0 %v3498
    %3500 = vmatprep.subr.mxu0 0.0
    %v3501 = vand.u32 %v869, 4294901760
    %3502 = vmatpush1.msra.mxu0 %v3501
    %3503 = vmatprep.subr.mxu0 0.0
    %v3504 = vand.u32 %v868, 4294901760
    %3505 = vmatpush1.msra.mxu0 %v3504
    %3506 = vmatprep.subr.mxu0 0.0
    %v3507 = vand.u32 %v867, 4294901760
    %3508 = vmatpush1.msra.mxu0 %v3507
    %3509 = vmatprep.subr.mxu0 0.0
    %3510 = vmatpush2.msra.mxu0 0.0
    %3511 = vmatprep.subr.mxu0 0.0
    %3512 = vmatpush2.msra.mxu0 0.0
    %3513 = vmatprep.subr.mxu0 0.0
    %3514 = vmatpush2.msra.mxu0 0.0
    %3515 = vmatprep.subr.mxu0 0.0
    %3516 = vmatpush2.msra.mxu0 0.0
    %3517 = vmatprep.subr.mxu0 0.0
    %3518 = vmatpush2.msra.mxu0 0.0
    %3519 = vmatprep.subr.mxu0 0.0
    %3520 = vmatpush2.msra.mxu0 0.0
    %3521 = vmatprep.subr.mxu0 0.0
    %3522 = vmatpush2.msra.mxu0 0.0
    %3523 = vmatprep.subr.mxu0 0.0
    %3524 = vmatpush2.msra.mxu0 0.0
    %3525 = vmatprep.subr.mxu0 0.0
    %3526 = vmatpush2.msra.mxu0 0.0
    %3527 = vmatprep.subr.mxu0 0.0
    %3528 = vmatpush2.msra.mxu0 0.0
    %3529 = vmatprep.subr.mxu0 0.0
    %3530 = vmatpush2.msra.mxu0 0.0
    %3531 = vmatprep.subr.mxu0 0.0
    %3532 = vmatpush2.msra.mxu0 0.0
    %3533 = vmatprep.subr.mxu0 0.0
    %3534 = vmatpush2.msra.mxu0 0.0
    %3535 = vmatprep.subr.mxu0 0.0
    %3536 = vmatpush2.msra.mxu0 0.0
    %3537 = vmatprep.subr.mxu0 0.0
    %3538 = vmatpush2.msra.mxu0 0.0
    %3539 = vmatprep.subr.mxu0 0.0
    %3540 = vmatpush2.msra.mxu0 0.0
    %3541 = vmatprep.mubr.f32.mxu0 0.0
    %v3542 = vand.u32 %v3459, 4294901760
    %v3543 = vsub.f32 %v3459, %v3542
    %v3544 = vand.u32 %v3543, 4294901760
    %v3545 = vsub.f32 %v3543, %v3544
    %v3546 = vand.u32 %v3545, 4294901760
    %3547 = vmatmul.mubr.f32.gmra.mxu0 %v3546
    %v3548 = vpop.f32.mrf.mxu0
    %v3549 = vadd.f32 0.0, %v3548
    %v3550 = vpop.f32.mrf.mxu0
    %3551 = vdwg.mxu0
    %3552 = vmatprep.subr.mxu0 0.0
    %v3553 = vand.u32 %v882, 4294901760
    %v3554 = vsub.f32 %v882, %v3553
    %v3555 = vand.u32 %v3554, 4294901760
    %v3556 = vsub.f32 %v3554, %v3555
    %v3557 = vand.u32 %v3556, 4294901760
    %3558 = vmatpush1.msra.mxu0 %v3557
    %3559 = vmatprep.subr.mxu0 0.0
    %v3560 = vand.u32 %v881, 4294901760
    %v3561 = vsub.f32 %v881, %v3560
    %v3562 = vand.u32 %v3561, 4294901760
    %v3563 = vsub.f32 %v3561, %v3562
    %v3564 = vand.u32 %v3563, 4294901760
    %3565 = vmatpush1.msra.mxu0 %v3564
    %3566 = vmatprep.subr.mxu0 0.0
    %v3567 = vand.u32 %v880, 4294901760
    %v3568 = vsub.f32 %v880, %v3567
    %v3569 = vand.u32 %v3568, 4294901760
    %v3570 = vsub.f32 %v3568, %v3569
    %v3571 = vand.u32 %v3570, 4294901760
    %3572 = vmatpush1.msra.mxu0 %v3571
    %3573 = vmatprep.subr.mxu0 0.0
    %v3574 = vand.u32 %v879, 4294901760
    %v3575 = vsub.f32 %v879, %v3574
    %v3576 = vand.u32 %v3575, 4294901760
    %v3577 = vsub.f32 %v3575, %v3576
    %v3578 = vand.u32 %v3577, 4294901760
    %3579 = vmatpush1.msra.mxu0 %v3578
    %3580 = vmatprep.subr.mxu0 0.0
    %v3581 = vand.u32 %v878, 4294901760
    %v3582 = vsub.f32 %v878, %v3581
    %v3583 = vand.u32 %v3582, 4294901760
    %v3584 = vsub.f32 %v3582, %v3583
    %v3585 = vand.u32 %v3584, 4294901760
    %3586 = vmatpush1.msra.mxu0 %v3585
    %3587 = vmatprep.subr.mxu0 0.0
    %v3588 = vand.u32 %v877, 4294901760
    %v3589 = vsub.f32 %v877, %v3588
    %v3590 = vand.u32 %v3589, 4294901760
    %v3591 = vsub.f32 %v3589, %v3590
    %v3592 = vand.u32 %v3591, 4294901760
    %3593 = vmatpush1.msra.mxu0 %v3592
    %3594 = vmatprep.subr.mxu0 0.0
    %v3595 = vand.u32 %v876, 4294901760
    %v3596 = vsub.f32 %v876, %v3595
    %v3597 = vand.u32 %v3596, 4294901760
    %v3598 = vsub.f32 %v3596, %v3597
    %v3599 = vand.u32 %v3598, 4294901760
    %3600 = vmatpush1.msra.mxu0 %v3599
    %3601 = vmatprep.subr.mxu0 0.0
    %v3602 = vand.u32 %v875, 4294901760
    %v3603 = vsub.f32 %v875, %v3602
    %v3604 = vand.u32 %v3603, 4294901760
    %v3605 = vsub.f32 %v3603, %v3604
    %v3606 = vand.u32 %v3605, 4294901760
    %3607 = vmatpush1.msra.mxu0 %v3606
    %3608 = vmatprep.subr.mxu0 0.0
    %v3609 = vand.u32 %v874, 4294901760
    %v3610 = vsub.f32 %v874, %v3609
    %v3611 = vand.u32 %v3610, 4294901760
    %v3612 = vsub.f32 %v3610, %v3611
    %v3613 = vand.u32 %v3612, 4294901760
    %3614 = vmatpush1.msra.mxu0 %v3613
    %3615 = vmatprep.subr.mxu0 0.0
    %v3616 = vand.u32 %v873, 4294901760
    %v3617 = vsub.f32 %v873, %v3616
    %v3618 = vand.u32 %v3617, 4294901760
    %v3619 = vsub.f32 %v3617, %v3618
    %v3620 = vand.u32 %v3619, 4294901760
    %3621 = vmatpush1.msra.mxu0 %v3620
    %3622 = vmatprep.subr.mxu0 0.0
    %v3623 = vand.u32 %v872, 4294901760
    %v3624 = vsub.f32 %v872, %v3623
    %v3625 = vand.u32 %v3624, 4294901760
    %v3626 = vsub.f32 %v3624, %v3625
    %v3627 = vand.u32 %v3626, 4294901760
    %3628 = vmatpush1.msra.mxu0 %v3627
    %3629 = vmatprep.subr.mxu0 0.0
    %v3630 = vand.u32 %v871, 4294901760
    %v3631 = vsub.f32 %v871, %v3630
    %v3632 = vand.u32 %v3631, 4294901760
    %v3633 = vsub.f32 %v3631, %v3632
    %v3634 = vand.u32 %v3633, 4294901760
    %3635 = vmatpush1.msra.mxu0 %v3634
    %3636 = vmatprep.subr.mxu0 0.0
    %v3637 = vand.u32 %v870, 4294901760
    %v3638 = vsub.f32 %v870, %v3637
    %v3639 = vand.u32 %v3638, 4294901760
    %v3640 = vsub.f32 %v3638, %v3639
    %v3641 = vand.u32 %v3640, 4294901760
    %3642 = vmatpush1.msra.mxu0 %v3641
    %3643 = vmatprep.subr.mxu0 0.0
    %v3644 = vand.u32 %v869, 4294901760
    %v3645 = vsub.f32 %v869, %v3644
    %v3646 = vand.u32 %v3645, 4294901760
    %v3647 = vsub.f32 %v3645, %v3646
    %v3648 = vand.u32 %v3647, 4294901760
    %3649 = vmatpush1.msra.mxu0 %v3648
    %3650 = vmatprep.subr.mxu0 0.0
    %v3651 = vand.u32 %v868, 4294901760
    %v3652 = vsub.f32 %v868, %v3651
    %v3653 = vand.u32 %v3652, 4294901760
    %v3654 = vsub.f32 %v3652, %v3653
    %v3655 = vand.u32 %v3654, 4294901760
    %3656 = vmatpush1.msra.mxu0 %v3655
    %3657 = vmatprep.subr.mxu0 0.0
    %v3658 = vand.u32 %v867, 4294901760
    %v3659 = vsub.f32 %v867, %v3658
    %v3660 = vand.u32 %v3659, 4294901760
    %v3661 = vsub.f32 %v3659, %v3660
    %v3662 = vand.u32 %v3661, 4294901760
    %3663 = vmatpush1.msra.mxu0 %v3662
    %3664 = vmatprep.subr.mxu0 0.0
    %3665 = vmatpush2.msra.mxu0 0.0
    %3666 = vmatprep.subr.mxu0 0.0
    %3667 = vmatpush2.msra.mxu0 0.0
    %3668 = vmatprep.subr.mxu0 0.0
    %3669 = vmatpush2.msra.mxu0 0.0
    %3670 = vmatprep.subr.mxu0 0.0
    %3671 = vmatpush2.msra.mxu0 0.0
    %3672 = vmatprep.subr.mxu0 0.0
    %3673 = vmatpush2.msra.mxu0 0.0
    %3674 = vmatprep.subr.mxu0 0.0
    %3675 = vmatpush2.msra.mxu0 0.0
    %3676 = vmatprep.subr.mxu0 0.0
    %3677 = vmatpush2.msra.mxu0 0.0
    %3678 = vmatprep.subr.mxu0 0.0
    %3679 = vmatpush2.msra.mxu0 0.0
    %3680 = vmatprep.subr.mxu0 0.0
    %3681 = vmatpush2.msra.mxu0 0.0
    %3682 = vmatprep.subr.mxu0 0.0
    %3683 = vmatpush2.msra.mxu0 0.0
    %3684 = vmatprep.subr.mxu0 0.0
    %3685 = vmatpush2.msra.mxu0 0.0
    %3686 = vmatprep.subr.mxu0 0.0
    %3687 = vmatpush2.msra.mxu0 0.0
    %3688 = vmatprep.subr.mxu0 0.0
    %3689 = vmatpush2.msra.mxu0 0.0
    %3690 = vmatprep.subr.mxu0 0.0
    %3691 = vmatpush2.msra.mxu0 0.0
    %3692 = vmatprep.subr.mxu0 0.0
    %3693 = vmatpush2.msra.mxu0 0.0
    %3694 = vmatprep.subr.mxu0 0.0
    %3695 = vmatpush2.msra.mxu0 0.0
    %3696 = vmatprep.mubr.f32.mxu0 0.0
    %v3697 = vand.u32 %v3459, 4294901760
    %3698 = vmatmul.mubr.f32.gmra.mxu0 %v3697
    %v3699 = vpop.f32.mrf.mxu0
    %v3700 = vadd.f32 %v3549, %v3699
    %v3701 = vpop.f32.mrf.mxu0
    %3702 = vdwg.mxu0
    %3703 = vmatprep.subr.mxu0 0.0
    %v3704 = vand.u32 %v882, 4294901760
    %v3705 = vsub.f32 %v882, %v3704
    %3706 = vmatpush1.msra.mxu0 %v3705
    %3707 = vmatprep.subr.mxu0 0.0
    %v3708 = vand.u32 %v881, 4294901760
    %v3709 = vsub.f32 %v881, %v3708
    %3710 = vmatpush1.msra.mxu0 %v3709
    %3711 = vmatprep.subr.mxu0 0.0
    %v3712 = vand.u32 %v880, 4294901760
    %v3713 = vsub.f32 %v880, %v3712
    %3714 = vmatpush1.msra.mxu0 %v3713
    %3715 = vmatprep.subr.mxu0 0.0
    %v3716 = vand.u32 %v879, 4294901760
    %v3717 = vsub.f32 %v879, %v3716
    %3718 = vmatpush1.msra.mxu0 %v3717
    %3719 = vmatprep.subr.mxu0 0.0
    %v3720 = vand.u32 %v878, 4294901760
    %v3721 = vsub.f32 %v878, %v3720
    %3722 = vmatpush1.msra.mxu0 %v3721
    %3723 = vmatprep.subr.mxu0 0.0
    %v3724 = vand.u32 %v877, 4294901760
    %v3725 = vsub.f32 %v877, %v3724
    %3726 = vmatpush1.msra.mxu0 %v3725
    %3727 = vmatprep.subr.mxu0 0.0
    %v3728 = vand.u32 %v876, 4294901760
    %v3729 = vsub.f32 %v876, %v3728
    %3730 = vmatpush1.msra.mxu0 %v3729
    %3731 = vmatprep.subr.mxu0 0.0
    %v3732 = vand.u32 %v875, 4294901760
    %v3733 = vsub.f32 %v875, %v3732
    %3734 = vmatpush1.msra.mxu0 %v3733
    %3735 = vmatprep.subr.mxu0 0.0
    %v3736 = vand.u32 %v874, 4294901760
    %v3737 = vsub.f32 %v874, %v3736
    %3738 = vmatpush1.msra.mxu0 %v3737
    %3739 = vmatprep.subr.mxu0 0.0
    %v3740 = vand.u32 %v873, 4294901760
    %v3741 = vsub.f32 %v873, %v3740
    %3742 = vmatpush1.msra.mxu0 %v3741
    %3743 = vmatprep.subr.mxu0 0.0
    %v3744 = vand.u32 %v872, 4294901760
    %v3745 = vsub.f32 %v872, %v3744
    %3746 = vmatpush1.msra.mxu0 %v3745
    %3747 = vmatprep.subr.mxu0 0.0
    %v3748 = vand.u32 %v871, 4294901760
    %v3749 = vsub.f32 %v871, %v3748
    %3750 = vmatpush1.msra.mxu0 %v3749
    %3751 = vmatprep.subr.mxu0 0.0
    %v3752 = vand.u32 %v870, 4294901760
    %v3753 = vsub.f32 %v870, %v3752
    %3754 = vmatpush1.msra.mxu0 %v3753
    %3755 = vmatprep.subr.mxu0 0.0
    %v3756 = vand.u32 %v869, 4294901760
    %v3757 = vsub.f32 %v869, %v3756
    %3758 = vmatpush1.msra.mxu0 %v3757
    %3759 = vmatprep.subr.mxu0 0.0
    %v3760 = vand.u32 %v868, 4294901760
    %v3761 = vsub.f32 %v868, %v3760
    %3762 = vmatpush1.msra.mxu0 %v3761
    %3763 = vmatprep.subr.mxu0 0.0
    %v3764 = vand.u32 %v867, 4294901760
    %v3765 = vsub.f32 %v867, %v3764
    %3766 = vmatpush1.msra.mxu0 %v3765
    %3767 = vmatprep.subr.mxu0 0.0
    %3768 = vmatpush2.msra.mxu0 0.0
    %3769 = vmatprep.subr.mxu0 0.0
    %3770 = vmatpush2.msra.mxu0 0.0
    %3771 = vmatprep.subr.mxu0 0.0
    %3772 = vmatpush2.msra.mxu0 0.0
    %3773 = vmatprep.subr.mxu0 0.0
    %3774 = vmatpush2.msra.mxu0 0.0
    %3775 = vmatprep.subr.mxu0 0.0
    %3776 = vmatpush2.msra.mxu0 0.0
    %3777 = vmatprep.subr.mxu0 0.0
    %3778 = vmatpush2.msra.mxu0 0.0
    %3779 = vmatprep.subr.mxu0 0.0
    %3780 = vmatpush2.msra.mxu0 0.0
    %3781 = vmatprep.subr.mxu0 0.0
    %3782 = vmatpush2.msra.mxu0 0.0
    %3783 = vmatprep.subr.mxu0 0.0
    %3784 = vmatpush2.msra.mxu0 0.0
    %3785 = vmatprep.subr.mxu0 0.0
    %3786 = vmatpush2.msra.mxu0 0.0
    %3787 = vmatprep.subr.mxu0 0.0
    %3788 = vmatpush2.msra.mxu0 0.0
    %3789 = vmatprep.subr.mxu0 0.0
    %3790 = vmatpush2.msra.mxu0 0.0
    %3791 = vmatprep.subr.mxu0 0.0
    %3792 = vmatpush2.msra.mxu0 0.0
    %3793 = vmatprep.subr.mxu0 0.0
    %3794 = vmatpush2.msra.mxu0 0.0
    %3795 = vmatprep.subr.mxu0 0.0
    %3796 = vmatpush2.msra.mxu0 0.0
    %3797 = vmatprep.subr.mxu0 0.0
    %3798 = vmatpush2.msra.mxu0 0.0
    %3799 = vmatprep.mubr.f32.mxu0 0.0
    %v3800 = vand.u32 %v3459, 4294901760
    %v3801 = vsub.f32 %v3459, %v3800
    %3802 = vmatmul.mubr.f32.gmra.mxu0 %v3801
    %v3803 = vpop.f32.mrf.mxu0
    %v3804 = vadd.f32 %v3700, %v3803
    %v3805 = vpop.f32.mrf.mxu0
    %3806 = vdwg.mxu0
    %3807 = vmatprep.subr.mxu0 0.0
    %v3808 = vand.u32 %v882, 4294901760
    %3809 = vmatpush1.msra.mxu0 %v3808
    %3810 = vmatprep.subr.mxu0 0.0
    %v3811 = vand.u32 %v881, 4294901760
    %3812 = vmatpush1.msra.mxu0 %v3811
    %3813 = vmatprep.subr.mxu0 0.0
    %v3814 = vand.u32 %v880, 4294901760
    %3815 = vmatpush1.msra.mxu0 %v3814
    %3816 = vmatprep.subr.mxu0 0.0
    %v3817 = vand.u32 %v879, 4294901760
    %3818 = vmatpush1.msra.mxu0 %v3817
    %3819 = vmatprep.subr.mxu0 0.0
    %v3820 = vand.u32 %v878, 4294901760
    %3821 = vmatpush1.msra.mxu0 %v3820
    %3822 = vmatprep.subr.mxu0 0.0
    %v3823 = vand.u32 %v877, 4294901760
    %3824 = vmatpush1.msra.mxu0 %v3823
    %3825 = vmatprep.subr.mxu0 0.0
    %v3826 = vand.u32 %v876, 4294901760
    %3827 = vmatpush1.msra.mxu0 %v3826
    %3828 = vmatprep.subr.mxu0 0.0
    %v3829 = vand.u32 %v875, 4294901760
    %3830 = vmatpush1.msra.mxu0 %v3829
    %3831 = vmatprep.subr.mxu0 0.0
    %v3832 = vand.u32 %v874, 4294901760
    %3833 = vmatpush1.msra.mxu0 %v3832
    %3834 = vmatprep.subr.mxu0 0.0
    %v3835 = vand.u32 %v873, 4294901760
    %3836 = vmatpush1.msra.mxu0 %v3835
    %3837 = vmatprep.subr.mxu0 0.0
    %v3838 = vand.u32 %v872, 4294901760
    %3839 = vmatpush1.msra.mxu0 %v3838
    %3840 = vmatprep.subr.mxu0 0.0
    %v3841 = vand.u32 %v871, 4294901760
    %3842 = vmatpush1.msra.mxu0 %v3841
    %3843 = vmatprep.subr.mxu0 0.0
    %v3844 = vand.u32 %v870, 4294901760
    %3845 = vmatpush1.msra.mxu0 %v3844
    %3846 = vmatprep.subr.mxu0 0.0
    %v3847 = vand.u32 %v869, 4294901760
    %3848 = vmatpush1.msra.mxu0 %v3847
    %3849 = vmatprep.subr.mxu0 0.0
    %v3850 = vand.u32 %v868, 4294901760
    %3851 = vmatpush1.msra.mxu0 %v3850
    %3852 = vmatprep.subr.mxu0 0.0
    %v3853 = vand.u32 %v867, 4294901760
    %3854 = vmatpush1.msra.mxu0 %v3853
    %3855 = vmatprep.subr.mxu0 0.0
    %3856 = vmatpush2.msra.mxu0 0.0
    %3857 = vmatprep.subr.mxu0 0.0
    %3858 = vmatpush2.msra.mxu0 0.0
    %3859 = vmatprep.subr.mxu0 0.0
    %3860 = vmatpush2.msra.mxu0 0.0
    %3861 = vmatprep.subr.mxu0 0.0
    %3862 = vmatpush2.msra.mxu0 0.0
    %3863 = vmatprep.subr.mxu0 0.0
    %3864 = vmatpush2.msra.mxu0 0.0
    %3865 = vmatprep.subr.mxu0 0.0
    %3866 = vmatpush2.msra.mxu0 0.0
    %3867 = vmatprep.subr.mxu0 0.0
    %3868 = vmatpush2.msra.mxu0 0.0
    %3869 = vmatprep.subr.mxu0 0.0
    %3870 = vmatpush2.msra.mxu0 0.0
    %3871 = vmatprep.subr.mxu0 0.0
    %3872 = vmatpush2.msra.mxu0 0.0
    %3873 = vmatprep.subr.mxu0 0.0
    %3874 = vmatpush2.msra.mxu0 0.0
    %3875 = vmatprep.subr.mxu0 0.0
    %3876 = vmatpush2.msra.mxu0 0.0
    %3877 = vmatprep.subr.mxu0 0.0
    %3878 = vmatpush2.msra.mxu0 0.0
    %3879 = vmatprep.subr.mxu0 0.0
    %3880 = vmatpush2.msra.mxu0 0.0
    %3881 = vmatprep.subr.mxu0 0.0
    %3882 = vmatpush2.msra.mxu0 0.0
    %3883 = vmatprep.subr.mxu0 0.0
    %3884 = vmatpush2.msra.mxu0 0.0
    %3885 = vmatprep.subr.mxu0 0.0
    %3886 = vmatpush2.msra.mxu0 0.0
    %3887 = vmatprep.mubr.f32.mxu0 0.0
    %v3888 = vand.u32 %v3459, 4294901760
    %v3889 = vsub.f32 %v3459, %v3888
    %v3890 = vand.u32 %v3889, 4294901760
    %3891 = vmatmul.mubr.f32.gmra.mxu0 %v3890
    %v3892 = vpop.f32.mrf.mxu0
    %v3893 = vadd.f32 %v3804, %v3892
    %v3894 = vpop.f32.mrf.mxu0
    %3895 = vdwg.mxu0
    %3896 = vmatprep.subr.mxu0 0.0
    %v3897 = vand.u32 %v882, 4294901760
    %v3898 = vsub.f32 %v882, %v3897
    %v3899 = vand.u32 %v3898, 4294901760
    %3900 = vmatpush1.msra.mxu0 %v3899
    %3901 = vmatprep.subr.mxu0 0.0
    %v3902 = vand.u32 %v881, 4294901760
    %v3903 = vsub.f32 %v881, %v3902
    %v3904 = vand.u32 %v3903, 4294901760
    %3905 = vmatpush1.msra.mxu0 %v3904
    %3906 = vmatprep.subr.mxu0 0.0
    %v3907 = vand.u32 %v880, 4294901760
    %v3908 = vsub.f32 %v880, %v3907
    %v3909 = vand.u32 %v3908, 4294901760
    %3910 = vmatpush1.msra.mxu0 %v3909
    %3911 = vmatprep.subr.mxu0 0.0
    %v3912 = vand.u32 %v879, 4294901760
    %v3913 = vsub.f32 %v879, %v3912
    %v3914 = vand.u32 %v3913, 4294901760
    %3915 = vmatpush1.msra.mxu0 %v3914
    %3916 = vmatprep.subr.mxu0 0.0
    %v3917 = vand.u32 %v878, 4294901760
    %v3918 = vsub.f32 %v878, %v3917
    %v3919 = vand.u32 %v3918, 4294901760
    %3920 = vmatpush1.msra.mxu0 %v3919
    %3921 = vmatprep.subr.mxu0 0.0
    %v3922 = vand.u32 %v877, 4294901760
    %v3923 = vsub.f32 %v877, %v3922
    %v3924 = vand.u32 %v3923, 4294901760
    %3925 = vmatpush1.msra.mxu0 %v3924
    %3926 = vmatprep.subr.mxu0 0.0
    %v3927 = vand.u32 %v876, 4294901760
    %v3928 = vsub.f32 %v876, %v3927
    %v3929 = vand.u32 %v3928, 4294901760
    %3930 = vmatpush1.msra.mxu0 %v3929
    %3931 = vmatprep.subr.mxu0 0.0
    %v3932 = vand.u32 %v875, 4294901760
    %v3933 = vsub.f32 %v875, %v3932
    %v3934 = vand.u32 %v3933, 4294901760
    %3935 = vmatpush1.msra.mxu0 %v3934
    %3936 = vmatprep.subr.mxu0 0.0
    %v3937 = vand.u32 %v874, 4294901760
    %v3938 = vsub.f32 %v874, %v3937
    %v3939 = vand.u32 %v3938, 4294901760
    %3940 = vmatpush1.msra.mxu0 %v3939
    %3941 = vmatprep.subr.mxu0 0.0
    %v3942 = vand.u32 %v873, 4294901760
    %v3943 = vsub.f32 %v873, %v3942
    %v3944 = vand.u32 %v3943, 4294901760
    %3945 = vmatpush1.msra.mxu0 %v3944
    %3946 = vmatprep.subr.mxu0 0.0
    %v3947 = vand.u32 %v872, 4294901760
    %v3948 = vsub.f32 %v872, %v3947
    %v3949 = vand.u32 %v3948, 4294901760
    %3950 = vmatpush1.msra.mxu0 %v3949
    %3951 = vmatprep.subr.mxu0 0.0
    %v3952 = vand.u32 %v871, 4294901760
    %v3953 = vsub.f32 %v871, %v3952
    %v3954 = vand.u32 %v3953, 4294901760
    %3955 = vmatpush1.msra.mxu0 %v3954
    %3956 = vmatprep.subr.mxu0 0.0
    %v3957 = vand.u32 %v870, 4294901760
    %v3958 = vsub.f32 %v870, %v3957
    %v3959 = vand.u32 %v3958, 4294901760
    %3960 = vmatpush1.msra.mxu0 %v3959
    %3961 = vmatprep.subr.mxu0 0.0
    %v3962 = vand.u32 %v869, 4294901760
    %v3963 = vsub.f32 %v869, %v3962
    %v3964 = vand.u32 %v3963, 4294901760
    %3965 = vmatpush1.msra.mxu0 %v3964
    %3966 = vmatprep.subr.mxu0 0.0
    %v3967 = vand.u32 %v868, 4294901760
    %v3968 = vsub.f32 %v868, %v3967
    %v3969 = vand.u32 %v3968, 4294901760
    %3970 = vmatpush1.msra.mxu0 %v3969
    %3971 = vmatprep.subr.mxu0 0.0
    %v3972 = vand.u32 %v867, 4294901760
    %v3973 = vsub.f32 %v867, %v3972
    %v3974 = vand.u32 %v3973, 4294901760
    %3975 = vmatpush1.msra.mxu0 %v3974
    %3976 = vmatprep.subr.mxu0 0.0
    %3977 = vmatpush2.msra.mxu0 0.0
    %3978 = vmatprep.subr.mxu0 0.0
    %3979 = vmatpush2.msra.mxu0 0.0
    %3980 = vmatprep.subr.mxu0 0.0
    %3981 = vmatpush2.msra.mxu0 0.0
    %3982 = vmatprep.subr.mxu0 0.0
    %3983 = vmatpush2.msra.mxu0 0.0
    %3984 = vmatprep.subr.mxu0 0.0
    %3985 = vmatpush2.msra.mxu0 0.0
    %3986 = vmatprep.subr.mxu0 0.0
    %3987 = vmatpush2.msra.mxu0 0.0
    %3988 = vmatprep.subr.mxu0 0.0
    %3989 = vmatpush2.msra.mxu0 0.0
    %3990 = vmatprep.subr.mxu0 0.0
    %3991 = vmatpush2.msra.mxu0 0.0
    %3992 = vmatprep.subr.mxu0 0.0
    %3993 = vmatpush2.msra.mxu0 0.0
    %3994 = vmatprep.subr.mxu0 0.0
    %3995 = vmatpush2.msra.mxu0 0.0
    %3996 = vmatprep.subr.mxu0 0.0
    %3997 = vmatpush2.msra.mxu0 0.0
    %3998 = vmatprep.subr.mxu0 0.0
    %3999 = vmatpush2.msra.mxu0 0.0
    %4000 = vmatprep.subr.mxu0 0.0
    %4001 = vmatpush2.msra.mxu0 0.0
    %4002 = vmatprep.subr.mxu0 0.0
    %4003 = vmatpush2.msra.mxu0 0.0
    %4004 = vmatprep.subr.mxu0 0.0
    %4005 = vmatpush2.msra.mxu0 0.0
    %4006 = vmatprep.subr.mxu0 0.0
    %4007 = vmatpush2.msra.mxu0 0.0
    %4008 = vmatprep.mubr.f32.mxu0 0.0
    %v4009 = vand.u32 %v3459, 4294901760
    %4010 = vmatmul.mubr.f32.gmra.mxu0 %v4009
    %v4011 = vpop.f32.mrf.mxu0
    %v4012 = vadd.f32 %v3893, %v4011
    %v4013 = vpop.f32.mrf.mxu0
    %4014 = vdwg.mxu0
    %4015 = vmatprep.subr.mxu0 0.0
    %v4016 = vand.u32 %v882, 4294901760
    %4017 = vmatpush1.msra.mxu0 %v4016
    %4018 = vmatprep.subr.mxu0 0.0
    %v4019 = vand.u32 %v881, 4294901760
    %4020 = vmatpush1.msra.mxu0 %v4019
    %4021 = vmatprep.subr.mxu0 0.0
    %v4022 = vand.u32 %v880, 4294901760
    %4023 = vmatpush1.msra.mxu0 %v4022
    %4024 = vmatprep.subr.mxu0 0.0
    %v4025 = vand.u32 %v879, 4294901760
    %4026 = vmatpush1.msra.mxu0 %v4025
    %4027 = vmatprep.subr.mxu0 0.0
    %v4028 = vand.u32 %v878, 4294901760
    %4029 = vmatpush1.msra.mxu0 %v4028
    %4030 = vmatprep.subr.mxu0 0.0
    %v4031 = vand.u32 %v877, 4294901760
    %4032 = vmatpush1.msra.mxu0 %v4031
    %4033 = vmatprep.subr.mxu0 0.0
    %v4034 = vand.u32 %v876, 4294901760
    %4035 = vmatpush1.msra.mxu0 %v4034
    %4036 = vmatprep.subr.mxu0 0.0
    %v4037 = vand.u32 %v875, 4294901760
    %4038 = vmatpush1.msra.mxu0 %v4037
    %4039 = vmatprep.subr.mxu0 0.0
    %v4040 = vand.u32 %v874, 4294901760
    %4041 = vmatpush1.msra.mxu0 %v4040
    %4042 = vmatprep.subr.mxu0 0.0
    %v4043 = vand.u32 %v873, 4294901760
    %4044 = vmatpush1.msra.mxu0 %v4043
    %4045 = vmatprep.subr.mxu0 0.0
    %v4046 = vand.u32 %v872, 4294901760
    %4047 = vmatpush1.msra.mxu0 %v4046
    %4048 = vmatprep.subr.mxu0 0.0
    %v4049 = vand.u32 %v871, 4294901760
    %4050 = vmatpush1.msra.mxu0 %v4049
    %4051 = vmatprep.subr.mxu0 0.0
    %v4052 = vand.u32 %v870, 4294901760
    %4053 = vmatpush1.msra.mxu0 %v4052
    %4054 = vmatprep.subr.mxu0 0.0
    %v4055 = vand.u32 %v869, 4294901760
    %4056 = vmatpush1.msra.mxu0 %v4055
    %4057 = vmatprep.subr.mxu0 0.0
    %v4058 = vand.u32 %v868, 4294901760
    %4059 = vmatpush1.msra.mxu0 %v4058
    %4060 = vmatprep.subr.mxu0 0.0
    %v4061 = vand.u32 %v867, 4294901760
    %4062 = vmatpush1.msra.mxu0 %v4061
    %4063 = vmatprep.subr.mxu0 0.0
    %4064 = vmatpush2.msra.mxu0 0.0
    %4065 = vmatprep.subr.mxu0 0.0
    %4066 = vmatpush2.msra.mxu0 0.0
    %4067 = vmatprep.subr.mxu0 0.0
    %4068 = vmatpush2.msra.mxu0 0.0
    %4069 = vmatprep.subr.mxu0 0.0
    %4070 = vmatpush2.msra.mxu0 0.0
    %4071 = vmatprep.subr.mxu0 0.0
    %4072 = vmatpush2.msra.mxu0 0.0
    %4073 = vmatprep.subr.mxu0 0.0
    %4074 = vmatpush2.msra.mxu0 0.0
    %4075 = vmatprep.subr.mxu0 0.0
    %4076 = vmatpush2.msra.mxu0 0.0
    %4077 = vmatprep.subr.mxu0 0.0
    %4078 = vmatpush2.msra.mxu0 0.0
    %4079 = vmatprep.subr.mxu0 0.0
    %4080 = vmatpush2.msra.mxu0 0.0
    %4081 = vmatprep.subr.mxu0 0.0
    %4082 = vmatpush2.msra.mxu0 0.0
    %4083 = vmatprep.subr.mxu0 0.0
    %4084 = vmatpush2.msra.mxu0 0.0
    %4085 = vmatprep.subr.mxu0 0.0
    %4086 = vmatpush2.msra.mxu0 0.0
    %4087 = vmatprep.subr.mxu0 0.0
    %4088 = vmatpush2.msra.mxu0 0.0
    %4089 = vmatprep.subr.mxu0 0.0
    %4090 = vmatpush2.msra.mxu0 0.0
    %4091 = vmatprep.subr.mxu0 0.0
    %4092 = vmatpush2.msra.mxu0 0.0
    %4093 = vmatprep.subr.mxu0 0.0
    %4094 = vmatpush2.msra.mxu0 0.0
    %4095 = vmatprep.mubr.f32.mxu0 0.0
    %v4096 = vand.u32 %v3459, 4294901760
    %4097 = vmatmul.mubr.f32.gmra.mxu0 %v4096
    %v4098 = vpop.f32.mrf.mxu0
    %v4099 = vadd.f32 %v4012, %v4098
    %v4100 = vpop.f32.mrf.mxu0
    %4101 = vdwg.mxu0
    %v4102 = vadd.f32 %v3460, %v4099
    %v4103 = vtanh.pop %v4102
    %v4104 = vld [vmem:[#allocation3 + $0x28] sm:$0xff]
    %4105 = vmatprep.subr.mxu0 0.0
    %v4106 = vand.u32 %v882, 4294901760
    %4107 = vmatpush1.msra.mxu0 %v4106
    %4108 = vmatprep.subr.mxu0 0.0
    %v4109 = vand.u32 %v881, 4294901760
    %4110 = vmatpush1.msra.mxu0 %v4109
    %4111 = vmatprep.subr.mxu0 0.0
    %v4112 = vand.u32 %v880, 4294901760
    %4113 = vmatpush1.msra.mxu0 %v4112
    %4114 = vmatprep.subr.mxu0 0.0
    %v4115 = vand.u32 %v879, 4294901760
    %4116 = vmatpush1.msra.mxu0 %v4115
    %4117 = vmatprep.subr.mxu0 0.0
    %v4118 = vand.u32 %v878, 4294901760
    %4119 = vmatpush1.msra.mxu0 %v4118
    %4120 = vmatprep.subr.mxu0 0.0
    %v4121 = vand.u32 %v877, 4294901760
    %4122 = vmatpush1.msra.mxu0 %v4121
    %4123 = vmatprep.subr.mxu0 0.0
    %v4124 = vand.u32 %v876, 4294901760
    %4125 = vmatpush1.msra.mxu0 %v4124
    %4126 = vmatprep.subr.mxu0 0.0
    %v4127 = vand.u32 %v875, 4294901760
    %4128 = vmatpush1.msra.mxu0 %v4127
    %4129 = vmatprep.subr.mxu0 0.0
    %v4130 = vand.u32 %v874, 4294901760
    %4131 = vmatpush1.msra.mxu0 %v4130
    %4132 = vmatprep.subr.mxu0 0.0
    %v4133 = vand.u32 %v873, 4294901760
    %4134 = vmatpush1.msra.mxu0 %v4133
    %4135 = vmatprep.subr.mxu0 0.0
    %v4136 = vand.u32 %v872, 4294901760
    %4137 = vmatpush1.msra.mxu0 %v4136
    %4138 = vmatprep.subr.mxu0 0.0
    %v4139 = vand.u32 %v871, 4294901760
    %4140 = vmatpush1.msra.mxu0 %v4139
    %4141 = vmatprep.subr.mxu0 0.0
    %v4142 = vand.u32 %v870, 4294901760
    %4143 = vmatpush1.msra.mxu0 %v4142
    %4144 = vmatprep.subr.mxu0 0.0
    %v4145 = vand.u32 %v869, 4294901760
    %4146 = vmatpush1.msra.mxu0 %v4145
    %4147 = vmatprep.subr.mxu0 0.0
    %v4148 = vand.u32 %v868, 4294901760
    %4149 = vmatpush1.msra.mxu0 %v4148
    %4150 = vmatprep.subr.mxu0 0.0
    %v4151 = vand.u32 %v867, 4294901760
    %4152 = vmatpush1.msra.mxu0 %v4151
    %4153 = vmatprep.subr.mxu0 0.0
    %4154 = vmatpush2.msra.mxu0 0.0
    %4155 = vmatprep.subr.mxu0 0.0
    %4156 = vmatpush2.msra.mxu0 0.0
    %4157 = vmatprep.subr.mxu0 0.0
    %4158 = vmatpush2.msra.mxu0 0.0
    %4159 = vmatprep.subr.mxu0 0.0
    %4160 = vmatpush2.msra.mxu0 0.0
    %4161 = vmatprep.subr.mxu0 0.0
    %4162 = vmatpush2.msra.mxu0 0.0
    %4163 = vmatprep.subr.mxu0 0.0
    %4164 = vmatpush2.msra.mxu0 0.0
    %4165 = vmatprep.subr.mxu0 0.0
    %4166 = vmatpush2.msra.mxu0 0.0
    %4167 = vmatprep.subr.mxu0 0.0
    %4168 = vmatpush2.msra.mxu0 0.0
    %4169 = vmatprep.subr.mxu0 0.0
    %4170 = vmatpush2.msra.mxu0 0.0
    %4171 = vmatprep.subr.mxu0 0.0
    %4172 = vmatpush2.msra.mxu0 0.0
    %4173 = vmatprep.subr.mxu0 0.0
    %4174 = vmatpush2.msra.mxu0 0.0
    %4175 = vmatprep.subr.mxu0 0.0
    %4176 = vmatpush2.msra.mxu0 0.0
    %4177 = vmatprep.subr.mxu0 0.0
    %4178 = vmatpush2.msra.mxu0 0.0
    %4179 = vmatprep.subr.mxu0 0.0
    %4180 = vmatpush2.msra.mxu0 0.0
    %4181 = vmatprep.subr.mxu0 0.0
    %4182 = vmatpush2.msra.mxu0 0.0
    %4183 = vmatprep.subr.mxu0 0.0
    %4184 = vmatpush2.msra.mxu0 0.0
    %4185 = vmatprep.mubr.f32.mxu0 0.0
    %v4186 = vand.u32 %v4103, 4294901760
    %v4187 = vsub.f32 %v4103, %v4186
    %v4188 = vand.u32 %v4187, 4294901760
    %v4189 = vsub.f32 %v4187, %v4188
    %v4190 = vand.u32 %v4189, 4294901760
    %4191 = vmatmul.mubr.f32.gmra.mxu0 %v4190
    %v4192 = vpop.f32.mrf.mxu0
    %v4193 = vadd.f32 0.0, %v4192
    %v4194 = vpop.f32.mrf.mxu0
    %4195 = vdwg.mxu0
    %4196 = vmatprep.subr.mxu0 0.0
    %v4197 = vand.u32 %v882, 4294901760
    %v4198 = vsub.f32 %v882, %v4197
    %v4199 = vand.u32 %v4198, 4294901760
    %v4200 = vsub.f32 %v4198, %v4199
    %v4201 = vand.u32 %v4200, 4294901760
    %4202 = vmatpush1.msra.mxu0 %v4201
    %4203 = vmatprep.subr.mxu0 0.0
    %v4204 = vand.u32 %v881, 4294901760
    %v4205 = vsub.f32 %v881, %v4204
    %v4206 = vand.u32 %v4205, 4294901760
    %v4207 = vsub.f32 %v4205, %v4206
    %v4208 = vand.u32 %v4207, 4294901760
    %4209 = vmatpush1.msra.mxu0 %v4208
    %4210 = vmatprep.subr.mxu0 0.0
    %v4211 = vand.u32 %v880, 4294901760
    %v4212 = vsub.f32 %v880, %v4211
    %v4213 = vand.u32 %v4212, 4294901760
    %v4214 = vsub.f32 %v4212, %v4213
    %v4215 = vand.u32 %v4214, 4294901760
    %4216 = vmatpush1.msra.mxu0 %v4215
    %4217 = vmatprep.subr.mxu0 0.0
    %v4218 = vand.u32 %v879, 4294901760
    %v4219 = vsub.f32 %v879, %v4218
    %v4220 = vand.u32 %v4219, 4294901760
    %v4221 = vsub.f32 %v4219, %v4220
    %v4222 = vand.u32 %v4221, 4294901760
    %4223 = vmatpush1.msra.mxu0 %v4222
    %4224 = vmatprep.subr.mxu0 0.0
    %v4225 = vand.u32 %v878, 4294901760
    %v4226 = vsub.f32 %v878, %v4225
    %v4227 = vand.u32 %v4226, 4294901760
    %v4228 = vsub.f32 %v4226, %v4227
    %v4229 = vand.u32 %v4228, 4294901760
    %4230 = vmatpush1.msra.mxu0 %v4229
    %4231 = vmatprep.subr.mxu0 0.0
    %v4232 = vand.u32 %v877, 4294901760
    %v4233 = vsub.f32 %v877, %v4232
    %v4234 = vand.u32 %v4233, 4294901760
    %v4235 = vsub.f32 %v4233, %v4234
    %v4236 = vand.u32 %v4235, 4294901760
    %4237 = vmatpush1.msra.mxu0 %v4236
    %4238 = vmatprep.subr.mxu0 0.0
    %v4239 = vand.u32 %v876, 4294901760
    %v4240 = vsub.f32 %v876, %v4239
    %v4241 = vand.u32 %v4240, 4294901760
    %v4242 = vsub.f32 %v4240, %v4241
    %v4243 = vand.u32 %v4242, 4294901760
    %4244 = vmatpush1.msra.mxu0 %v4243
    %4245 = vmatprep.subr.mxu0 0.0
    %v4246 = vand.u32 %v875, 4294901760
    %v4247 = vsub.f32 %v875, %v4246
    %v4248 = vand.u32 %v4247, 4294901760
    %v4249 = vsub.f32 %v4247, %v4248
    %v4250 = vand.u32 %v4249, 4294901760
    %4251 = vmatpush1.msra.mxu0 %v4250
    %4252 = vmatprep.subr.mxu0 0.0
    %v4253 = vand.u32 %v874, 4294901760
    %v4254 = vsub.f32 %v874, %v4253
    %v4255 = vand.u32 %v4254, 4294901760
    %v4256 = vsub.f32 %v4254, %v4255
    %v4257 = vand.u32 %v4256, 4294901760
    %4258 = vmatpush1.msra.mxu0 %v4257
    %4259 = vmatprep.subr.mxu0 0.0
    %v4260 = vand.u32 %v873, 4294901760
    %v4261 = vsub.f32 %v873, %v4260
    %v4262 = vand.u32 %v4261, 4294901760
    %v4263 = vsub.f32 %v4261, %v4262
    %v4264 = vand.u32 %v4263, 4294901760
    %4265 = vmatpush1.msra.mxu0 %v4264
    %4266 = vmatprep.subr.mxu0 0.0
    %v4267 = vand.u32 %v872, 4294901760
    %v4268 = vsub.f32 %v872, %v4267
    %v4269 = vand.u32 %v4268, 4294901760
    %v4270 = vsub.f32 %v4268, %v4269
    %v4271 = vand.u32 %v4270, 4294901760
    %4272 = vmatpush1.msra.mxu0 %v4271
    %4273 = vmatprep.subr.mxu0 0.0
    %v4274 = vand.u32 %v871, 4294901760
    %v4275 = vsub.f32 %v871, %v4274
    %v4276 = vand.u32 %v4275, 4294901760
    %v4277 = vsub.f32 %v4275, %v4276
    %v4278 = vand.u32 %v4277, 4294901760
    %4279 = vmatpush1.msra.mxu0 %v4278
    %4280 = vmatprep.subr.mxu0 0.0
    %v4281 = vand.u32 %v870, 4294901760
    %v4282 = vsub.f32 %v870, %v4281
    %v4283 = vand.u32 %v4282, 4294901760
    %v4284 = vsub.f32 %v4282, %v4283
    %v4285 = vand.u32 %v4284, 4294901760
    %4286 = vmatpush1.msra.mxu0 %v4285
    %4287 = vmatprep.subr.mxu0 0.0
    %v4288 = vand.u32 %v869, 4294901760
    %v4289 = vsub.f32 %v869, %v4288
    %v4290 = vand.u32 %v4289, 4294901760
    %v4291 = vsub.f32 %v4289, %v4290
    %v4292 = vand.u32 %v4291, 4294901760
    %4293 = vmatpush1.msra.mxu0 %v4292
    %4294 = vmatprep.subr.mxu0 0.0
    %v4295 = vand.u32 %v868, 4294901760
    %v4296 = vsub.f32 %v868, %v4295
    %v4297 = vand.u32 %v4296, 4294901760
    %v4298 = vsub.f32 %v4296, %v4297
    %v4299 = vand.u32 %v4298, 4294901760
    %4300 = vmatpush1.msra.mxu0 %v4299
    %4301 = vmatprep.subr.mxu0 0.0
    %v4302 = vand.u32 %v867, 4294901760
    %v4303 = vsub.f32 %v867, %v4302
    %v4304 = vand.u32 %v4303, 4294901760
    %v4305 = vsub.f32 %v4303, %v4304
    %v4306 = vand.u32 %v4305, 4294901760
    %4307 = vmatpush1.msra.mxu0 %v4306
    %4308 = vmatprep.subr.mxu0 0.0
    %4309 = vmatpush2.msra.mxu0 0.0
    %4310 = vmatprep.subr.mxu0 0.0
    %4311 = vmatpush2.msra.mxu0 0.0
    %4312 = vmatprep.subr.mxu0 0.0
    %4313 = vmatpush2.msra.mxu0 0.0
    %4314 = vmatprep.subr.mxu0 0.0
    %4315 = vmatpush2.msra.mxu0 0.0
    %4316 = vmatprep.subr.mxu0 0.0
    %4317 = vmatpush2.msra.mxu0 0.0
    %4318 = vmatprep.subr.mxu0 0.0
    %4319 = vmatpush2.msra.mxu0 0.0
    %4320 = vmatprep.subr.mxu0 0.0
    %4321 = vmatpush2.msra.mxu0 0.0
    %4322 = vmatprep.subr.mxu0 0.0
    %4323 = vmatpush2.msra.mxu0 0.0
    %4324 = vmatprep.subr.mxu0 0.0
    %4325 = vmatpush2.msra.mxu0 0.0
    %4326 = vmatprep.subr.mxu0 0.0
    %4327 = vmatpush2.msra.mxu0 0.0
    %4328 = vmatprep.subr.mxu0 0.0
    %4329 = vmatpush2.msra.mxu0 0.0
    %4330 = vmatprep.subr.mxu0 0.0
    %4331 = vmatpush2.msra.mxu0 0.0
    %4332 = vmatprep.subr.mxu0 0.0
    %4333 = vmatpush2.msra.mxu0 0.0
    %4334 = vmatprep.subr.mxu0 0.0
    %4335 = vmatpush2.msra.mxu0 0.0
    %4336 = vmatprep.subr.mxu0 0.0
    %4337 = vmatpush2.msra.mxu0 0.0
    %4338 = vmatprep.subr.mxu0 0.0
    %4339 = vmatpush2.msra.mxu0 0.0
    %4340 = vmatprep.mubr.f32.mxu0 0.0
    %v4341 = vand.u32 %v4103, 4294901760
    %4342 = vmatmul.mubr.f32.gmra.mxu0 %v4341
    %v4343 = vpop.f32.mrf.mxu0
    %v4344 = vadd.f32 %v4193, %v4343
    %v4345 = vpop.f32.mrf.mxu0
    %4346 = vdwg.mxu0
    %4347 = vmatprep.subr.mxu0 0.0
    %v4348 = vand.u32 %v882, 4294901760
    %v4349 = vsub.f32 %v882, %v4348
    %4350 = vmatpush1.msra.mxu0 %v4349
    %4351 = vmatprep.subr.mxu0 0.0
    %v4352 = vand.u32 %v881, 4294901760
    %v4353 = vsub.f32 %v881, %v4352
    %4354 = vmatpush1.msra.mxu0 %v4353
    %4355 = vmatprep.subr.mxu0 0.0
    %v4356 = vand.u32 %v880, 4294901760
    %v4357 = vsub.f32 %v880, %v4356
    %4358 = vmatpush1.msra.mxu0 %v4357
    %4359 = vmatprep.subr.mxu0 0.0
    %v4360 = vand.u32 %v879, 4294901760
    %v4361 = vsub.f32 %v879, %v4360
    %4362 = vmatpush1.msra.mxu0 %v4361
    %4363 = vmatprep.subr.mxu0 0.0
    %v4364 = vand.u32 %v878, 4294901760
    %v4365 = vsub.f32 %v878, %v4364
    %4366 = vmatpush1.msra.mxu0 %v4365
    %4367 = vmatprep.subr.mxu0 0.0
    %v4368 = vand.u32 %v877, 4294901760
    %v4369 = vsub.f32 %v877, %v4368
    %4370 = vmatpush1.msra.mxu0 %v4369
    %4371 = vmatprep.subr.mxu0 0.0
    %v4372 = vand.u32 %v876, 4294901760
    %v4373 = vsub.f32 %v876, %v4372
    %4374 = vmatpush1.msra.mxu0 %v4373
    %4375 = vmatprep.subr.mxu0 0.0
    %v4376 = vand.u32 %v875, 4294901760
    %v4377 = vsub.f32 %v875, %v4376
    %4378 = vmatpush1.msra.mxu0 %v4377
    %4379 = vmatprep.subr.mxu0 0.0
    %v4380 = vand.u32 %v874, 4294901760
    %v4381 = vsub.f32 %v874, %v4380
    %4382 = vmatpush1.msra.mxu0 %v4381
    %4383 = vmatprep.subr.mxu0 0.0
    %v4384 = vand.u32 %v873, 4294901760
    %v4385 = vsub.f32 %v873, %v4384
    %4386 = vmatpush1.msra.mxu0 %v4385
    %4387 = vmatprep.subr.mxu0 0.0
    %v4388 = vand.u32 %v872, 4294901760
    %v4389 = vsub.f32 %v872, %v4388
    %4390 = vmatpush1.msra.mxu0 %v4389
    %4391 = vmatprep.subr.mxu0 0.0
    %v4392 = vand.u32 %v871, 4294901760
    %v4393 = vsub.f32 %v871, %v4392
    %4394 = vmatpush1.msra.mxu0 %v4393
    %4395 = vmatprep.subr.mxu0 0.0
    %v4396 = vand.u32 %v870, 4294901760
    %v4397 = vsub.f32 %v870, %v4396
    %4398 = vmatpush1.msra.mxu0 %v4397
    %4399 = vmatprep.subr.mxu0 0.0
    %v4400 = vand.u32 %v869, 4294901760
    %v4401 = vsub.f32 %v869, %v4400
    %4402 = vmatpush1.msra.mxu0 %v4401
    %4403 = vmatprep.subr.mxu0 0.0
    %v4404 = vand.u32 %v868, 4294901760
    %v4405 = vsub.f32 %v868, %v4404
    %4406 = vmatpush1.msra.mxu0 %v4405
    %4407 = vmatprep.subr.mxu0 0.0
    %v4408 = vand.u32 %v867, 4294901760
    %v4409 = vsub.f32 %v867, %v4408
    %4410 = vmatpush1.msra.mxu0 %v4409
    %4411 = vmatprep.subr.mxu0 0.0
    %4412 = vmatpush2.msra.mxu0 0.0
    %4413 = vmatprep.subr.mxu0 0.0
    %4414 = vmatpush2.msra.mxu0 0.0
    %4415 = vmatprep.subr.mxu0 0.0
    %4416 = vmatpush2.msra.mxu0 0.0
    %4417 = vmatprep.subr.mxu0 0.0
    %4418 = vmatpush2.msra.mxu0 0.0
    %4419 = vmatprep.subr.mxu0 0.0
    %4420 = vmatpush2.msra.mxu0 0.0
    %4421 = vmatprep.subr.mxu0 0.0
    %4422 = vmatpush2.msra.mxu0 0.0
    %4423 = vmatprep.subr.mxu0 0.0
    %4424 = vmatpush2.msra.mxu0 0.0
    %4425 = vmatprep.subr.mxu0 0.0
    %4426 = vmatpush2.msra.mxu0 0.0
    %4427 = vmatprep.subr.mxu0 0.0
    %4428 = vmatpush2.msra.mxu0 0.0
    %4429 = vmatprep.subr.mxu0 0.0
    %4430 = vmatpush2.msra.mxu0 0.0
    %4431 = vmatprep.subr.mxu0 0.0
    %4432 = vmatpush2.msra.mxu0 0.0
    %4433 = vmatprep.subr.mxu0 0.0
    %4434 = vmatpush2.msra.mxu0 0.0
    %4435 = vmatprep.subr.mxu0 0.0
    %4436 = vmatpush2.msra.mxu0 0.0
    %4437 = vmatprep.subr.mxu0 0.0
    %4438 = vmatpush2.msra.mxu0 0.0
    %4439 = vmatprep.subr.mxu0 0.0
    %4440 = vmatpush2.msra.mxu0 0.0
    %4441 = vmatprep.subr.mxu0 0.0
    %4442 = vmatpush2.msra.mxu0 0.0
    %4443 = vmatprep.mubr.f32.mxu0 0.0
    %v4444 = vand.u32 %v4103, 4294901760
    %v4445 = vsub.f32 %v4103, %v4444
    %4446 = vmatmul.mubr.f32.gmra.mxu0 %v4445
    %v4447 = vpop.f32.mrf.mxu0
    %v4448 = vadd.f32 %v4344, %v4447
    %v4449 = vpop.f32.mrf.mxu0
    %4450 = vdwg.mxu0
    %4451 = vmatprep.subr.mxu0 0.0
    %v4452 = vand.u32 %v882, 4294901760
    %4453 = vmatpush1.msra.mxu0 %v4452
    %4454 = vmatprep.subr.mxu0 0.0
    %v4455 = vand.u32 %v881, 4294901760
    %4456 = vmatpush1.msra.mxu0 %v4455
    %4457 = vmatprep.subr.mxu0 0.0
    %v4458 = vand.u32 %v880, 4294901760
    %4459 = vmatpush1.msra.mxu0 %v4458
    %4460 = vmatprep.subr.mxu0 0.0
    %v4461 = vand.u32 %v879, 4294901760
    %4462 = vmatpush1.msra.mxu0 %v4461
    %4463 = vmatprep.subr.mxu0 0.0
    %v4464 = vand.u32 %v878, 4294901760
    %4465 = vmatpush1.msra.mxu0 %v4464
    %4466 = vmatprep.subr.mxu0 0.0
    %v4467 = vand.u32 %v877, 4294901760
    %4468 = vmatpush1.msra.mxu0 %v4467
    %4469 = vmatprep.subr.mxu0 0.0
    %v4470 = vand.u32 %v876, 4294901760
    %4471 = vmatpush1.msra.mxu0 %v4470
    %4472 = vmatprep.subr.mxu0 0.0
    %v4473 = vand.u32 %v875, 4294901760
    %4474 = vmatpush1.msra.mxu0 %v4473
    %4475 = vmatprep.subr.mxu0 0.0
    %v4476 = vand.u32 %v874, 4294901760
    %4477 = vmatpush1.msra.mxu0 %v4476
    %4478 = vmatprep.subr.mxu0 0.0
    %v4479 = vand.u32 %v873, 4294901760
    %4480 = vmatpush1.msra.mxu0 %v4479
    %4481 = vmatprep.subr.mxu0 0.0
    %v4482 = vand.u32 %v872, 4294901760
    %4483 = vmatpush1.msra.mxu0 %v4482
    %4484 = vmatprep.subr.mxu0 0.0
    %v4485 = vand.u32 %v871, 4294901760
    %4486 = vmatpush1.msra.mxu0 %v4485
    %4487 = vmatprep.subr.mxu0 0.0
    %v4488 = vand.u32 %v870, 4294901760
    %4489 = vmatpush1.msra.mxu0 %v4488
    %4490 = vmatprep.subr.mxu0 0.0
    %v4491 = vand.u32 %v869, 4294901760
    %4492 = vmatpush1.msra.mxu0 %v4491
    %4493 = vmatprep.subr.mxu0 0.0
    %v4494 = vand.u32 %v868, 4294901760
    %4495 = vmatpush1.msra.mxu0 %v4494
    %4496 = vmatprep.subr.mxu0 0.0
    %v4497 = vand.u32 %v867, 4294901760
    %4498 = vmatpush1.msra.mxu0 %v4497
    %4499 = vmatprep.subr.mxu0 0.0
    %4500 = vmatpush2.msra.mxu0 0.0
    %4501 = vmatprep.subr.mxu0 0.0
    %4502 = vmatpush2.msra.mxu0 0.0
    %4503 = vmatprep.subr.mxu0 0.0
    %4504 = vmatpush2.msra.mxu0 0.0
    %4505 = vmatprep.subr.mxu0 0.0
    %4506 = vmatpush2.msra.mxu0 0.0
    %4507 = vmatprep.subr.mxu0 0.0
    %4508 = vmatpush2.msra.mxu0 0.0
    %4509 = vmatprep.subr.mxu0 0.0
    %4510 = vmatpush2.msra.mxu0 0.0
    %4511 = vmatprep.subr.mxu0 0.0
    %4512 = vmatpush2.msra.mxu0 0.0
    %4513 = vmatprep.subr.mxu0 0.0
    %4514 = vmatpush2.msra.mxu0 0.0
    %4515 = vmatprep.subr.mxu0 0.0
    %4516 = vmatpush2.msra.mxu0 0.0
    %4517 = vmatprep.subr.mxu0 0.0
    %4518 = vmatpush2.msra.mxu0 0.0
    %4519 = vmatprep.subr.mxu0 0.0
    %4520 = vmatpush2.msra.mxu0 0.0
    %4521 = vmatprep.subr.mxu0 0.0
    %4522 = vmatpush2.msra.mxu0 0.0
    %4523 = vmatprep.subr.mxu0 0.0
    %4524 = vmatpush2.msra.mxu0 0.0
    %4525 = vmatprep.subr.mxu0 0.0
    %4526 = vmatpush2.msra.mxu0 0.0
    %4527 = vmatprep.subr.mxu0 0.0
    %4528 = vmatpush2.msra.mxu0 0.0
    %4529 = vmatprep.subr.mxu0 0.0
    %4530 = vmatpush2.msra.mxu0 0.0
    %4531 = vmatprep.mubr.f32.mxu0 0.0
    %v4532 = vand.u32 %v4103, 4294901760
    %v4533 = vsub.f32 %v4103, %v4532
    %v4534 = vand.u32 %v4533, 4294901760
    %4535 = vmatmul.mubr.f32.gmra.mxu0 %v4534
    %v4536 = vpop.f32.mrf.mxu0
    %v4537 = vadd.f32 %v4448, %v4536
    %v4538 = vpop.f32.mrf.mxu0
    %4539 = vdwg.mxu0
    %4540 = vmatprep.subr.mxu0 0.0
    %v4541 = vand.u32 %v882, 4294901760
    %v4542 = vsub.f32 %v882, %v4541
    %v4543 = vand.u32 %v4542, 4294901760
    %4544 = vmatpush1.msra.mxu0 %v4543
    %4545 = vmatprep.subr.mxu0 0.0
    %v4546 = vand.u32 %v881, 4294901760
    %v4547 = vsub.f32 %v881, %v4546
    %v4548 = vand.u32 %v4547, 4294901760
    %4549 = vmatpush1.msra.mxu0 %v4548
    %4550 = vmatprep.subr.mxu0 0.0
    %v4551 = vand.u32 %v880, 4294901760
    %v4552 = vsub.f32 %v880, %v4551
    %v4553 = vand.u32 %v4552, 4294901760
    %4554 = vmatpush1.msra.mxu0 %v4553
    %4555 = vmatprep.subr.mxu0 0.0
    %v4556 = vand.u32 %v879, 4294901760
    %v4557 = vsub.f32 %v879, %v4556
    %v4558 = vand.u32 %v4557, 4294901760
    %4559 = vmatpush1.msra.mxu0 %v4558
    %4560 = vmatprep.subr.mxu0 0.0
    %v4561 = vand.u32 %v878, 4294901760
    %v4562 = vsub.f32 %v878, %v4561
    %v4563 = vand.u32 %v4562, 4294901760
    %4564 = vmatpush1.msra.mxu0 %v4563
    %4565 = vmatprep.subr.mxu0 0.0
    %v4566 = vand.u32 %v877, 4294901760
    %v4567 = vsub.f32 %v877, %v4566
    %v4568 = vand.u32 %v4567, 4294901760
    %4569 = vmatpush1.msra.mxu0 %v4568
    %4570 = vmatprep.subr.mxu0 0.0
    %v4571 = vand.u32 %v876, 4294901760
    %v4572 = vsub.f32 %v876, %v4571
    %v4573 = vand.u32 %v4572, 4294901760
    %4574 = vmatpush1.msra.mxu0 %v4573
    %4575 = vmatprep.subr.mxu0 0.0
    %v4576 = vand.u32 %v875, 4294901760
    %v4577 = vsub.f32 %v875, %v4576
    %v4578 = vand.u32 %v4577, 4294901760
    %4579 = vmatpush1.msra.mxu0 %v4578
    %4580 = vmatprep.subr.mxu0 0.0
    %v4581 = vand.u32 %v874, 4294901760
    %v4582 = vsub.f32 %v874, %v4581
    %v4583 = vand.u32 %v4582, 4294901760
    %4584 = vmatpush1.msra.mxu0 %v4583
    %4585 = vmatprep.subr.mxu0 0.0
    %v4586 = vand.u32 %v873, 4294901760
    %v4587 = vsub.f32 %v873, %v4586
    %v4588 = vand.u32 %v4587, 4294901760
    %4589 = vmatpush1.msra.mxu0 %v4588
    %4590 = vmatprep.subr.mxu0 0.0
    %v4591 = vand.u32 %v872, 4294901760
    %v4592 = vsub.f32 %v872, %v4591
    %v4593 = vand.u32 %v4592, 4294901760
    %4594 = vmatpush1.msra.mxu0 %v4593
    %4595 = vmatprep.subr.mxu0 0.0
    %v4596 = vand.u32 %v871, 4294901760
    %v4597 = vsub.f32 %v871, %v4596
    %v4598 = vand.u32 %v4597, 4294901760
    %4599 = vmatpush1.msra.mxu0 %v4598
    %4600 = vmatprep.subr.mxu0 0.0
    %v4601 = vand.u32 %v870, 4294901760
    %v4602 = vsub.f32 %v870, %v4601
    %v4603 = vand.u32 %v4602, 4294901760
    %4604 = vmatpush1.msra.mxu0 %v4603
    %4605 = vmatprep.subr.mxu0 0.0
    %v4606 = vand.u32 %v869, 4294901760
    %v4607 = vsub.f32 %v869, %v4606
    %v4608 = vand.u32 %v4607, 4294901760
    %4609 = vmatpush1.msra.mxu0 %v4608
    %4610 = vmatprep.subr.mxu0 0.0
    %v4611 = vand.u32 %v868, 4294901760
    %v4612 = vsub.f32 %v868, %v4611
    %v4613 = vand.u32 %v4612, 4294901760
    %4614 = vmatpush1.msra.mxu0 %v4613
    %4615 = vmatprep.subr.mxu0 0.0
    %v4616 = vand.u32 %v867, 4294901760
    %v4617 = vsub.f32 %v867, %v4616
    %v4618 = vand.u32 %v4617, 4294901760
    %4619 = vmatpush1.msra.mxu0 %v4618
    %4620 = vmatprep.subr.mxu0 0.0
    %4621 = vmatpush2.msra.mxu0 0.0
    %4622 = vmatprep.subr.mxu0 0.0
    %4623 = vmatpush2.msra.mxu0 0.0
    %4624 = vmatprep.subr.mxu0 0.0
    %4625 = vmatpush2.msra.mxu0 0.0
    %4626 = vmatprep.subr.mxu0 0.0
    %4627 = vmatpush2.msra.mxu0 0.0
    %4628 = vmatprep.subr.mxu0 0.0
    %4629 = vmatpush2.msra.mxu0 0.0
    %4630 = vmatprep.subr.mxu0 0.0
    %4631 = vmatpush2.msra.mxu0 0.0
    %4632 = vmatprep.subr.mxu0 0.0
    %4633 = vmatpush2.msra.mxu0 0.0
    %4634 = vmatprep.subr.mxu0 0.0
    %4635 = vmatpush2.msra.mxu0 0.0
    %4636 = vmatprep.subr.mxu0 0.0
    %4637 = vmatpush2.msra.mxu0 0.0
    %4638 = vmatprep.subr.mxu0 0.0
    %4639 = vmatpush2.msra.mxu0 0.0
    %4640 = vmatprep.subr.mxu0 0.0
    %4641 = vmatpush2.msra.mxu0 0.0
    %4642 = vmatprep.subr.mxu0 0.0
    %4643 = vmatpush2.msra.mxu0 0.0
    %4644 = vmatprep.subr.mxu0 0.0
    %4645 = vmatpush2.msra.mxu0 0.0
    %4646 = vmatprep.subr.mxu0 0.0
    %4647 = vmatpush2.msra.mxu0 0.0
    %4648 = vmatprep.subr.mxu0 0.0
    %4649 = vmatpush2.msra.mxu0 0.0
    %4650 = vmatprep.subr.mxu0 0.0
    %4651 = vmatpush2.msra.mxu0 0.0
    %4652 = vmatprep.mubr.f32.mxu0 0.0
    %v4653 = vand.u32 %v4103, 4294901760
    %4654 = vmatmul.mubr.f32.gmra.mxu0 %v4653
    %v4655 = vpop.f32.mrf.mxu0
    %v4656 = vadd.f32 %v4537, %v4655
    %v4657 = vpop.f32.mrf.mxu0
    %4658 = vdwg.mxu0
    %4659 = vmatprep.subr.mxu0 0.0
    %v4660 = vand.u32 %v882, 4294901760
    %4661 = vmatpush1.msra.mxu0 %v4660
    %4662 = vmatprep.subr.mxu0 0.0
    %v4663 = vand.u32 %v881, 4294901760
    %4664 = vmatpush1.msra.mxu0 %v4663
    %4665 = vmatprep.subr.mxu0 0.0
    %v4666 = vand.u32 %v880, 4294901760
    %4667 = vmatpush1.msra.mxu0 %v4666
    %4668 = vmatprep.subr.mxu0 0.0
    %v4669 = vand.u32 %v879, 4294901760
    %4670 = vmatpush1.msra.mxu0 %v4669
    %4671 = vmatprep.subr.mxu0 0.0
    %v4672 = vand.u32 %v878, 4294901760
    %4673 = vmatpush1.msra.mxu0 %v4672
    %4674 = vmatprep.subr.mxu0 0.0
    %v4675 = vand.u32 %v877, 4294901760
    %4676 = vmatpush1.msra.mxu0 %v4675
    %4677 = vmatprep.subr.mxu0 0.0
    %v4678 = vand.u32 %v876, 4294901760
    %4679 = vmatpush1.msra.mxu0 %v4678
    %4680 = vmatprep.subr.mxu0 0.0
    %v4681 = vand.u32 %v875, 4294901760
    %4682 = vmatpush1.msra.mxu0 %v4681
    %4683 = vmatprep.subr.mxu0 0.0
    %v4684 = vand.u32 %v874, 4294901760
    %4685 = vmatpush1.msra.mxu0 %v4684
    %4686 = vmatprep.subr.mxu0 0.0
    %v4687 = vand.u32 %v873, 4294901760
    %4688 = vmatpush1.msra.mxu0 %v4687
    %4689 = vmatprep.subr.mxu0 0.0
    %v4690 = vand.u32 %v872, 4294901760
    %4691 = vmatpush1.msra.mxu0 %v4690
    %4692 = vmatprep.subr.mxu0 0.0
    %v4693 = vand.u32 %v871, 4294901760
    %4694 = vmatpush1.msra.mxu0 %v4693
    %4695 = vmatprep.subr.mxu0 0.0
    %v4696 = vand.u32 %v870, 4294901760
    %4697 = vmatpush1.msra.mxu0 %v4696
    %4698 = vmatprep.subr.mxu0 0.0
    %v4699 = vand.u32 %v869, 4294901760
    %4700 = vmatpush1.msra.mxu0 %v4699
    %4701 = vmatprep.subr.mxu0 0.0
    %v4702 = vand.u32 %v868, 4294901760
    %4703 = vmatpush1.msra.mxu0 %v4702
    %4704 = vmatprep.subr.mxu0 0.0
    %v4705 = vand.u32 %v867, 4294901760
    %4706 = vmatpush1.msra.mxu0 %v4705
    %4707 = vmatprep.subr.mxu0 0.0
    %4708 = vmatpush2.msra.mxu0 0.0
    %4709 = vmatprep.subr.mxu0 0.0
    %4710 = vmatpush2.msra.mxu0 0.0
    %4711 = vmatprep.subr.mxu0 0.0
    %4712 = vmatpush2.msra.mxu0 0.0
    %4713 = vmatprep.subr.mxu0 0.0
    %4714 = vmatpush2.msra.mxu0 0.0
    %4715 = vmatprep.subr.mxu0 0.0
    %4716 = vmatpush2.msra.mxu0 0.0
    %4717 = vmatprep.subr.mxu0 0.0
    %4718 = vmatpush2.msra.mxu0 0.0
    %4719 = vmatprep.subr.mxu0 0.0
    %4720 = vmatpush2.msra.mxu0 0.0
    %4721 = vmatprep.subr.mxu0 0.0
    %4722 = vmatpush2.msra.mxu0 0.0
    %4723 = vmatprep.subr.mxu0 0.0
    %4724 = vmatpush2.msra.mxu0 0.0
    %4725 = vmatprep.subr.mxu0 0.0
    %4726 = vmatpush2.msra.mxu0 0.0
    %4727 = vmatprep.subr.mxu0 0.0
    %4728 = vmatpush2.msra.mxu0 0.0
    %4729 = vmatprep.subr.mxu0 0.0
    %4730 = vmatpush2.msra.mxu0 0.0
    %4731 = vmatprep.subr.mxu0 0.0
    %4732 = vmatpush2.msra.mxu0 0.0
    %4733 = vmatprep.subr.mxu0 0.0
    %4734 = vmatpush2.msra.mxu0 0.0
    %4735 = vmatprep.subr.mxu0 0.0
    %4736 = vmatpush2.msra.mxu0 0.0
    %4737 = vmatprep.subr.mxu0 0.0
    %4738 = vmatpush2.msra.mxu0 0.0
    %4739 = vmatprep.mubr.f32.mxu0 0.0
    %v4740 = vand.u32 %v4103, 4294901760
    %4741 = vmatmul.mubr.f32.gmra.mxu0 %v4740
    %v4742 = vpop.f32.mrf.mxu0
    %v4743 = vadd.f32 %v4656, %v4742
    %v4744 = vpop.f32.mrf.mxu0
    %4745 = vdwg.mxu0
    %v4746 = vadd.f32 %v4104, %v4743
    %v4747 = vtanh.pop %v4746
    %v4748 = vld [vmem:[#allocation3 + $0x30] sm:$0xff]
    %4749 = vmatprep.subr.mxu0 0.0
    %v4750 = vand.u32 %v882, 4294901760
    %4751 = vmatpush1.msra.mxu0 %v4750
    %4752 = vmatprep.subr.mxu0 0.0
    %v4753 = vand.u32 %v881, 4294901760
    %4754 = vmatpush1.msra.mxu0 %v4753
    %4755 = vmatprep.subr.mxu0 0.0
    %v4756 = vand.u32 %v880, 4294901760
    %4757 = vmatpush1.msra.mxu0 %v4756
    %4758 = vmatprep.subr.mxu0 0.0
    %v4759 = vand.u32 %v879, 4294901760
    %4760 = vmatpush1.msra.mxu0 %v4759
    %4761 = vmatprep.subr.mxu0 0.0
    %v4762 = vand.u32 %v878, 4294901760
    %4763 = vmatpush1.msra.mxu0 %v4762
    %4764 = vmatprep.subr.mxu0 0.0
    %v4765 = vand.u32 %v877, 4294901760
    %4766 = vmatpush1.msra.mxu0 %v4765
    %4767 = vmatprep.subr.mxu0 0.0
    %v4768 = vand.u32 %v876, 4294901760
    %4769 = vmatpush1.msra.mxu0 %v4768
    %4770 = vmatprep.subr.mxu0 0.0
    %v4771 = vand.u32 %v875, 4294901760
    %4772 = vmatpush1.msra.mxu0 %v4771
    %4773 = vmatprep.subr.mxu0 0.0
    %v4774 = vand.u32 %v874, 4294901760
    %4775 = vmatpush1.msra.mxu0 %v4774
    %4776 = vmatprep.subr.mxu0 0.0
    %v4777 = vand.u32 %v873, 4294901760
    %4778 = vmatpush1.msra.mxu0 %v4777
    %4779 = vmatprep.subr.mxu0 0.0
    %v4780 = vand.u32 %v872, 4294901760
    %4781 = vmatpush1.msra.mxu0 %v4780
    %4782 = vmatprep.subr.mxu0 0.0
    %v4783 = vand.u32 %v871, 4294901760
    %4784 = vmatpush1.msra.mxu0 %v4783
    %4785 = vmatprep.subr.mxu0 0.0
    %v4786 = vand.u32 %v870, 4294901760
    %4787 = vmatpush1.msra.mxu0 %v4786
    %4788 = vmatprep.subr.mxu0 0.0
    %v4789 = vand.u32 %v869, 4294901760
    %4790 = vmatpush1.msra.mxu0 %v4789
    %4791 = vmatprep.subr.mxu0 0.0
    %v4792 = vand.u32 %v868, 4294901760
    %4793 = vmatpush1.msra.mxu0 %v4792
    %4794 = vmatprep.subr.mxu0 0.0
    %v4795 = vand.u32 %v867, 4294901760
    %4796 = vmatpush1.msra.mxu0 %v4795
    %4797 = vmatprep.subr.mxu0 0.0
    %4798 = vmatpush2.msra.mxu0 0.0
    %4799 = vmatprep.subr.mxu0 0.0
    %4800 = vmatpush2.msra.mxu0 0.0
    %4801 = vmatprep.subr.mxu0 0.0
    %4802 = vmatpush2.msra.mxu0 0.0
    %4803 = vmatprep.subr.mxu0 0.0
    %4804 = vmatpush2.msra.mxu0 0.0
    %4805 = vmatprep.subr.mxu0 0.0
    %4806 = vmatpush2.msra.mxu0 0.0
    %4807 = vmatprep.subr.mxu0 0.0
    %4808 = vmatpush2.msra.mxu0 0.0
    %4809 = vmatprep.subr.mxu0 0.0
    %4810 = vmatpush2.msra.mxu0 0.0
    %4811 = vmatprep.subr.mxu0 0.0
    %4812 = vmatpush2.msra.mxu0 0.0
    %4813 = vmatprep.subr.mxu0 0.0
    %4814 = vmatpush2.msra.mxu0 0.0
    %4815 = vmatprep.subr.mxu0 0.0
    %4816 = vmatpush2.msra.mxu0 0.0
    %4817 = vmatprep.subr.mxu0 0.0
    %4818 = vmatpush2.msra.mxu0 0.0
    %4819 = vmatprep.subr.mxu0 0.0
    %4820 = vmatpush2.msra.mxu0 0.0
    %4821 = vmatprep.subr.mxu0 0.0
    %4822 = vmatpush2.msra.mxu0 0.0
    %4823 = vmatprep.subr.mxu0 0.0
    %4824 = vmatpush2.msra.mxu0 0.0
    %4825 = vmatprep.subr.mxu0 0.0
    %4826 = vmatpush2.msra.mxu0 0.0
    %4827 = vmatprep.subr.mxu0 0.0
    %4828 = vmatpush2.msra.mxu0 0.0
    %4829 = vmatprep.mubr.f32.mxu0 0.0
    %v4830 = vand.u32 %v4747, 4294901760
    %v4831 = vsub.f32 %v4747, %v4830
    %v4832 = vand.u32 %v4831, 4294901760
    %v4833 = vsub.f32 %v4831, %v4832
    %v4834 = vand.u32 %v4833, 4294901760
    %4835 = vmatmul.mubr.f32.gmra.mxu0 %v4834
    %v4836 = vpop.f32.mrf.mxu0
    %v4837 = vadd.f32 0.0, %v4836
    %v4838 = vpop.f32.mrf.mxu0
    %4839 = vdwg.mxu0
    %4840 = vmatprep.subr.mxu0 0.0
    %v4841 = vand.u32 %v882, 4294901760
    %v4842 = vsub.f32 %v882, %v4841
    %v4843 = vand.u32 %v4842, 4294901760
    %v4844 = vsub.f32 %v4842, %v4843
    %v4845 = vand.u32 %v4844, 4294901760
    %4846 = vmatpush1.msra.mxu0 %v4845
    %4847 = vmatprep.subr.mxu0 0.0
    %v4848 = vand.u32 %v881, 4294901760
    %v4849 = vsub.f32 %v881, %v4848
    %v4850 = vand.u32 %v4849, 4294901760
    %v4851 = vsub.f32 %v4849, %v4850
    %v4852 = vand.u32 %v4851, 4294901760
    %4853 = vmatpush1.msra.mxu0 %v4852
    %4854 = vmatprep.subr.mxu0 0.0
    %v4855 = vand.u32 %v880, 4294901760
    %v4856 = vsub.f32 %v880, %v4855
    %v4857 = vand.u32 %v4856, 4294901760
    %v4858 = vsub.f32 %v4856, %v4857
    %v4859 = vand.u32 %v4858, 4294901760
    %4860 = vmatpush1.msra.mxu0 %v4859
    %4861 = vmatprep.subr.mxu0 0.0
    %v4862 = vand.u32 %v879, 4294901760
    %v4863 = vsub.f32 %v879, %v4862
    %v4864 = vand.u32 %v4863, 4294901760
    %v4865 = vsub.f32 %v4863, %v4864
    %v4866 = vand.u32 %v4865, 4294901760
    %4867 = vmatpush1.msra.mxu0 %v4866
    %4868 = vmatprep.subr.mxu0 0.0
    %v4869 = vand.u32 %v878, 4294901760
    %v4870 = vsub.f32 %v878, %v4869
    %v4871 = vand.u32 %v4870, 4294901760
    %v4872 = vsub.f32 %v4870, %v4871
    %v4873 = vand.u32 %v4872, 4294901760
    %4874 = vmatpush1.msra.mxu0 %v4873
    %4875 = vmatprep.subr.mxu0 0.0
    %v4876 = vand.u32 %v877, 4294901760
    %v4877 = vsub.f32 %v877, %v4876
    %v4878 = vand.u32 %v4877, 4294901760
    %v4879 = vsub.f32 %v4877, %v4878
    %v4880 = vand.u32 %v4879, 4294901760
    %4881 = vmatpush1.msra.mxu0 %v4880
    %4882 = vmatprep.subr.mxu0 0.0
    %v4883 = vand.u32 %v876, 4294901760
    %v4884 = vsub.f32 %v876, %v4883
    %v4885 = vand.u32 %v4884, 4294901760
    %v4886 = vsub.f32 %v4884, %v4885
    %v4887 = vand.u32 %v4886, 4294901760
    %4888 = vmatpush1.msra.mxu0 %v4887
    %4889 = vmatprep.subr.mxu0 0.0
    %v4890 = vand.u32 %v875, 4294901760
    %v4891 = vsub.f32 %v875, %v4890
    %v4892 = vand.u32 %v4891, 4294901760
    %v4893 = vsub.f32 %v4891, %v4892
    %v4894 = vand.u32 %v4893, 4294901760
    %4895 = vmatpush1.msra.mxu0 %v4894
    %4896 = vmatprep.subr.mxu0 0.0
    %v4897 = vand.u32 %v874, 4294901760
    %v4898 = vsub.f32 %v874, %v4897
    %v4899 = vand.u32 %v4898, 4294901760
    %v4900 = vsub.f32 %v4898, %v4899
    %v4901 = vand.u32 %v4900, 4294901760
    %4902 = vmatpush1.msra.mxu0 %v4901
    %4903 = vmatprep.subr.mxu0 0.0
    %v4904 = vand.u32 %v873, 4294901760
    %v4905 = vsub.f32 %v873, %v4904
    %v4906 = vand.u32 %v4905, 4294901760
    %v4907 = vsub.f32 %v4905, %v4906
    %v4908 = vand.u32 %v4907, 4294901760
    %4909 = vmatpush1.msra.mxu0 %v4908
    %4910 = vmatprep.subr.mxu0 0.0
    %v4911 = vand.u32 %v872, 4294901760
    %v4912 = vsub.f32 %v872, %v4911
    %v4913 = vand.u32 %v4912, 4294901760
    %v4914 = vsub.f32 %v4912, %v4913
    %v4915 = vand.u32 %v4914, 4294901760
    %4916 = vmatpush1.msra.mxu0 %v4915
    %4917 = vmatprep.subr.mxu0 0.0
    %v4918 = vand.u32 %v871, 4294901760
    %v4919 = vsub.f32 %v871, %v4918
    %v4920 = vand.u32 %v4919, 4294901760
    %v4921 = vsub.f32 %v4919, %v4920
    %v4922 = vand.u32 %v4921, 4294901760
    %4923 = vmatpush1.msra.mxu0 %v4922
    %4924 = vmatprep.subr.mxu0 0.0
    %v4925 = vand.u32 %v870, 4294901760
    %v4926 = vsub.f32 %v870, %v4925
    %v4927 = vand.u32 %v4926, 4294901760
    %v4928 = vsub.f32 %v4926, %v4927
    %v4929 = vand.u32 %v4928, 4294901760
    %4930 = vmatpush1.msra.mxu0 %v4929
    %4931 = vmatprep.subr.mxu0 0.0
    %v4932 = vand.u32 %v869, 4294901760
    %v4933 = vsub.f32 %v869, %v4932
    %v4934 = vand.u32 %v4933, 4294901760
    %v4935 = vsub.f32 %v4933, %v4934
    %v4936 = vand.u32 %v4935, 4294901760
    %4937 = vmatpush1.msra.mxu0 %v4936
    %4938 = vmatprep.subr.mxu0 0.0
    %v4939 = vand.u32 %v868, 4294901760
    %v4940 = vsub.f32 %v868, %v4939
    %v4941 = vand.u32 %v4940, 4294901760
    %v4942 = vsub.f32 %v4940, %v4941
    %v4943 = vand.u32 %v4942, 4294901760
    %4944 = vmatpush1.msra.mxu0 %v4943
    %4945 = vmatprep.subr.mxu0 0.0
    %v4946 = vand.u32 %v867, 4294901760
    %v4947 = vsub.f32 %v867, %v4946
    %v4948 = vand.u32 %v4947, 4294901760
    %v4949 = vsub.f32 %v4947, %v4948
    %v4950 = vand.u32 %v4949, 4294901760
    %4951 = vmatpush1.msra.mxu0 %v4950
    %4952 = vmatprep.subr.mxu0 0.0
    %4953 = vmatpush2.msra.mxu0 0.0
    %4954 = vmatprep.subr.mxu0 0.0
    %4955 = vmatpush2.msra.mxu0 0.0
    %4956 = vmatprep.subr.mxu0 0.0
    %4957 = vmatpush2.msra.mxu0 0.0
    %4958 = vmatprep.subr.mxu0 0.0
    %4959 = vmatpush2.msra.mxu0 0.0
    %4960 = vmatprep.subr.mxu0 0.0
    %4961 = vmatpush2.msra.mxu0 0.0
    %4962 = vmatprep.subr.mxu0 0.0
    %4963 = vmatpush2.msra.mxu0 0.0
    %4964 = vmatprep.subr.mxu0 0.0
    %4965 = vmatpush2.msra.mxu0 0.0
    %4966 = vmatprep.subr.mxu0 0.0
    %4967 = vmatpush2.msra.mxu0 0.0
    %4968 = vmatprep.subr.mxu0 0.0
    %4969 = vmatpush2.msra.mxu0 0.0
    %4970 = vmatprep.subr.mxu0 0.0
    %4971 = vmatpush2.msra.mxu0 0.0
    %4972 = vmatprep.subr.mxu0 0.0
    %4973 = vmatpush2.msra.mxu0 0.0
    %4974 = vmatprep.subr.mxu0 0.0
    %4975 = vmatpush2.msra.mxu0 0.0
    %4976 = vmatprep.subr.mxu0 0.0
    %4977 = vmatpush2.msra.mxu0 0.0
    %4978 = vmatprep.subr.mxu0 0.0
    %4979 = vmatpush2.msra.mxu0 0.0
    %4980 = vmatprep.subr.mxu0 0.0
    %4981 = vmatpush2.msra.mxu0 0.0
    %4982 = vmatprep.subr.mxu0 0.0
    %4983 = vmatpush2.msra.mxu0 0.0
    %4984 = vmatprep.mubr.f32.mxu0 0.0
    %v4985 = vand.u32 %v4747, 4294901760
    %4986 = vmatmul.mubr.f32.gmra.mxu0 %v4985
    %v4987 = vpop.f32.mrf.mxu0
    %v4988 = vadd.f32 %v4837, %v4987
    %v4989 = vpop.f32.mrf.mxu0
    %4990 = vdwg.mxu0
    %4991 = vmatprep.subr.mxu0 0.0
    %v4992 = vand.u32 %v882, 4294901760
    %v4993 = vsub.f32 %v882, %v4992
    %4994 = vmatpush1.msra.mxu0 %v4993
    %4995 = vmatprep.subr.mxu0 0.0
    %v4996 = vand.u32 %v881, 4294901760
    %v4997 = vsub.f32 %v881, %v4996
    %4998 = vmatpush1.msra.mxu0 %v4997
    %4999 = vmatprep.subr.mxu0 0.0
    %v5000 = vand.u32 %v880, 4294901760
    %v5001 = vsub.f32 %v880, %v5000
    %5002 = vmatpush1.msra.mxu0 %v5001
    %5003 = vmatprep.subr.mxu0 0.0
    %v5004 = vand.u32 %v879, 4294901760
    %v5005 = vsub.f32 %v879, %v5004
    %5006 = vmatpush1.msra.mxu0 %v5005
    %5007 = vmatprep.subr.mxu0 0.0
    %v5008 = vand.u32 %v878, 4294901760
    %v5009 = vsub.f32 %v878, %v5008
    %5010 = vmatpush1.msra.mxu0 %v5009
    %5011 = vmatprep.subr.mxu0 0.0
    %v5012 = vand.u32 %v877, 4294901760
    %v5013 = vsub.f32 %v877, %v5012
    %5014 = vmatpush1.msra.mxu0 %v5013
    %5015 = vmatprep.subr.mxu0 0.0
    %v5016 = vand.u32 %v876, 4294901760
    %v5017 = vsub.f32 %v876, %v5016
    %5018 = vmatpush1.msra.mxu0 %v5017
    %5019 = vmatprep.subr.mxu0 0.0
    %v5020 = vand.u32 %v875, 4294901760
    %v5021 = vsub.f32 %v875, %v5020
    %5022 = vmatpush1.msra.mxu0 %v5021
    %5023 = vmatprep.subr.mxu0 0.0
    %v5024 = vand.u32 %v874, 4294901760
    %v5025 = vsub.f32 %v874, %v5024
    %5026 = vmatpush1.msra.mxu0 %v5025
    %5027 = vmatprep.subr.mxu0 0.0
    %v5028 = vand.u32 %v873, 4294901760
    %v5029 = vsub.f32 %v873, %v5028
    %5030 = vmatpush1.msra.mxu0 %v5029
    %5031 = vmatprep.subr.mxu0 0.0
    %v5032 = vand.u32 %v872, 4294901760
    %v5033 = vsub.f32 %v872, %v5032
    %5034 = vmatpush1.msra.mxu0 %v5033
    %5035 = vmatprep.subr.mxu0 0.0
    %v5036 = vand.u32 %v871, 4294901760
    %v5037 = vsub.f32 %v871, %v5036
    %5038 = vmatpush1.msra.mxu0 %v5037
    %5039 = vmatprep.subr.mxu0 0.0
    %v5040 = vand.u32 %v870, 4294901760
    %v5041 = vsub.f32 %v870, %v5040
    %5042 = vmatpush1.msra.mxu0 %v5041
    %5043 = vmatprep.subr.mxu0 0.0
    %v5044 = vand.u32 %v869, 4294901760
    %v5045 = vsub.f32 %v869, %v5044
    %5046 = vmatpush1.msra.mxu0 %v5045
    %5047 = vmatprep.subr.mxu0 0.0
    %v5048 = vand.u32 %v868, 4294901760
    %v5049 = vsub.f32 %v868, %v5048
    %5050 = vmatpush1.msra.mxu0 %v5049
    %5051 = vmatprep.subr.mxu0 0.0
    %v5052 = vand.u32 %v867, 4294901760
    %v5053 = vsub.f32 %v867, %v5052
    %5054 = vmatpush1.msra.mxu0 %v5053
    %5055 = vmatprep.subr.mxu0 0.0
    %5056 = vmatpush2.msra.mxu0 0.0
    %5057 = vmatprep.subr.mxu0 0.0
    %5058 = vmatpush2.msra.mxu0 0.0
    %5059 = vmatprep.subr.mxu0 0.0
    %5060 = vmatpush2.msra.mxu0 0.0
    %5061 = vmatprep.subr.mxu0 0.0
    %5062 = vmatpush2.msra.mxu0 0.0
    %5063 = vmatprep.subr.mxu0 0.0
    %5064 = vmatpush2.msra.mxu0 0.0
    %5065 = vmatprep.subr.mxu0 0.0
    %5066 = vmatpush2.msra.mxu0 0.0
    %5067 = vmatprep.subr.mxu0 0.0
    %5068 = vmatpush2.msra.mxu0 0.0
    %5069 = vmatprep.subr.mxu0 0.0
    %5070 = vmatpush2.msra.mxu0 0.0
    %5071 = vmatprep.subr.mxu0 0.0
    %5072 = vmatpush2.msra.mxu0 0.0
    %5073 = vmatprep.subr.mxu0 0.0
    %5074 = vmatpush2.msra.mxu0 0.0
    %5075 = vmatprep.subr.mxu0 0.0
    %5076 = vmatpush2.msra.mxu0 0.0
    %5077 = vmatprep.subr.mxu0 0.0
    %5078 = vmatpush2.msra.mxu0 0.0
    %5079 = vmatprep.subr.mxu0 0.0
    %5080 = vmatpush2.msra.mxu0 0.0
    %5081 = vmatprep.subr.mxu0 0.0
    %5082 = vmatpush2.msra.mxu0 0.0
    %5083 = vmatprep.subr.mxu0 0.0
    %5084 = vmatpush2.msra.mxu0 0.0
    %5085 = vmatprep.subr.mxu0 0.0
    %5086 = vmatpush2.msra.mxu0 0.0
    %5087 = vmatprep.mubr.f32.mxu0 0.0
    %v5088 = vand.u32 %v4747, 4294901760
    %v5089 = vsub.f32 %v4747, %v5088
    %5090 = vmatmul.mubr.f32.gmra.mxu0 %v5089
    %v5091 = vpop.f32.mrf.mxu0
    %v5092 = vadd.f32 %v4988, %v5091
    %v5093 = vpop.f32.mrf.mxu0
    %5094 = vdwg.mxu0
    %5095 = vmatprep.subr.mxu0 0.0
    %v5096 = vand.u32 %v882, 4294901760
    %5097 = vmatpush1.msra.mxu0 %v5096
    %5098 = vmatprep.subr.mxu0 0.0
    %v5099 = vand.u32 %v881, 4294901760
    %5100 = vmatpush1.msra.mxu0 %v5099
    %5101 = vmatprep.subr.mxu0 0.0
    %v5102 = vand.u32 %v880, 4294901760
    %5103 = vmatpush1.msra.mxu0 %v5102
    %5104 = vmatprep.subr.mxu0 0.0
    %v5105 = vand.u32 %v879, 4294901760
    %5106 = vmatpush1.msra.mxu0 %v5105
    %5107 = vmatprep.subr.mxu0 0.0
    %v5108 = vand.u32 %v878, 4294901760
    %5109 = vmatpush1.msra.mxu0 %v5108
    %5110 = vmatprep.subr.mxu0 0.0
    %v5111 = vand.u32 %v877, 4294901760
    %5112 = vmatpush1.msra.mxu0 %v5111
    %5113 = vmatprep.subr.mxu0 0.0
    %v5114 = vand.u32 %v876, 4294901760
    %5115 = vmatpush1.msra.mxu0 %v5114
    %5116 = vmatprep.subr.mxu0 0.0
    %v5117 = vand.u32 %v875, 4294901760
    %5118 = vmatpush1.msra.mxu0 %v5117
    %5119 = vmatprep.subr.mxu0 0.0
    %v5120 = vand.u32 %v874, 4294901760
    %5121 = vmatpush1.msra.mxu0 %v5120
    %5122 = vmatprep.subr.mxu0 0.0
    %v5123 = vand.u32 %v873, 4294901760
    %5124 = vmatpush1.msra.mxu0 %v5123
    %5125 = vmatprep.subr.mxu0 0.0
    %v5126 = vand.u32 %v872, 4294901760
    %5127 = vmatpush1.msra.mxu0 %v5126
    %5128 = vmatprep.subr.mxu0 0.0
    %v5129 = vand.u32 %v871, 4294901760
    %5130 = vmatpush1.msra.mxu0 %v5129
    %5131 = vmatprep.subr.mxu0 0.0
    %v5132 = vand.u32 %v870, 4294901760
    %5133 = vmatpush1.msra.mxu0 %v5132
    %5134 = vmatprep.subr.mxu0 0.0
    %v5135 = vand.u32 %v869, 4294901760
    %5136 = vmatpush1.msra.mxu0 %v5135
    %5137 = vmatprep.subr.mxu0 0.0
    %v5138 = vand.u32 %v868, 4294901760
    %5139 = vmatpush1.msra.mxu0 %v5138
    %5140 = vmatprep.subr.mxu0 0.0
    %v5141 = vand.u32 %v867, 4294901760
    %5142 = vmatpush1.msra.mxu0 %v5141
    %5143 = vmatprep.subr.mxu0 0.0
    %5144 = vmatpush2.msra.mxu0 0.0
    %5145 = vmatprep.subr.mxu0 0.0
    %5146 = vmatpush2.msra.mxu0 0.0
    %5147 = vmatprep.subr.mxu0 0.0
    %5148 = vmatpush2.msra.mxu0 0.0
    %5149 = vmatprep.subr.mxu0 0.0
    %5150 = vmatpush2.msra.mxu0 0.0
    %5151 = vmatprep.subr.mxu0 0.0
    %5152 = vmatpush2.msra.mxu0 0.0
    %5153 = vmatprep.subr.mxu0 0.0
    %5154 = vmatpush2.msra.mxu0 0.0
    %5155 = vmatprep.subr.mxu0 0.0
    %5156 = vmatpush2.msra.mxu0 0.0
    %5157 = vmatprep.subr.mxu0 0.0
    %5158 = vmatpush2.msra.mxu0 0.0
    %5159 = vmatprep.subr.mxu0 0.0
    %5160 = vmatpush2.msra.mxu0 0.0
    %5161 = vmatprep.subr.mxu0 0.0
    %5162 = vmatpush2.msra.mxu0 0.0
    %5163 = vmatprep.subr.mxu0 0.0
    %5164 = vmatpush2.msra.mxu0 0.0
    %5165 = vmatprep.subr.mxu0 0.0
    %5166 = vmatpush2.msra.mxu0 0.0
    %5167 = vmatprep.subr.mxu0 0.0
    %5168 = vmatpush2.msra.mxu0 0.0
    %5169 = vmatprep.subr.mxu0 0.0
    %5170 = vmatpush2.msra.mxu0 0.0
    %5171 = vmatprep.subr.mxu0 0.0
    %5172 = vmatpush2.msra.mxu0 0.0
    %5173 = vmatprep.subr.mxu0 0.0
    %5174 = vmatpush2.msra.mxu0 0.0
    %5175 = vmatprep.mubr.f32.mxu0 0.0
    %v5176 = vand.u32 %v4747, 4294901760
    %v5177 = vsub.f32 %v4747, %v5176
    %v5178 = vand.u32 %v5177, 4294901760
    %5179 = vmatmul.mubr.f32.gmra.mxu0 %v5178
    %v5180 = vpop.f32.mrf.mxu0
    %v5181 = vadd.f32 %v5092, %v5180
    %v5182 = vpop.f32.mrf.mxu0
    %5183 = vdwg.mxu0
    %5184 = vmatprep.subr.mxu0 0.0
    %v5185 = vand.u32 %v882, 4294901760
    %v5186 = vsub.f32 %v882, %v5185
    %v5187 = vand.u32 %v5186, 4294901760
    %5188 = vmatpush1.msra.mxu0 %v5187
    %5189 = vmatprep.subr.mxu0 0.0
    %v5190 = vand.u32 %v881, 4294901760
    %v5191 = vsub.f32 %v881, %v5190
    %v5192 = vand.u32 %v5191, 4294901760
    %5193 = vmatpush1.msra.mxu0 %v5192
    %5194 = vmatprep.subr.mxu0 0.0
    %v5195 = vand.u32 %v880, 4294901760
    %v5196 = vsub.f32 %v880, %v5195
    %v5197 = vand.u32 %v5196, 4294901760
    %5198 = vmatpush1.msra.mxu0 %v5197
    %5199 = vmatprep.subr.mxu0 0.0
    %v5200 = vand.u32 %v879, 4294901760
    %v5201 = vsub.f32 %v879, %v5200
    %v5202 = vand.u32 %v5201, 4294901760
    %5203 = vmatpush1.msra.mxu0 %v5202
    %5204 = vmatprep.subr.mxu0 0.0
    %v5205 = vand.u32 %v878, 4294901760
    %v5206 = vsub.f32 %v878, %v5205
    %v5207 = vand.u32 %v5206, 4294901760
    %5208 = vmatpush1.msra.mxu0 %v5207
    %5209 = vmatprep.subr.mxu0 0.0
    %v5210 = vand.u32 %v877, 4294901760
    %v5211 = vsub.f32 %v877, %v5210
    %v5212 = vand.u32 %v5211, 4294901760
    %5213 = vmatpush1.msra.mxu0 %v5212
    %5214 = vmatprep.subr.mxu0 0.0
    %v5215 = vand.u32 %v876, 4294901760
    %v5216 = vsub.f32 %v876, %v5215
    %v5217 = vand.u32 %v5216, 4294901760
    %5218 = vmatpush1.msra.mxu0 %v5217
    %5219 = vmatprep.subr.mxu0 0.0
    %v5220 = vand.u32 %v875, 4294901760
    %v5221 = vsub.f32 %v875, %v5220
    %v5222 = vand.u32 %v5221, 4294901760
    %5223 = vmatpush1.msra.mxu0 %v5222
    %5224 = vmatprep.subr.mxu0 0.0
    %v5225 = vand.u32 %v874, 4294901760
    %v5226 = vsub.f32 %v874, %v5225
    %v5227 = vand.u32 %v5226, 4294901760
    %5228 = vmatpush1.msra.mxu0 %v5227
    %5229 = vmatprep.subr.mxu0 0.0
    %v5230 = vand.u32 %v873, 4294901760
    %v5231 = vsub.f32 %v873, %v5230
    %v5232 = vand.u32 %v5231, 4294901760
    %5233 = vmatpush1.msra.mxu0 %v5232
    %5234 = vmatprep.subr.mxu0 0.0
    %v5235 = vand.u32 %v872, 4294901760
    %v5236 = vsub.f32 %v872, %v5235
    %v5237 = vand.u32 %v5236, 4294901760
    %5238 = vmatpush1.msra.mxu0 %v5237
    %5239 = vmatprep.subr.mxu0 0.0
    %v5240 = vand.u32 %v871, 4294901760
    %v5241 = vsub.f32 %v871, %v5240
    %v5242 = vand.u32 %v5241, 4294901760
    %5243 = vmatpush1.msra.mxu0 %v5242
    %5244 = vmatprep.subr.mxu0 0.0
    %v5245 = vand.u32 %v870, 4294901760
    %v5246 = vsub.f32 %v870, %v5245
    %v5247 = vand.u32 %v5246, 4294901760
    %5248 = vmatpush1.msra.mxu0 %v5247
    %5249 = vmatprep.subr.mxu0 0.0
    %v5250 = vand.u32 %v869, 4294901760
    %v5251 = vsub.f32 %v869, %v5250
    %v5252 = vand.u32 %v5251, 4294901760
    %5253 = vmatpush1.msra.mxu0 %v5252
    %5254 = vmatprep.subr.mxu0 0.0
    %v5255 = vand.u32 %v868, 4294901760
    %v5256 = vsub.f32 %v868, %v5255
    %v5257 = vand.u32 %v5256, 4294901760
    %5258 = vmatpush1.msra.mxu0 %v5257
    %5259 = vmatprep.subr.mxu0 0.0
    %v5260 = vand.u32 %v867, 4294901760
    %v5261 = vsub.f32 %v867, %v5260
    %v5262 = vand.u32 %v5261, 4294901760
    %5263 = vmatpush1.msra.mxu0 %v5262
    %5264 = vmatprep.subr.mxu0 0.0
    %5265 = vmatpush2.msra.mxu0 0.0
    %5266 = vmatprep.subr.mxu0 0.0
    %5267 = vmatpush2.msra.mxu0 0.0
    %5268 = vmatprep.subr.mxu0 0.0
    %5269 = vmatpush2.msra.mxu0 0.0
    %5270 = vmatprep.subr.mxu0 0.0
    %5271 = vmatpush2.msra.mxu0 0.0
    %5272 = vmatprep.subr.mxu0 0.0
    %5273 = vmatpush2.msra.mxu0 0.0
    %5274 = vmatprep.subr.mxu0 0.0
    %5275 = vmatpush2.msra.mxu0 0.0
    %5276 = vmatprep.subr.mxu0 0.0
    %5277 = vmatpush2.msra.mxu0 0.0
    %5278 = vmatprep.subr.mxu0 0.0
    %5279 = vmatpush2.msra.mxu0 0.0
    %5280 = vmatprep.subr.mxu0 0.0
    %5281 = vmatpush2.msra.mxu0 0.0
    %5282 = vmatprep.subr.mxu0 0.0
    %5283 = vmatpush2.msra.mxu0 0.0
    %5284 = vmatprep.subr.mxu0 0.0
    %5285 = vmatpush2.msra.mxu0 0.0
    %5286 = vmatprep.subr.mxu0 0.0
    %5287 = vmatpush2.msra.mxu0 0.0
    %5288 = vmatprep.subr.mxu0 0.0
    %5289 = vmatpush2.msra.mxu0 0.0
    %5290 = vmatprep.subr.mxu0 0.0
    %5291 = vmatpush2.msra.mxu0 0.0
    %5292 = vmatprep.subr.mxu0 0.0
    %5293 = vmatpush2.msra.mxu0 0.0
    %5294 = vmatprep.subr.mxu0 0.0
    %5295 = vmatpush2.msra.mxu0 0.0
    %5296 = vmatprep.mubr.f32.mxu0 0.0
    %v5297 = vand.u32 %v4747, 4294901760
    %5298 = vmatmul.mubr.f32.gmra.mxu0 %v5297
    %v5299 = vpop.f32.mrf.mxu0
    %v5300 = vadd.f32 %v5181, %v5299
    %v5301 = vpop.f32.mrf.mxu0
    %5302 = vdwg.mxu0
    %5303 = vmatprep.subr.mxu0 0.0
    %v5304 = vand.u32 %v882, 4294901760
    %5305 = vmatpush1.msra.mxu0 %v5304
    %5306 = vmatprep.subr.mxu0 0.0
    %v5307 = vand.u32 %v881, 4294901760
    %5308 = vmatpush1.msra.mxu0 %v5307
    %5309 = vmatprep.subr.mxu0 0.0
    %v5310 = vand.u32 %v880, 4294901760
    %5311 = vmatpush1.msra.mxu0 %v5310
    %5312 = vmatprep.subr.mxu0 0.0
    %v5313 = vand.u32 %v879, 4294901760
    %5314 = vmatpush1.msra.mxu0 %v5313
    %5315 = vmatprep.subr.mxu0 0.0
    %v5316 = vand.u32 %v878, 4294901760
    %5317 = vmatpush1.msra.mxu0 %v5316
    %5318 = vmatprep.subr.mxu0 0.0
    %v5319 = vand.u32 %v877, 4294901760
    %5320 = vmatpush1.msra.mxu0 %v5319
    %5321 = vmatprep.subr.mxu0 0.0
    %v5322 = vand.u32 %v876, 4294901760
    %5323 = vmatpush1.msra.mxu0 %v5322
    %5324 = vmatprep.subr.mxu0 0.0
    %v5325 = vand.u32 %v875, 4294901760
    %5326 = vmatpush1.msra.mxu0 %v5325
    %5327 = vmatprep.subr.mxu0 0.0
    %v5328 = vand.u32 %v874, 4294901760
    %5329 = vmatpush1.msra.mxu0 %v5328
    %5330 = vmatprep.subr.mxu0 0.0
    %v5331 = vand.u32 %v873, 4294901760
    %5332 = vmatpush1.msra.mxu0 %v5331
    %5333 = vmatprep.subr.mxu0 0.0
    %v5334 = vand.u32 %v872, 4294901760
    %5335 = vmatpush1.msra.mxu0 %v5334
    %5336 = vmatprep.subr.mxu0 0.0
    %v5337 = vand.u32 %v871, 4294901760
    %5338 = vmatpush1.msra.mxu0 %v5337
    %5339 = vmatprep.subr.mxu0 0.0
    %v5340 = vand.u32 %v870, 4294901760
    %5341 = vmatpush1.msra.mxu0 %v5340
    %5342 = vmatprep.subr.mxu0 0.0
    %v5343 = vand.u32 %v869, 4294901760
    %5344 = vmatpush1.msra.mxu0 %v5343
    %5345 = vmatprep.subr.mxu0 0.0
    %v5346 = vand.u32 %v868, 4294901760
    %5347 = vmatpush1.msra.mxu0 %v5346
    %5348 = vmatprep.subr.mxu0 0.0
    %v5349 = vand.u32 %v867, 4294901760
    %5350 = vmatpush1.msra.mxu0 %v5349
    %5351 = vmatprep.subr.mxu0 0.0
    %5352 = vmatpush2.msra.mxu0 0.0
    %5353 = vmatprep.subr.mxu0 0.0
    %5354 = vmatpush2.msra.mxu0 0.0
    %5355 = vmatprep.subr.mxu0 0.0
    %5356 = vmatpush2.msra.mxu0 0.0
    %5357 = vmatprep.subr.mxu0 0.0
    %5358 = vmatpush2.msra.mxu0 0.0
    %5359 = vmatprep.subr.mxu0 0.0
    %5360 = vmatpush2.msra.mxu0 0.0
    %5361 = vmatprep.subr.mxu0 0.0
    %5362 = vmatpush2.msra.mxu0 0.0
    %5363 = vmatprep.subr.mxu0 0.0
    %5364 = vmatpush2.msra.mxu0 0.0
    %5365 = vmatprep.subr.mxu0 0.0
    %5366 = vmatpush2.msra.mxu0 0.0
    %5367 = vmatprep.subr.mxu0 0.0
    %5368 = vmatpush2.msra.mxu0 0.0
    %5369 = vmatprep.subr.mxu0 0.0
    %5370 = vmatpush2.msra.mxu0 0.0
    %5371 = vmatprep.subr.mxu0 0.0
    %5372 = vmatpush2.msra.mxu0 0.0
    %5373 = vmatprep.subr.mxu0 0.0
    %5374 = vmatpush2.msra.mxu0 0.0
    %5375 = vmatprep.subr.mxu0 0.0
    %5376 = vmatpush2.msra.mxu0 0.0
    %5377 = vmatprep.subr.mxu0 0.0
    %5378 = vmatpush2.msra.mxu0 0.0
    %5379 = vmatprep.subr.mxu0 0.0
    %5380 = vmatpush2.msra.mxu0 0.0
    %5381 = vmatprep.subr.mxu0 0.0
    %5382 = vmatpush2.msra.mxu0 0.0
    %5383 = vmatprep.mubr.f32.mxu0 0.0
    %v5384 = vand.u32 %v4747, 4294901760
    %5385 = vmatmul.mubr.f32.gmra.mxu0 %v5384
    %v5386 = vpop.f32.mrf.mxu0
    %v5387 = vadd.f32 %v5300, %v5386
    %v5388 = vpop.f32.mrf.mxu0
    %5389 = vdwg.mxu0
    %v5390 = vadd.f32 %v4748, %v5387
    %v5391 = vtanh.pop %v5390
    %v5392 = vld [vmem:[#allocation3 + $0x38] sm:$0xff]
    %5393 = vmatprep.subr.mxu0 0.0
    %v5394 = vand.u32 %v882, 4294901760
    %5395 = vmatpush1.msra.mxu0 %v5394
    %5396 = vmatprep.subr.mxu0 0.0
    %v5397 = vand.u32 %v881, 4294901760
    %5398 = vmatpush1.msra.mxu0 %v5397
    %5399 = vmatprep.subr.mxu0 0.0
    %v5400 = vand.u32 %v880, 4294901760
    %5401 = vmatpush1.msra.mxu0 %v5400
    %5402 = vmatprep.subr.mxu0 0.0
    %v5403 = vand.u32 %v879, 4294901760
    %5404 = vmatpush1.msra.mxu0 %v5403
    %5405 = vmatprep.subr.mxu0 0.0
    %v5406 = vand.u32 %v878, 4294901760
    %5407 = vmatpush1.msra.mxu0 %v5406
    %5408 = vmatprep.subr.mxu0 0.0
    %v5409 = vand.u32 %v877, 4294901760
    %5410 = vmatpush1.msra.mxu0 %v5409
    %5411 = vmatprep.subr.mxu0 0.0
    %v5412 = vand.u32 %v876, 4294901760
    %5413 = vmatpush1.msra.mxu0 %v5412
    %5414 = vmatprep.subr.mxu0 0.0
    %v5415 = vand.u32 %v875, 4294901760
    %5416 = vmatpush1.msra.mxu0 %v5415
    %5417 = vmatprep.subr.mxu0 0.0
    %v5418 = vand.u32 %v874, 4294901760
    %5419 = vmatpush1.msra.mxu0 %v5418
    %5420 = vmatprep.subr.mxu0 0.0
    %v5421 = vand.u32 %v873, 4294901760
    %5422 = vmatpush1.msra.mxu0 %v5421
    %5423 = vmatprep.subr.mxu0 0.0
    %v5424 = vand.u32 %v872, 4294901760
    %5425 = vmatpush1.msra.mxu0 %v5424
    %5426 = vmatprep.subr.mxu0 0.0
    %v5427 = vand.u32 %v871, 4294901760
    %5428 = vmatpush1.msra.mxu0 %v5427
    %5429 = vmatprep.subr.mxu0 0.0
    %v5430 = vand.u32 %v870, 4294901760
    %5431 = vmatpush1.msra.mxu0 %v5430
    %5432 = vmatprep.subr.mxu0 0.0
    %v5433 = vand.u32 %v869, 4294901760
    %5434 = vmatpush1.msra.mxu0 %v5433
    %5435 = vmatprep.subr.mxu0 0.0
    %v5436 = vand.u32 %v868, 4294901760
    %5437 = vmatpush1.msra.mxu0 %v5436
    %5438 = vmatprep.subr.mxu0 0.0
    %v5439 = vand.u32 %v867, 4294901760
    %5440 = vmatpush1.msra.mxu0 %v5439
    %5441 = vmatprep.subr.mxu0 0.0
    %5442 = vmatpush2.msra.mxu0 0.0
    %5443 = vmatprep.subr.mxu0 0.0
    %5444 = vmatpush2.msra.mxu0 0.0
    %5445 = vmatprep.subr.mxu0 0.0
    %5446 = vmatpush2.msra.mxu0 0.0
    %5447 = vmatprep.subr.mxu0 0.0
    %5448 = vmatpush2.msra.mxu0 0.0
    %5449 = vmatprep.subr.mxu0 0.0
    %5450 = vmatpush2.msra.mxu0 0.0
    %5451 = vmatprep.subr.mxu0 0.0
    %5452 = vmatpush2.msra.mxu0 0.0
    %5453 = vmatprep.subr.mxu0 0.0
    %5454 = vmatpush2.msra.mxu0 0.0
    %5455 = vmatprep.subr.mxu0 0.0
    %5456 = vmatpush2.msra.mxu0 0.0
    %5457 = vmatprep.subr.mxu0 0.0
    %5458 = vmatpush2.msra.mxu0 0.0
    %5459 = vmatprep.subr.mxu0 0.0
    %5460 = vmatpush2.msra.mxu0 0.0
    %5461 = vmatprep.subr.mxu0 0.0
    %5462 = vmatpush2.msra.mxu0 0.0
    %5463 = vmatprep.subr.mxu0 0.0
    %5464 = vmatpush2.msra.mxu0 0.0
    %5465 = vmatprep.subr.mxu0 0.0
    %5466 = vmatpush2.msra.mxu0 0.0
    %5467 = vmatprep.subr.mxu0 0.0
    %5468 = vmatpush2.msra.mxu0 0.0
    %5469 = vmatprep.subr.mxu0 0.0
    %5470 = vmatpush2.msra.mxu0 0.0
    %5471 = vmatprep.subr.mxu0 0.0
    %5472 = vmatpush2.msra.mxu0 0.0
    %5473 = vmatprep.mubr.f32.mxu0 0.0
    %v5474 = vand.u32 %v5391, 4294901760
    %v5475 = vsub.f32 %v5391, %v5474
    %v5476 = vand.u32 %v5475, 4294901760
    %v5477 = vsub.f32 %v5475, %v5476
    %v5478 = vand.u32 %v5477, 4294901760
    %5479 = vmatmul.mubr.f32.gmra.mxu0 %v5478
    %v5480 = vpop.f32.mrf.mxu0
    %v5481 = vadd.f32 0.0, %v5480
    %v5482 = vpop.f32.mrf.mxu0
    %5483 = vdwg.mxu0
    %5484 = vmatprep.subr.mxu0 0.0
    %v5485 = vand.u32 %v882, 4294901760
    %v5486 = vsub.f32 %v882, %v5485
    %v5487 = vand.u32 %v5486, 4294901760
    %v5488 = vsub.f32 %v5486, %v5487
    %v5489 = vand.u32 %v5488, 4294901760
    %5490 = vmatpush1.msra.mxu0 %v5489
    %5491 = vmatprep.subr.mxu0 0.0
    %v5492 = vand.u32 %v881, 4294901760
    %v5493 = vsub.f32 %v881, %v5492
    %v5494 = vand.u32 %v5493, 4294901760
    %v5495 = vsub.f32 %v5493, %v5494
    %v5496 = vand.u32 %v5495, 4294901760
    %5497 = vmatpush1.msra.mxu0 %v5496
    %5498 = vmatprep.subr.mxu0 0.0
    %v5499 = vand.u32 %v880, 4294901760
    %v5500 = vsub.f32 %v880, %v5499
    %v5501 = vand.u32 %v5500, 4294901760
    %v5502 = vsub.f32 %v5500, %v5501
    %v5503 = vand.u32 %v5502, 4294901760
    %5504 = vmatpush1.msra.mxu0 %v5503
    %5505 = vmatprep.subr.mxu0 0.0
    %v5506 = vand.u32 %v879, 4294901760
    %v5507 = vsub.f32 %v879, %v5506
    %v5508 = vand.u32 %v5507, 4294901760
    %v5509 = vsub.f32 %v5507, %v5508
    %v5510 = vand.u32 %v5509, 4294901760
    %5511 = vmatpush1.msra.mxu0 %v5510
    %5512 = vmatprep.subr.mxu0 0.0
    %v5513 = vand.u32 %v878, 4294901760
    %v5514 = vsub.f32 %v878, %v5513
    %v5515 = vand.u32 %v5514, 4294901760
    %v5516 = vsub.f32 %v5514, %v5515
    %v5517 = vand.u32 %v5516, 4294901760
    %5518 = vmatpush1.msra.mxu0 %v5517
    %5519 = vmatprep.subr.mxu0 0.0
    %v5520 = vand.u32 %v877, 4294901760
    %v5521 = vsub.f32 %v877, %v5520
    %v5522 = vand.u32 %v5521, 4294901760
    %v5523 = vsub.f32 %v5521, %v5522
    %v5524 = vand.u32 %v5523, 4294901760
    %5525 = vmatpush1.msra.mxu0 %v5524
    %5526 = vmatprep.subr.mxu0 0.0
    %v5527 = vand.u32 %v876, 4294901760
    %v5528 = vsub.f32 %v876, %v5527
    %v5529 = vand.u32 %v5528, 4294901760
    %v5530 = vsub.f32 %v5528, %v5529
    %v5531 = vand.u32 %v5530, 4294901760
    %5532 = vmatpush1.msra.mxu0 %v5531
    %5533 = vmatprep.subr.mxu0 0.0
    %v5534 = vand.u32 %v875, 4294901760
    %v5535 = vsub.f32 %v875, %v5534
    %v5536 = vand.u32 %v5535, 4294901760
    %v5537 = vsub.f32 %v5535, %v5536
    %v5538 = vand.u32 %v5537, 4294901760
    %5539 = vmatpush1.msra.mxu0 %v5538
    %5540 = vmatprep.subr.mxu0 0.0
    %v5541 = vand.u32 %v874, 4294901760
    %v5542 = vsub.f32 %v874, %v5541
    %v5543 = vand.u32 %v5542, 4294901760
    %v5544 = vsub.f32 %v5542, %v5543
    %v5545 = vand.u32 %v5544, 4294901760
    %5546 = vmatpush1.msra.mxu0 %v5545
    %5547 = vmatprep.subr.mxu0 0.0
    %v5548 = vand.u32 %v873, 4294901760
    %v5549 = vsub.f32 %v873, %v5548
    %v5550 = vand.u32 %v5549, 4294901760
    %v5551 = vsub.f32 %v5549, %v5550
    %v5552 = vand.u32 %v5551, 4294901760
    %5553 = vmatpush1.msra.mxu0 %v5552
    %5554 = vmatprep.subr.mxu0 0.0
    %v5555 = vand.u32 %v872, 4294901760
    %v5556 = vsub.f32 %v872, %v5555
    %v5557 = vand.u32 %v5556, 4294901760
    %v5558 = vsub.f32 %v5556, %v5557
    %v5559 = vand.u32 %v5558, 4294901760
    %5560 = vmatpush1.msra.mxu0 %v5559
    %5561 = vmatprep.subr.mxu0 0.0
    %v5562 = vand.u32 %v871, 4294901760
    %v5563 = vsub.f32 %v871, %v5562
    %v5564 = vand.u32 %v5563, 4294901760
    %v5565 = vsub.f32 %v5563, %v5564
    %v5566 = vand.u32 %v5565, 4294901760
    %5567 = vmatpush1.msra.mxu0 %v5566
    %5568 = vmatprep.subr.mxu0 0.0
    %v5569 = vand.u32 %v870, 4294901760
    %v5570 = vsub.f32 %v870, %v5569
    %v5571 = vand.u32 %v5570, 4294901760
    %v5572 = vsub.f32 %v5570, %v5571
    %v5573 = vand.u32 %v5572, 4294901760
    %5574 = vmatpush1.msra.mxu0 %v5573
    %5575 = vmatprep.subr.mxu0 0.0
    %v5576 = vand.u32 %v869, 4294901760
    %v5577 = vsub.f32 %v869, %v5576
    %v5578 = vand.u32 %v5577, 4294901760
    %v5579 = vsub.f32 %v5577, %v5578
    %v5580 = vand.u32 %v5579, 4294901760
    %5581 = vmatpush1.msra.mxu0 %v5580
    %5582 = vmatprep.subr.mxu0 0.0
    %v5583 = vand.u32 %v868, 4294901760
    %v5584 = vsub.f32 %v868, %v5583
    %v5585 = vand.u32 %v5584, 4294901760
    %v5586 = vsub.f32 %v5584, %v5585
    %v5587 = vand.u32 %v5586, 4294901760
    %5588 = vmatpush1.msra.mxu0 %v5587
    %5589 = vmatprep.subr.mxu0 0.0
    %v5590 = vand.u32 %v867, 4294901760
    %v5591 = vsub.f32 %v867, %v5590
    %v5592 = vand.u32 %v5591, 4294901760
    %v5593 = vsub.f32 %v5591, %v5592
    %v5594 = vand.u32 %v5593, 4294901760
    %5595 = vmatpush1.msra.mxu0 %v5594
    %5596 = vmatprep.subr.mxu0 0.0
    %5597 = vmatpush2.msra.mxu0 0.0
    %5598 = vmatprep.subr.mxu0 0.0
    %5599 = vmatpush2.msra.mxu0 0.0
    %5600 = vmatprep.subr.mxu0 0.0
    %5601 = vmatpush2.msra.mxu0 0.0
    %5602 = vmatprep.subr.mxu0 0.0
    %5603 = vmatpush2.msra.mxu0 0.0
    %5604 = vmatprep.subr.mxu0 0.0
    %5605 = vmatpush2.msra.mxu0 0.0
    %5606 = vmatprep.subr.mxu0 0.0
    %5607 = vmatpush2.msra.mxu0 0.0
    %5608 = vmatprep.subr.mxu0 0.0
    %5609 = vmatpush2.msra.mxu0 0.0
    %5610 = vmatprep.subr.mxu0 0.0
    %5611 = vmatpush2.msra.mxu0 0.0
    %5612 = vmatprep.subr.mxu0 0.0
    %5613 = vmatpush2.msra.mxu0 0.0
    %5614 = vmatprep.subr.mxu0 0.0
    %5615 = vmatpush2.msra.mxu0 0.0
    %5616 = vmatprep.subr.mxu0 0.0
    %5617 = vmatpush2.msra.mxu0 0.0
    %5618 = vmatprep.subr.mxu0 0.0
    %5619 = vmatpush2.msra.mxu0 0.0
    %5620 = vmatprep.subr.mxu0 0.0
    %5621 = vmatpush2.msra.mxu0 0.0
    %5622 = vmatprep.subr.mxu0 0.0
    %5623 = vmatpush2.msra.mxu0 0.0
    %5624 = vmatprep.subr.mxu0 0.0
    %5625 = vmatpush2.msra.mxu0 0.0
    %5626 = vmatprep.subr.mxu0 0.0
    %5627 = vmatpush2.msra.mxu0 0.0
    %5628 = vmatprep.mubr.f32.mxu0 0.0
    %v5629 = vand.u32 %v5391, 4294901760
    %5630 = vmatmul.mubr.f32.gmra.mxu0 %v5629
    %v5631 = vpop.f32.mrf.mxu0
    %v5632 = vadd.f32 %v5481, %v5631
    %v5633 = vpop.f32.mrf.mxu0
    %5634 = vdwg.mxu0
    %5635 = vmatprep.subr.mxu0 0.0
    %v5636 = vand.u32 %v882, 4294901760
    %v5637 = vsub.f32 %v882, %v5636
    %5638 = vmatpush1.msra.mxu0 %v5637
    %5639 = vmatprep.subr.mxu0 0.0
    %v5640 = vand.u32 %v881, 4294901760
    %v5641 = vsub.f32 %v881, %v5640
    %5642 = vmatpush1.msra.mxu0 %v5641
    %5643 = vmatprep.subr.mxu0 0.0
    %v5644 = vand.u32 %v880, 4294901760
    %v5645 = vsub.f32 %v880, %v5644
    %5646 = vmatpush1.msra.mxu0 %v5645
    %5647 = vmatprep.subr.mxu0 0.0
    %v5648 = vand.u32 %v879, 4294901760
    %v5649 = vsub.f32 %v879, %v5648
    %5650 = vmatpush1.msra.mxu0 %v5649
    %5651 = vmatprep.subr.mxu0 0.0
    %v5652 = vand.u32 %v878, 4294901760
    %v5653 = vsub.f32 %v878, %v5652
    %5654 = vmatpush1.msra.mxu0 %v5653
    %5655 = vmatprep.subr.mxu0 0.0
    %v5656 = vand.u32 %v877, 4294901760
    %v5657 = vsub.f32 %v877, %v5656
    %5658 = vmatpush1.msra.mxu0 %v5657
    %5659 = vmatprep.subr.mxu0 0.0
    %v5660 = vand.u32 %v876, 4294901760
    %v5661 = vsub.f32 %v876, %v5660
    %5662 = vmatpush1.msra.mxu0 %v5661
    %5663 = vmatprep.subr.mxu0 0.0
    %v5664 = vand.u32 %v875, 4294901760
    %v5665 = vsub.f32 %v875, %v5664
    %5666 = vmatpush1.msra.mxu0 %v5665
    %5667 = vmatprep.subr.mxu0 0.0
    %v5668 = vand.u32 %v874, 4294901760
    %v5669 = vsub.f32 %v874, %v5668
    %5670 = vmatpush1.msra.mxu0 %v5669
    %5671 = vmatprep.subr.mxu0 0.0
    %v5672 = vand.u32 %v873, 4294901760
    %v5673 = vsub.f32 %v873, %v5672
    %5674 = vmatpush1.msra.mxu0 %v5673
    %5675 = vmatprep.subr.mxu0 0.0
    %v5676 = vand.u32 %v872, 4294901760
    %v5677 = vsub.f32 %v872, %v5676
    %5678 = vmatpush1.msra.mxu0 %v5677
    %5679 = vmatprep.subr.mxu0 0.0
    %v5680 = vand.u32 %v871, 4294901760
    %v5681 = vsub.f32 %v871, %v5680
    %5682 = vmatpush1.msra.mxu0 %v5681
    %5683 = vmatprep.subr.mxu0 0.0
    %v5684 = vand.u32 %v870, 4294901760
    %v5685 = vsub.f32 %v870, %v5684
    %5686 = vmatpush1.msra.mxu0 %v5685
    %5687 = vmatprep.subr.mxu0 0.0
    %v5688 = vand.u32 %v869, 4294901760
    %v5689 = vsub.f32 %v869, %v5688
    %5690 = vmatpush1.msra.mxu0 %v5689
    %5691 = vmatprep.subr.mxu0 0.0
    %v5692 = vand.u32 %v868, 4294901760
    %v5693 = vsub.f32 %v868, %v5692
    %5694 = vmatpush1.msra.mxu0 %v5693
    %5695 = vmatprep.subr.mxu0 0.0
    %v5696 = vand.u32 %v867, 4294901760
    %v5697 = vsub.f32 %v867, %v5696
    %5698 = vmatpush1.msra.mxu0 %v5697
    %5699 = vmatprep.subr.mxu0 0.0
    %5700 = vmatpush2.msra.mxu0 0.0
    %5701 = vmatprep.subr.mxu0 0.0
    %5702 = vmatpush2.msra.mxu0 0.0
    %5703 = vmatprep.subr.mxu0 0.0
    %5704 = vmatpush2.msra.mxu0 0.0
    %5705 = vmatprep.subr.mxu0 0.0
    %5706 = vmatpush2.msra.mxu0 0.0
    %5707 = vmatprep.subr.mxu0 0.0
    %5708 = vmatpush2.msra.mxu0 0.0
    %5709 = vmatprep.subr.mxu0 0.0
    %5710 = vmatpush2.msra.mxu0 0.0
    %5711 = vmatprep.subr.mxu0 0.0
    %5712 = vmatpush2.msra.mxu0 0.0
    %5713 = vmatprep.subr.mxu0 0.0
    %5714 = vmatpush2.msra.mxu0 0.0
    %5715 = vmatprep.subr.mxu0 0.0
    %5716 = vmatpush2.msra.mxu0 0.0
    %5717 = vmatprep.subr.mxu0 0.0
    %5718 = vmatpush2.msra.mxu0 0.0
    %5719 = vmatprep.subr.mxu0 0.0
    %5720 = vmatpush2.msra.mxu0 0.0
    %5721 = vmatprep.subr.mxu0 0.0
    %5722 = vmatpush2.msra.mxu0 0.0
    %5723 = vmatprep.subr.mxu0 0.0
    %5724 = vmatpush2.msra.mxu0 0.0
    %5725 = vmatprep.subr.mxu0 0.0
    %5726 = vmatpush2.msra.mxu0 0.0
    %5727 = vmatprep.subr.mxu0 0.0
    %5728 = vmatpush2.msra.mxu0 0.0
    %5729 = vmatprep.subr.mxu0 0.0
    %5730 = vmatpush2.msra.mxu0 0.0
    %5731 = vmatprep.mubr.f32.mxu0 0.0
    %v5732 = vand.u32 %v5391, 4294901760
    %v5733 = vsub.f32 %v5391, %v5732
    %5734 = vmatmul.mubr.f32.gmra.mxu0 %v5733
    %v5735 = vpop.f32.mrf.mxu0
    %v5736 = vadd.f32 %v5632, %v5735
    %v5737 = vpop.f32.mrf.mxu0
    %5738 = vdwg.mxu0
    %5739 = vmatprep.subr.mxu0 0.0
    %v5740 = vand.u32 %v882, 4294901760
    %5741 = vmatpush1.msra.mxu0 %v5740
    %5742 = vmatprep.subr.mxu0 0.0
    %v5743 = vand.u32 %v881, 4294901760
    %5744 = vmatpush1.msra.mxu0 %v5743
    %5745 = vmatprep.subr.mxu0 0.0
    %v5746 = vand.u32 %v880, 4294901760
    %5747 = vmatpush1.msra.mxu0 %v5746
    %5748 = vmatprep.subr.mxu0 0.0
    %v5749 = vand.u32 %v879, 4294901760
    %5750 = vmatpush1.msra.mxu0 %v5749
    %5751 = vmatprep.subr.mxu0 0.0
    %v5752 = vand.u32 %v878, 4294901760
    %5753 = vmatpush1.msra.mxu0 %v5752
    %5754 = vmatprep.subr.mxu0 0.0
    %v5755 = vand.u32 %v877, 4294901760
    %5756 = vmatpush1.msra.mxu0 %v5755
    %5757 = vmatprep.subr.mxu0 0.0
    %v5758 = vand.u32 %v876, 4294901760
    %5759 = vmatpush1.msra.mxu0 %v5758
    %5760 = vmatprep.subr.mxu0 0.0
    %v5761 = vand.u32 %v875, 4294901760
    %5762 = vmatpush1.msra.mxu0 %v5761
    %5763 = vmatprep.subr.mxu0 0.0
    %v5764 = vand.u32 %v874, 4294901760
    %5765 = vmatpush1.msra.mxu0 %v5764
    %5766 = vmatprep.subr.mxu0 0.0
    %v5767 = vand.u32 %v873, 4294901760
    %5768 = vmatpush1.msra.mxu0 %v5767
    %5769 = vmatprep.subr.mxu0 0.0
    %v5770 = vand.u32 %v872, 4294901760
    %5771 = vmatpush1.msra.mxu0 %v5770
    %5772 = vmatprep.subr.mxu0 0.0
    %v5773 = vand.u32 %v871, 4294901760
    %5774 = vmatpush1.msra.mxu0 %v5773
    %5775 = vmatprep.subr.mxu0 0.0
    %v5776 = vand.u32 %v870, 4294901760
    %5777 = vmatpush1.msra.mxu0 %v5776
    %5778 = vmatprep.subr.mxu0 0.0
    %v5779 = vand.u32 %v869, 4294901760
    %5780 = vmatpush1.msra.mxu0 %v5779
    %5781 = vmatprep.subr.mxu0 0.0
    %v5782 = vand.u32 %v868, 4294901760
    %5783 = vmatpush1.msra.mxu0 %v5782
    %5784 = vmatprep.subr.mxu0 0.0
    %v5785 = vand.u32 %v867, 4294901760
    %5786 = vmatpush1.msra.mxu0 %v5785
    %5787 = vmatprep.subr.mxu0 0.0
    %5788 = vmatpush2.msra.mxu0 0.0
    %5789 = vmatprep.subr.mxu0 0.0
    %5790 = vmatpush2.msra.mxu0 0.0
    %5791 = vmatprep.subr.mxu0 0.0
    %5792 = vmatpush2.msra.mxu0 0.0
    %5793 = vmatprep.subr.mxu0 0.0
    %5794 = vmatpush2.msra.mxu0 0.0
    %5795 = vmatprep.subr.mxu0 0.0
    %5796 = vmatpush2.msra.mxu0 0.0
    %5797 = vmatprep.subr.mxu0 0.0
    %5798 = vmatpush2.msra.mxu0 0.0
    %5799 = vmatprep.subr.mxu0 0.0
    %5800 = vmatpush2.msra.mxu0 0.0
    %5801 = vmatprep.subr.mxu0 0.0
    %5802 = vmatpush2.msra.mxu0 0.0
    %5803 = vmatprep.subr.mxu0 0.0
    %5804 = vmatpush2.msra.mxu0 0.0
    %5805 = vmatprep.subr.mxu0 0.0
    %5806 = vmatpush2.msra.mxu0 0.0
    %5807 = vmatprep.subr.mxu0 0.0
    %5808 = vmatpush2.msra.mxu0 0.0
    %5809 = vmatprep.subr.mxu0 0.0
    %5810 = vmatpush2.msra.mxu0 0.0
    %5811 = vmatprep.subr.mxu0 0.0
    %5812 = vmatpush2.msra.mxu0 0.0
    %5813 = vmatprep.subr.mxu0 0.0
    %5814 = vmatpush2.msra.mxu0 0.0
    %5815 = vmatprep.subr.mxu0 0.0
    %5816 = vmatpush2.msra.mxu0 0.0
    %5817 = vmatprep.subr.mxu0 0.0
    %5818 = vmatpush2.msra.mxu0 0.0
    %5819 = vmatprep.mubr.f32.mxu0 0.0
    %v5820 = vand.u32 %v5391, 4294901760
    %v5821 = vsub.f32 %v5391, %v5820
    %v5822 = vand.u32 %v5821, 4294901760
    %5823 = vmatmul.mubr.f32.gmra.mxu0 %v5822
    %v5824 = vpop.f32.mrf.mxu0
    %v5825 = vadd.f32 %v5736, %v5824
    %v5826 = vpop.f32.mrf.mxu0
    %5827 = vdwg.mxu0
    %5828 = vmatprep.subr.mxu0 0.0
    %v5829 = vand.u32 %v882, 4294901760
    %v5830 = vsub.f32 %v882, %v5829
    %v5831 = vand.u32 %v5830, 4294901760
    %5832 = vmatpush1.msra.mxu0 %v5831
    %5833 = vmatprep.subr.mxu0 0.0
    %v5834 = vand.u32 %v881, 4294901760
    %v5835 = vsub.f32 %v881, %v5834
    %v5836 = vand.u32 %v5835, 4294901760
    %5837 = vmatpush1.msra.mxu0 %v5836
    %5838 = vmatprep.subr.mxu0 0.0
    %v5839 = vand.u32 %v880, 4294901760
    %v5840 = vsub.f32 %v880, %v5839
    %v5841 = vand.u32 %v5840, 4294901760
    %5842 = vmatpush1.msra.mxu0 %v5841
    %5843 = vmatprep.subr.mxu0 0.0
    %v5844 = vand.u32 %v879, 4294901760
    %v5845 = vsub.f32 %v879, %v5844
    %v5846 = vand.u32 %v5845, 4294901760
    %5847 = vmatpush1.msra.mxu0 %v5846
    %5848 = vmatprep.subr.mxu0 0.0
    %v5849 = vand.u32 %v878, 4294901760
    %v5850 = vsub.f32 %v878, %v5849
    %v5851 = vand.u32 %v5850, 4294901760
    %5852 = vmatpush1.msra.mxu0 %v5851
    %5853 = vmatprep.subr.mxu0 0.0
    %v5854 = vand.u32 %v877, 4294901760
    %v5855 = vsub.f32 %v877, %v5854
    %v5856 = vand.u32 %v5855, 4294901760
    %5857 = vmatpush1.msra.mxu0 %v5856
    %5858 = vmatprep.subr.mxu0 0.0
    %v5859 = vand.u32 %v876, 4294901760
    %v5860 = vsub.f32 %v876, %v5859
    %v5861 = vand.u32 %v5860, 4294901760
    %5862 = vmatpush1.msra.mxu0 %v5861
    %5863 = vmatprep.subr.mxu0 0.0
    %v5864 = vand.u32 %v875, 4294901760
    %v5865 = vsub.f32 %v875, %v5864
    %v5866 = vand.u32 %v5865, 4294901760
    %5867 = vmatpush1.msra.mxu0 %v5866
    %5868 = vmatprep.subr.mxu0 0.0
    %v5869 = vand.u32 %v874, 4294901760
    %v5870 = vsub.f32 %v874, %v5869
    %v5871 = vand.u32 %v5870, 4294901760
    %5872 = vmatpush1.msra.mxu0 %v5871
    %5873 = vmatprep.subr.mxu0 0.0
    %v5874 = vand.u32 %v873, 4294901760
    %v5875 = vsub.f32 %v873, %v5874
    %v5876 = vand.u32 %v5875, 4294901760
    %5877 = vmatpush1.msra.mxu0 %v5876
    %5878 = vmatprep.subr.mxu0 0.0
    %v5879 = vand.u32 %v872, 4294901760
    %v5880 = vsub.f32 %v872, %v5879
    %v5881 = vand.u32 %v5880, 4294901760
    %5882 = vmatpush1.msra.mxu0 %v5881
    %5883 = vmatprep.subr.mxu0 0.0
    %v5884 = vand.u32 %v871, 4294901760
    %v5885 = vsub.f32 %v871, %v5884
    %v5886 = vand.u32 %v5885, 4294901760
    %5887 = vmatpush1.msra.mxu0 %v5886
    %5888 = vmatprep.subr.mxu0 0.0
    %v5889 = vand.u32 %v870, 4294901760
    %v5890 = vsub.f32 %v870, %v5889
    %v5891 = vand.u32 %v5890, 4294901760
    %5892 = vmatpush1.msra.mxu0 %v5891
    %5893 = vmatprep.subr.mxu0 0.0
    %v5894 = vand.u32 %v869, 4294901760
    %v5895 = vsub.f32 %v869, %v5894
    %v5896 = vand.u32 %v5895, 4294901760
    %5897 = vmatpush1.msra.mxu0 %v5896
    %5898 = vmatprep.subr.mxu0 0.0
    %v5899 = vand.u32 %v868, 4294901760
    %v5900 = vsub.f32 %v868, %v5899
    %v5901 = vand.u32 %v5900, 4294901760
    %5902 = vmatpush1.msra.mxu0 %v5901
    %5903 = vmatprep.subr.mxu0 0.0
    %v5904 = vand.u32 %v867, 4294901760
    %v5905 = vsub.f32 %v867, %v5904
    %v5906 = vand.u32 %v5905, 4294901760
    %5907 = vmatpush1.msra.mxu0 %v5906
    %5908 = vmatprep.subr.mxu0 0.0
    %5909 = vmatpush2.msra.mxu0 0.0
    %5910 = vmatprep.subr.mxu0 0.0
    %5911 = vmatpush2.msra.mxu0 0.0
    %5912 = vmatprep.subr.mxu0 0.0
    %5913 = vmatpush2.msra.mxu0 0.0
    %5914 = vmatprep.subr.mxu0 0.0
    %5915 = vmatpush2.msra.mxu0 0.0
    %5916 = vmatprep.subr.mxu0 0.0
    %5917 = vmatpush2.msra.mxu0 0.0
    %5918 = vmatprep.subr.mxu0 0.0
    %5919 = vmatpush2.msra.mxu0 0.0
    %5920 = vmatprep.subr.mxu0 0.0
    %5921 = vmatpush2.msra.mxu0 0.0
    %5922 = vmatprep.subr.mxu0 0.0
    %5923 = vmatpush2.msra.mxu0 0.0
    %5924 = vmatprep.subr.mxu0 0.0
    %5925 = vmatpush2.msra.mxu0 0.0
    %5926 = vmatprep.subr.mxu0 0.0
    %5927 = vmatpush2.msra.mxu0 0.0
    %5928 = vmatprep.subr.mxu0 0.0
    %5929 = vmatpush2.msra.mxu0 0.0
    %5930 = vmatprep.subr.mxu0 0.0
    %5931 = vmatpush2.msra.mxu0 0.0
    %5932 = vmatprep.subr.mxu0 0.0
    %5933 = vmatpush2.msra.mxu0 0.0
    %5934 = vmatprep.subr.mxu0 0.0
    %5935 = vmatpush2.msra.mxu0 0.0
    %5936 = vmatprep.subr.mxu0 0.0
    %5937 = vmatpush2.msra.mxu0 0.0
    %5938 = vmatprep.subr.mxu0 0.0
    %5939 = vmatpush2.msra.mxu0 0.0
    %5940 = vmatprep.mubr.f32.mxu0 0.0
    %v5941 = vand.u32 %v5391, 4294901760
    %5942 = vmatmul.mubr.f32.gmra.mxu0 %v5941
    %v5943 = vpop.f32.mrf.mxu0
    %v5944 = vadd.f32 %v5825, %v5943
    %v5945 = vpop.f32.mrf.mxu0
    %5946 = vdwg.mxu0
    %5947 = vmatprep.subr.mxu0 0.0
    %v5948 = vand.u32 %v882, 4294901760
    %5949 = vmatpush1.msra.mxu0 %v5948
    %5950 = vmatprep.subr.mxu0 0.0
    %v5951 = vand.u32 %v881, 4294901760
    %5952 = vmatpush1.msra.mxu0 %v5951
    %5953 = vmatprep.subr.mxu0 0.0
    %v5954 = vand.u32 %v880, 4294901760
    %5955 = vmatpush1.msra.mxu0 %v5954
    %5956 = vmatprep.subr.mxu0 0.0
    %v5957 = vand.u32 %v879, 4294901760
    %5958 = vmatpush1.msra.mxu0 %v5957
    %5959 = vmatprep.subr.mxu0 0.0
    %v5960 = vand.u32 %v878, 4294901760
    %5961 = vmatpush1.msra.mxu0 %v5960
    %5962 = vmatprep.subr.mxu0 0.0
    %v5963 = vand.u32 %v877, 4294901760
    %5964 = vmatpush1.msra.mxu0 %v5963
    %5965 = vmatprep.subr.mxu0 0.0
    %v5966 = vand.u32 %v876, 4294901760
    %5967 = vmatpush1.msra.mxu0 %v5966
    %5968 = vmatprep.subr.mxu0 0.0
    %v5969 = vand.u32 %v875, 4294901760
    %5970 = vmatpush1.msra.mxu0 %v5969
    %5971 = vmatprep.subr.mxu0 0.0
    %v5972 = vand.u32 %v874, 4294901760
    %5973 = vmatpush1.msra.mxu0 %v5972
    %5974 = vmatprep.subr.mxu0 0.0
    %v5975 = vand.u32 %v873, 4294901760
    %5976 = vmatpush1.msra.mxu0 %v5975
    %5977 = vmatprep.subr.mxu0 0.0
    %v5978 = vand.u32 %v872, 4294901760
    %5979 = vmatpush1.msra.mxu0 %v5978
    %5980 = vmatprep.subr.mxu0 0.0
    %v5981 = vand.u32 %v871, 4294901760
    %5982 = vmatpush1.msra.mxu0 %v5981
    %5983 = vmatprep.subr.mxu0 0.0
    %v5984 = vand.u32 %v870, 4294901760
    %5985 = vmatpush1.msra.mxu0 %v5984
    %5986 = vmatprep.subr.mxu0 0.0
    %v5987 = vand.u32 %v869, 4294901760
    %5988 = vmatpush1.msra.mxu0 %v5987
    %5989 = vmatprep.subr.mxu0 0.0
    %v5990 = vand.u32 %v868, 4294901760
    %5991 = vmatpush1.msra.mxu0 %v5990
    %5992 = vmatprep.subr.mxu0 0.0
    %v5993 = vand.u32 %v867, 4294901760
    %5994 = vmatpush1.msra.mxu0 %v5993
    %5995 = vmatprep.subr.mxu0 0.0
    %5996 = vmatpush2.msra.mxu0 0.0
    %5997 = vmatprep.subr.mxu0 0.0
    %5998 = vmatpush2.msra.mxu0 0.0
    %5999 = vmatprep.subr.mxu0 0.0
    %6000 = vmatpush2.msra.mxu0 0.0
    %6001 = vmatprep.subr.mxu0 0.0
    %6002 = vmatpush2.msra.mxu0 0.0
    %6003 = vmatprep.subr.mxu0 0.0
    %6004 = vmatpush2.msra.mxu0 0.0
    %6005 = vmatprep.subr.mxu0 0.0
    %6006 = vmatpush2.msra.mxu0 0.0
    %6007 = vmatprep.subr.mxu0 0.0
    %6008 = vmatpush2.msra.mxu0 0.0
    %6009 = vmatprep.subr.mxu0 0.0
    %6010 = vmatpush2.msra.mxu0 0.0
    %6011 = vmatprep.subr.mxu0 0.0
    %6012 = vmatpush2.msra.mxu0 0.0
    %6013 = vmatprep.subr.mxu0 0.0
    %6014 = vmatpush2.msra.mxu0 0.0
    %6015 = vmatprep.subr.mxu0 0.0
    %6016 = vmatpush2.msra.mxu0 0.0
    %6017 = vmatprep.subr.mxu0 0.0
    %6018 = vmatpush2.msra.mxu0 0.0
    %6019 = vmatprep.subr.mxu0 0.0
    %6020 = vmatpush2.msra.mxu0 0.0
    %6021 = vmatprep.subr.mxu0 0.0
    %6022 = vmatpush2.msra.mxu0 0.0
    %6023 = vmatprep.subr.mxu0 0.0
    %6024 = vmatpush2.msra.mxu0 0.0
    %6025 = vmatprep.subr.mxu0 0.0
    %6026 = vmatpush2.msra.mxu0 0.0
    %6027 = vmatprep.mubr.f32.mxu0 0.0
    %v6028 = vand.u32 %v5391, 4294901760
    %6029 = vmatmul.mubr.f32.gmra.mxu0 %v6028
    %v6030 = vpop.f32.mrf.mxu0
    %v6031 = vadd.f32 %v5944, %v6030
    %v6032 = vpop.f32.mrf.mxu0
    %6033 = vdwg.mxu0
    %v6034 = vadd.f32 %v5392, %v6031
    %v6035 = vtanh.pop %v6034
    %6036 = vst [vmem:[#allocation2] sm:$0xff] %v6035
    // Predicated region
    $region30: #{tpu_custom_call.1} parent=1 // pred_check
      %p6037 = pneg %p35
    $region31: #{tpu_custom_call.1} parent=1 // pred_check_branch
      %6039 = sbr.rel (%p6037) target = $region33
    $region32: #{tpu_custom_call.1} parent=1 // pred_region
      %6040 = vst [vmem:[#allocation7] sm:$0xff] %v6035
    $region33: #{tpu_custom_call.1} parent=1 // pred_fallthru
      _
    // Predicated region
    $region34: #{tpu_custom_call.1} parent=1 // pred_check
      _
    $region35: #{tpu_custom_call.1} parent=1 // pred_check_branch
      %6042 = sbr.rel (0) target = $region37
    $region36: #{tpu_custom_call.1} parent=1 // pred_region
      %s6044 = ssub.s32 128, 128
      %6045 = vsyncadd [#allocation6], %s6044
      %s6047 = sshll.u32 [#allocation7], 4
      %s6048 = int_to_ptr.vmem [resolvable:$true] %s6047
      %6050 = dma.vmem_to_hbm [thread:$0]  %s6048, 128, %s5, [#allocation6]
    $region37: #{tpu_custom_call.1} parent=1 // pred_fallthru
      _
    // Predicated region
    $region38: #{tpu_custom_call.1} parent=1 // pred_check
      _
    $region39: #{tpu_custom_call.1} parent=1 // pred_check_branch
      %6052 = sbr.rel (0) target = $region41
    $region40: #{tpu_custom_call.1} parent=1 // pred_region
      %6053 = dma.done [#allocation6], 128
    $region41: #{tpu_custom_call.1} parent=1 // pred_fallthru
      _
    %6054 = vsyncpa [#allocation5], 1
    %6055 = vsyncpa [#allocation6], 1

</llo_original>
